<compile_context>
chip_gen: v6e
topology: v6e:2x2x1
jax: 0.10.0
libtpu: 0.0.40
codegen_flags: <defaults>
</compile_context>

<pallas_src>
import math
import functools

import jax
import jax.numpy as jnp
from jax.experimental import pallas as pl
from jax.experimental.pallas import tpu as pltpu

EPS = 1e-5          # torch LayerNorm default

TILE_M = 256        # MXU-friendly tiles; v5e may prefer 128, v6e/v7x 256.
TILE_N = 256
TILE_K = 512        # reduction-axis tile for plain matmuls
TILE_H = 512        # MLP hidden-axis (4*D) reduction tile
TILE_ROWS = 1024    # row tile for row-wise (LayerNorm-style) kernels


# --------------------------------------------------------------------------
# small helpers (wrapper side)
# --------------------------------------------------------------------------

def _fit(dim, pref):
    """Pick a tile size and the padded extent for `dim`."""
    if dim <= pref:
        return dim, dim
    return pref, pl.cdiv(dim, pref) * pref


def _pad_to(x, shape):
    pads = [(0, int(s) - int(d)) for d, s in zip(x.shape, shape)]
    if all(p[1] == 0 for p in pads):
        return x
    return jnp.pad(x, pads)


# kernel-side sigmoid: exp + reciprocal both go to the EUP slot.
def _sigmoid(x):
    return pl.reciprocal(1.0 + jnp.exp(-x), approx=True)


def _layernorm_f32(x, g, b):
    mu = jnp.mean(x, axis=-1, keepdims=True)
    var = jnp.mean((x - mu) ** 2, axis=-1, keepdims=True)
    return (x - mu) * jax.lax.rsqrt(var + EPS) * g + b


# --------------------------------------------------------------------------
# Pallas kernels
# --------------------------------------------------------------------------

def _make_matmul_kernel(act, has_bias, has_residual):
    """Tiled (M, N, K) matmul with f32 accumulator, fused bias/act/residual."""
    def kernel(*refs):
        x_ref, w_ref = refs[0], refs[1]
        pos = 2
        b_ref = r_ref = None
        if has_bias:
            b_ref = refs[pos]; pos += 1
        if has_residual:
            r_ref = refs[pos]; pos += 1
        o_ref, acc_ref = refs[pos], refs[pos + 1]

        k = pl.program_id(2)

        @pl.when(k == 0)
        def _():
            acc_ref[...] = jnp.zeros_like(acc_ref)

        acc_ref[...] += jnp.dot(x_ref[...], w_ref[...],
                                preferred_element_type=jnp.float32)

        @pl.when(k == pl.num_programs(2) - 1)
        def _():
            y = acc_ref[...]
            if has_bias:
                y = y + b_ref[...].astype(jnp.float32)
            if act == "quick_gelu":
                y = y * _sigmoid(1.702 * y)
            if has_residual:
                y = y + r_ref[...].astype(jnp.float32)
            o_ref[...] = y.astype(o_ref.dtype)

    return kernel


def linear(x2d, w, b=None, act=None, residual=None,
           tm=TILE_M, tn=TILE_N, tk=TILE_K):
    """y = act(x @ w + b) + residual, tiled over (M, N, K)."""
    M, K = x2d.shape
    N = w.shape[1]
    tm, Mp = _fit(M, tm)
    tn, Np = _fit(N, tn)
    tk, Kp = _fit(K, tk)

    inputs = [_pad_to(x2d, (Mp, Kp)), _pad_to(w, (Kp, Np))]
    in_specs = [pl.BlockSpec((tm, tk), lambda i, j, k: (i, k)),
                pl.BlockSpec((tk, tn), lambda i, j, k: (k, j))]
    if b is not None:
        inputs.append(_pad_to(b.reshape(1, N), (1, Np)))
        in_specs.append(pl.BlockSpec((1, tn), lambda i, j, k: (0, j)))
    if residual is not None:
        inputs.append(_pad_to(residual, (Mp, Np)))
        in_specs.append(pl.BlockSpec((tm, tn), lambda i, j, k: (i, j)))

    out = pl.pallas_call(
        _make_matmul_kernel(act, b is not None, residual is not None),
        grid=(Mp // tm, Np // tn, Kp // tk),
        out_shape=jax.ShapeDtypeStruct((Mp, Np), x2d.dtype),
        in_specs=in_specs,
        out_specs=pl.BlockSpec((tm, tn), lambda i, j, k: (i, j)),
        scratch_shapes=[pltpu.VMEM((tm, tn), jnp.float32)],
        compiler_params=pltpu.CompilerParams(
            dimension_semantics=("parallel", "parallel", "arbitrary")),
    )(*inputs)
    return out[:M, :N]


def _make_ln_linear_kernel(act, has_bias):
    """Fused LayerNorm (full feature dim) + matmul tile + optional bias/act."""
    def kernel(*refs):
        x_ref, g_ref, b_ref, w_ref = refs[0], refs[1], refs[2], refs[3]
        bias_ref = refs[4] if has_bias else None
        o_ref = refs[-1]

        x = x_ref[...].astype(jnp.float32)
        xn = _layernorm_f32(x, g_ref[...], b_ref[...]).astype(x_ref.dtype)
        y = jnp.dot(xn, w_ref[...], preferred_element_type=jnp.float32)
        if has_bias:
            y = y + bias_ref[...].astype(jnp.float32)
        if act == "quick_gelu":
            y = y * _sigmoid(1.702 * y)
        o_ref[...] = y.astype(o_ref.dtype)

    return kernel


def ln_linear(x2d, ln_g, ln_b, w, bias=None, act=None, tm=TILE_M, tn=TILE_N):
    """y = act(LayerNorm(x) @ w + bias); grid over (M, N), K = full feature dim."""
    M, D = x2d.shape
    N = w.shape[1]
    tm, Mp = _fit(M, tm)
    tn, Np = _fit(N, tn)

    inputs = [_pad_to(x2d, (Mp, D)), ln_g.reshape(1, D), ln_b.reshape(1, D),
              _pad_to(w, (D, Np))]
    in_specs = [pl.BlockSpec((tm, D), lambda i, j: (i, 0)),
                pl.BlockSpec((1, D), lambda i, j: (0, 0)),
                pl.BlockSpec((1, D), lambda i, j: (0, 0)),
                pl.BlockSpec((D, tn), lambda i, j: (0, j))]
    if bias is not None:
        inputs.append(_pad_to(bias.reshape(1, N), (1, Np)))
        in_specs.append(pl.BlockSpec((1, tn), lambda i, j: (0, j)))

    out = pl.pallas_call(
        _make_ln_linear_kernel(act, bias is not None),
        grid=(Mp // tm, Np // tn),
        out_shape=jax.ShapeDtypeStruct((Mp, Np), x2d.dtype),
        in_specs=in_specs,
        out_specs=pl.BlockSpec((tm, tn), lambda i, j: (i, j)),
        compiler_params=pltpu.CompilerParams(
            dimension_semantics=("parallel", "parallel")),
    )(*inputs)
    return out[:M, :N]


def _ln_mlp_kernel(x_ref, g_ref, b_ref, fcw_ref, fcb_ref, pw_ref, pb_ref,
                   o_ref, xln_ref, acc_ref):
    """x + c_proj(QuickGELU(c_fc(LN(x)))); hidden dim tiled via the grid."""
    h = pl.program_id(1)

    @pl.when(h == 0)
    def _():
        x = x_ref[...].astype(jnp.float32)
        xln_ref[...] = _layernorm_f32(x, g_ref[...], b_ref[...]).astype(xln_ref.dtype)
        acc_ref[...] = jnp.zeros_like(acc_ref)

    hidden = jnp.dot(xln_ref[...], fcw_ref[...], preferred_element_type=jnp.float32)
    hidden = hidden + fcb_ref[...].astype(jnp.float32)
    hidden = hidden * _sigmoid(1.702 * hidden)
    acc_ref[...] += jnp.dot(hidden.astype(xln_ref.dtype), pw_ref[...],
                            preferred_element_type=jnp.float32)

    @pl.when(h == pl.num_programs(1) - 1)
    def _():
        y = acc_ref[...] + pb_ref[...].astype(jnp.float32) + x_ref[...].astype(jnp.float32)
        o_ref[...] = y.astype(o_ref.dtype)


def ln_mlp(x2d, ln_g, ln_b, fc_w, fc_b, proj_w, proj_b, tm=TILE_M, th=TILE_H):
    M, D = x2d.shape
    H = fc_w.shape[1]
    tm, Mp = _fit(M, tm)
    th, Hp = _fit(H, th)

    out = pl.pallas_call(
        _ln_mlp_kernel,
        grid=(Mp // tm, Hp // th),
        out_shape=jax.ShapeDtypeStruct((Mp, D), x2d.dtype),
        in_specs=[pl.BlockSpec((tm, D), lambda i, h: (i, 0)),
                  pl.BlockSpec((1, D), lambda i, h: (0, 0)),
                  pl.BlockSpec((1, D), lambda i, h: (0, 0)),
                  pl.BlockSpec((D, th), lambda i, h: (0, h)),
                  pl.BlockSpec((1, th), lambda i, h: (0, h)),
                  pl.BlockSpec((th, D), lambda i, h: (h, 0)),
                  pl.BlockSpec((1, D), lambda i, h: (0, 0))],
        out_specs=pl.BlockSpec((tm, D), lambda i, h: (i, 0)),
        scratch_shapes=[pltpu.VMEM((tm, D), x2d.dtype),
                        pltpu.VMEM((tm, D), jnp.float32)],
        compiler_params=pltpu.CompilerParams(
            dimension_semantics=("parallel", "arbitrary")),
    )(_pad_to(x2d, (Mp, D)), ln_g.reshape(1, D), ln_b.reshape(1, D),
      _pad_to(fc_w, (D, Hp)), _pad_to(fc_b.reshape(1, H), (1, Hp)),
      _pad_to(proj_w, (Hp, D)), proj_b.reshape(1, D))
    return out[:M]


def _attn_kernel(q_ref, k_ref, v_ref, o_ref, *, scale):
    # One (batch, head) per grid step; scores stay a per-head VMEM tile.
    # q/k/v feed the MXU in native dtype; accumulation & softmax stats in f32.
    q, k, v = q_ref[0], k_ref[0], v_ref[0]                      # (L, hd)
    s = jax.lax.dot_general(q, k, (((1,), (1,)), ((), ())),
                            preferred_element_type=jnp.float32) * scale
    m = jnp.max(s, axis=-1, keepdims=True)
    e = jnp.exp(s - m)
    p = e * pl.reciprocal(jnp.sum(e, axis=-1, keepdims=True), approx=True)
    o = jnp.dot(p.astype(v.dtype), v, preferred_element_type=jnp.float32)
    o_ref[0] = o.astype(o_ref.dtype)


def attention_core(q, k, v, scale):
    # TODO(synk): for very long sequences, additionally tile L (flash-style online softmax).
    BH, L, hd = q.shape
    spec = pl.BlockSpec((1, L, hd), lambda b: (b, 0, 0))
    return pl.pallas_call(
        functools.partial(_attn_kernel, scale=scale),
        grid=(BH,),
        out_shape=jax.ShapeDtypeStruct((BH, L, hd), q.dtype),
        in_specs=[spec, spec, spec],
        out_specs=spec,
        compiler_params=pltpu.CompilerParams(dimension_semantics=("parallel",)),
    )(q, k, v)


def _make_ln_kernel(has_residual):
    def kernel(*refs):
        x_ref, g_ref, b_ref = refs[0], refs[1], refs[2]
        r_ref = refs[3] if has_residual else None
        o_ref = refs[-1]
        x = x_ref[...].astype(jnp.float32)
        y = _layernorm_f32(x, g_ref[...], b_ref[...])
        if has_residual:
            y = y + r_ref[...].astype(jnp.float32)
        o_ref[...] = y.astype(o_ref.dtype)
    return kernel


def layernorm(x2d, gamma, beta, residual=None, tm=TILE_ROWS):
    """out = residual + LayerNorm(x), tiled over rows."""
    M, D = x2d.shape
    tm, Mp = _fit(M, tm)
    inputs = [_pad_to(x2d, (Mp, D)), gamma.reshape(1, D), beta.reshape(1, D)]
    in_specs = [pl.BlockSpec((tm, D), lambda i: (i, 0)),
                pl.BlockSpec((1, D), lambda i: (0, 0)),
                pl.BlockSpec((1, D), lambda i: (0, 0))]
    if residual is not None:
        inputs.append(_pad_to(residual, (Mp, D)))
        in_specs.append(pl.BlockSpec((tm, D), lambda i: (i, 0)))
    out = pl.pallas_call(
        _make_ln_kernel(residual is not None),
        grid=(Mp // tm,),
        out_shape=jax.ShapeDtypeStruct((Mp, D), x2d.dtype),
        in_specs=in_specs,
        out_specs=pl.BlockSpec((tm, D), lambda i: (i, 0)),
        compiler_params=pltpu.CompilerParams(dimension_semantics=("parallel",)),
    )(*inputs)
    return out[:M]


def _gate_linear_kernel(x_ref, w_ref, b_ref, o_ref):
    # tokens * sigmoid(mean(tokens, channel)) -> Linear -> QuickGELU
    x = x_ref[...].astype(jnp.float32)
    att = jnp.mean(x, axis=-1, keepdims=True)
    g = (x * _sigmoid(att)).astype(x_ref.dtype)
    y = jnp.dot(g, w_ref[...], preferred_element_type=jnp.float32)
    y = y + b_ref[...].astype(jnp.float32)
    y = y * _sigmoid(1.702 * y)
    o_ref[...] = y.astype(o_ref.dtype)


def gate_linear(x2d, w, b, tm=TILE_M, tn=TILE_N):
    M, K = x2d.shape
    N = w.shape[1]
    tm, Mp = _fit(M, tm)
    tn, Np = _fit(N, tn)
    out = pl.pallas_call(
        _gate_linear_kernel,
        grid=(Mp // tm, Np // tn),
        out_shape=jax.ShapeDtypeStruct((Mp, Np), x2d.dtype),
        in_specs=[pl.BlockSpec((tm, K), lambda i, j: (i, 0)),
                  pl.BlockSpec((K, tn), lambda i, j: (0, j)),
                  pl.BlockSpec((1, tn), lambda i, j: (0, j))],
        out_specs=pl.BlockSpec((tm, tn), lambda i, j: (i, j)),
        compiler_params=pltpu.CompilerParams(
            dimension_semantics=("parallel", "parallel")),
    )(_pad_to(x2d, (Mp, K)), _pad_to(w, (K, Np)), _pad_to(b.reshape(1, N), (1, Np)))
    return out[:M, :N]


def _dwconv_ln_kernel(taps_ref, w_ref, cb_ref, g_ref, b_ref, o_ref):
    # depthwise 3x3/stride-2 conv expressed as 9 taps, fused with LayerNorm.
    acc = taps_ref[0].astype(jnp.float32) * w_ref[0]
    for t in range(1, 9):
        acc = acc + taps_ref[t].astype(jnp.float32) * w_ref[t]
    acc = acc + cb_ref[...].astype(jnp.float32)
    o_ref[...] = _layernorm_f32(acc, g_ref[...], b_ref[...]).astype(o_ref.dtype)


def dwconv_ln(taps, w9c, conv_b, ln_g, ln_b, tm=TILE_ROWS):
    _, M, C = taps.shape
    tm, Mp = _fit(M, tm)
    out = pl.pallas_call(
        _dwconv_ln_kernel,
        grid=(Mp // tm,),
        out_shape=jax.ShapeDtypeStruct((Mp, C), taps.dtype),
        in_specs=[pl.BlockSpec((9, tm, C), lambda i: (0, i, 0)),
                  pl.BlockSpec((9, 1, C), lambda i: (0, 0, 0)),
                  pl.BlockSpec((1, C), lambda i: (0, 0)),
                  pl.BlockSpec((1, C), lambda i: (0, 0)),
                  pl.BlockSpec((1, C), lambda i: (0, 0))],
        out_specs=pl.BlockSpec((tm, C), lambda i: (i, 0)),
        compiler_params=pltpu.CompilerParams(dimension_semantics=("parallel",)),
    )(_pad_to(taps, (9, Mp, C)), w9c, conv_b.reshape(1, C),
      ln_g.reshape(1, C), ln_b.reshape(1, C))
    return out[:M]


# --------------------------------------------------------------------------
# Module forward passes (layout glue in JAX, compute in Pallas)
# --------------------------------------------------------------------------

def res_attn_block(x, p, heads):
    # x: (L, B, D) — ResidualAttentionBlock (MultiheadAttention + QuickGELU MLP).
    L, B, D = x.shape
    hd = D // heads
    x2 = x.reshape(L * B, D)

    # fused ln_1 + in_proj
    qkv = ln_linear(x2, p['ln1_g'], p['ln1_b'], p['in_w'], p['in_b'])   # (L*B, 3D)
    qkv = qkv.reshape(L, B, 3, heads, hd).transpose(2, 1, 3, 0, 4)       # (3, B, H, L, hd)
    qkv = qkv.reshape(3, B * heads, L, hd)
    q, k, v = qkv[0], qkv[1], qkv[2]

    o = attention_core(q, k, v, 1.0 / math.sqrt(hd))                     # (B*H, L, hd)
    o = o.reshape(B, heads, L, hd).transpose(2, 0, 1, 3).reshape(L * B, D)

    # fused out_proj + bias + residual
    x2 = linear(o, p['out_w'], p['out_b'], residual=x2)

    # fused ln_2 + c_fc + QuickGELU + c_proj + residual (hidden stays in VMEM)
    x2 = ln_mlp(x2, p['ln2_g'], p['ln2_b'], p['fc_w'], p['fc_b'],
                p['proj_w'], p['proj_b'])
    return x2.reshape(L, B, D)


def pos_cnn(x, p):
    # x: (L, B, C), L = 1 + N; depthwise 3x3/stride-2/pad-1 conv + LN + gated MLP.
    L, B, C = x.shape
    xb = x.transpose(1, 0, 2)          # (B, L, C)
    cls_tok = xb[:, :1, :]
    toks = xb[:, 1:, :]
    N = L - 1
    H = W = int(math.sqrt(N))
    cnn_feat = toks.transpose(0, 2, 1).reshape(B, C, H, W)

    stride = 2
    Ho = (H + 2 - 3) // stride + 1
    Wo = (W + 2 - 3) // stride + 1
    xpad = jnp.pad(cnn_feat, ((0, 0), (0, 0), (1, 1), (1, 1)))
    # TODO(synk): extract the 9 conv taps via strided in-kernel DMA instead of
    # materializing them in HBM (9x traffic on this small stage).
    taps = []
    for di in range(3):
        for dj in range(3):
            t = xpad[:, :, di:di + stride * (Ho - 1) + 1:stride,
                           dj:dj + stride * (Wo - 1) + 1:stride]          # (B, C, Ho, Wo)
            taps.append(t.transpose(0, 2, 3, 1).reshape(B * Ho * Wo, C))
    taps = jnp.stack(taps, axis=0)                                        # (9, M, C)
    wk = p['conv_w'].reshape(C, 9).T.reshape(9, 1, C)                     # from (C,1,3,3)

    tokens = dwconv_ln(taps, wk, p['conv_b'], p['ln1_g'], p['ln1_b'])     # conv + LN1
    h = gate_linear(tokens, p['mlp_w'], p['mlp_b'])                       # gate + linear + gelu
    tokens = layernorm(h, p['mlp_ln_g'], p['mlp_ln_b'], residual=tokens)  # tokens + LN(h)

    tokens = tokens.reshape(B, Ho * Wo, C)
    out_seq = jnp.concatenate([cls_tok, tokens], axis=1)                  # (B, 1+Ho*Wo, C)
    return out_seq.transpose(1, 0, 2)                                     # (L', B, C)


def patch_embedding(x, p, patch_size, width):
    # x: (B, 3, R, R) NCHW; non-overlapping patch conv == patch matmul (no bias).
    B, Cin, R, _ = x.shape
    g = R // patch_size
    patches = x.reshape(B, Cin, g, patch_size, g, patch_size)
    patches = patches.transpose(0, 2, 4, 1, 3, 5).reshape(B * g * g,
                                                          Cin * patch_size * patch_size)
    wmat = p['conv1_w'].reshape(width, -1).T                              # (3*p*p, width)
    emb = linear(patches, wmat).reshape(B, g * g, width)

    cls = jnp.broadcast_to(p['class_emb'].astype(emb.dtype), (B, 1, width))
    seq = jnp.concatenate([cls, emb], axis=1)                             # (B, N+1, width)
    seq = seq + p['pos_emb'][None].astype(emb.dtype)
    Lc = g * g + 1
    seq = layernorm(seq.reshape(B * Lc, width), p['ln_pre_g'], p['ln_pre_b'])
    return seq.reshape(B, Lc, width)


def vision_transformer_forward(x, params, cfg):
    p = params
    heads = cfg['heads']
    x = patch_embedding(x, p, cfg['patch_size'], cfg['width'])            # (B, L, D)
    x = x.transpose(1, 0, 2)                                              # (L, B, D)

    # Transformer(width, layers // 2, heads)
    for blk in p['transformer']:
        x = res_attn_block(x, blk, heads)

    # PyramidTransformer(width, layers // 6, heads) — faithful resblocks[i], resblocks[i+1]
    pyr = p['pyramid']
    for i in range(len(pyr['down'])):
        x = pos_cnn(x, pyr['down'][i])
        x = res_attn_block(x, pyr['res'][i], heads)
        x = res_attn_block(x, pyr['res'][i + 1], heads)

    # ln_post then CLS selection: LayerNorm is per-row, so normalize the CLS rows only.
    cls = x[0]                                                            # (B, D)
    cls = layernorm(cls, p['ln_post_g'], p['ln_post_b'])
    return linear(cls, p['proj'])                                         # (B, output_dim)


# --------------------------------------------------------------------------
# Deterministic synthetic parameters (shapes from the module __init__)
# --------------------------------------------------------------------------

def _init_params(key, cfg):
    width = cfg['width']; patch = cfg['patch_size']; res = cfg['input_resolution']
    layers = cfg['layers']; out_dim = cfg['output_dim']
    keys = iter(jax.random.split(key, 256))

    def nrm(shape, scale=0.02):
        return (scale * jax.random.normal(next(keys), shape)).astype(jnp.float32)

    ones = lambda d: jnp.ones((d,), jnp.float32)
    zeros = lambda d: jnp.zeros((d,), jnp.float32)

    def block_params(d):
        return dict(
            ln1_g=ones(d), ln1_b=zeros(d),
            in_w=nrm((d, 3 * d)), in_b=zeros(3 * d),      # MHA in_proj (stored (K, N))
            out_w=nrm((d, d)), out_b=zeros(d),            # MHA out_proj
            ln2_g=ones(d), ln2_b=zeros(d),
            fc_w=nrm((d, 4 * d)), fc_b=zeros(4 * d),      # mlp.c_fc
            proj_w=nrm((4 * d, d)), proj_b=zeros(d),      # mlp.c_proj
        )

    def poscnn_params(d):
        return dict(
            conv_w=nrm((d, 1, 3, 3)), conv_b=zeros(d),    # depthwise conv, groups=d
            ln1_g=ones(d), ln1_b=zeros(d),
            mlp_w=nrm((d, d)), mlp_b=zeros(d),
            mlp_ln_g=ones(d), mlp_ln_b=zeros(d),
        )

    scale = width ** (-0.5)
    n_tokens = (res // patch) ** 2 + 1
    n_pyr = layers // 6
    return dict(
        conv1_w=nrm((width, 3, patch, patch)),
        class_emb=(scale * jax.random.normal(next(keys), (width,))).astype(jnp.float32),
        pos_emb=(scale * jax.random.normal(next(keys), (n_tokens, width))).astype(jnp.float32),
        ln_pre_g=ones(width), ln_pre_b=zeros(width),
        transformer=[block_params(width) for _ in range(layers // 2)],
        pyramid=dict(
            down=[poscnn_params(width) for _ in range(n_pyr)],
            res=[block_params(width) for _ in range(2 * n_pyr)],
        ),
        ln_post_g=ones(width), ln_post_b=zeros(width),
        proj=(scale * jax.random.normal(next(keys), (width, out_dim))).astype(jnp.float32),
    )


if __name__ == "__main__":
    cfg = dict(input_resolution=16, patch_size=4, width=32, layers=6, heads=4, output_dim=16)
    key = jax.random.PRNGKey(0)
    pkey, xkey = jax.random.split(key)
    params = _init_params(pkey, cfg)

    # NCHW image input, as in the PyTorch module (conv1 expects 3 channels).
    x = jax.random.normal(xkey, (2, 3, cfg['input_resolution'], cfg['input_resolution']),
                          dtype=jnp.float32)

    fwd = jax.jit(lambda xx, pp: vision_transformer_forward(xx, pp, cfg))
    out = jax.block_until_ready(fwd(x, params))
    assert out.shape == (2, cfg['output_dim']), out.shape
    assert bool(jnp.all(jnp.isfinite(out)))
    print("KERNEL_OK")
</pallas_src>

<mosaic_0001>
module attributes {stable_mosaic.version = 11 : i64} {
  func.func @kernel(%arg0: i32, %arg1: i32, %arg2: i32, %arg3: memref<32x48xf32, #tpu.memory_space<vmem>>, %arg4: memref<48x32xf32, #tpu.memory_space<vmem>>, %arg5: memref<32x32xf32, #tpu.memory_space<vmem>>, %arg6: memref<32x32xf32, #tpu.memory_space<vmem>>) attributes {dimension_semantics = [#tpu.dimension_semantics<parallel>, #tpu.dimension_semantics<parallel>, #tpu.dimension_semantics<arbitrary>], iteration_bounds = array<i64: 1, 1, 1>, scalar_prefetch = 0 : i64, scratch_operands = 1 : i64, tpu.core_type = #tpu.core_type<tc>, window_params = [{transform_indices = @transform_0, window_bounds = array<i64: 32, 48>}, {transform_indices = @transform_1, window_bounds = array<i64: 48, 32>}, {transform_indices = @transform_2, window_bounds = array<i64: 32, 32>}]} {
    %c0_i32 = arith.constant 0 : i32
    %0 = arith.cmpi eq, %arg2, %c0_i32 : i32
    %1 = arith.extui %0 : i1 to i32
    %c0_i32_0 = arith.constant 0 : i32
    %2 = arith.cmpi ne, %1, %c0_i32_0 : i32
    scf.if %2 {
      %cst_10 = arith.constant 0.000000e+00 : f32
      %12 = vector.broadcast %cst_10 : f32 to vector<32x32xf32>
      %c0_11 = arith.constant 0 : index
      %c0_12 = arith.constant 0 : index
      %13 = vector.load %arg6[%c0_11, %c0_12] : memref<32x32xf32, #tpu.memory_space<vmem>>, vector<32x32xf32>
      tpu.vector_store %arg6[%c0_11, %c0_12], %12 {strides = array<i32>} : memref<32x32xf32, #tpu.memory_space<vmem>>, vector<32x32xf32>,
    } else {
    }
    %c0 = arith.constant 0 : index
    %c0_1 = arith.constant 0 : index
    %3 = vector.load %arg6[%c0, %c0_1] : memref<32x32xf32, #tpu.memory_space<vmem>>, vector<32x32xf32>
    %c0_2 = arith.constant 0 : index
    %c0_3 = arith.constant 0 : index
    %4 = vector.load %arg3[%c0_2, %c0_3] : memref<32x48xf32, #tpu.memory_space<vmem>>, vector<32x48xf32>
    %c0_4 = arith.constant 0 : index
    %c0_5 = arith.constant 0 : index
    %5 = vector.load %arg4[%c0_4, %c0_5] : memref<48x32xf32, #tpu.memory_space<vmem>>, vector<48x32xf32>
    %cst = arith.constant dense<0.000000e+00> : vector<32x32xf32>
    %6 = tpu.matmul %4, %5, %cst {dimension_numbers = #tpu.dot_dimension_numbers<[1], [0], [0], [1], [0, 0, 1, 1], [], []>} : vector<32x48xf32>, vector<48x32xf32>, vector<32x32xf32> -> vector<32x32xf32>
    %7 = arith.addf %3, %6 : vector<32x32xf32>
    %c0_6 = arith.constant 0 : index
    %c0_7 = arith.constant 0 : index
    %8 = vector.load %arg6[%c0_6, %c0_7] : memref<32x32xf32, #tpu.memory_space<vmem>>, vector<32x32xf32>
    tpu.vector_store %arg6[%c0_6, %c0_7], %7 {strides = array<i32>} : memref<32x32xf32, #tpu.memory_space<vmem>>, vector<32x32xf32>,
    %c0_i32_8 = arith.constant 0 : i32
    %9 = arith.cmpi eq, %arg2, %c0_i32_8 : i32
    %10 = arith.extui %9 : i1 to i32
    %c0_i32_9 = arith.constant 0 : i32
    %11 = arith.cmpi ne, %10, %c0_i32_9 : i32
    scf.if %11 {
      %c0_10 = arith.constant 0 : index
      %c0_11 = arith.constant 0 : index
      %12 = vector.load %arg6[%c0_10, %c0_11] : memref<32x32xf32, #tpu.memory_space<vmem>>, vector<32x32xf32>
      %c0_12 = arith.constant 0 : index
      %c0_13 = arith.constant 0 : index
      %13 = vector.load %arg5[%c0_12, %c0_13] : memref<32x32xf32, #tpu.memory_space<vmem>>, vector<32x32xf32>
      tpu.vector_store %arg5[%c0_12, %c0_13], %12 {strides = array<i32>} : memref<32x32xf32, #tpu.memory_space<vmem>>, vector<32x32xf32>,
    } else {
    }
    return
  }
  func.func @transform_0(%arg0: i32, %arg1: i32, %arg2: i32) -> (i32, i32) {
    %c0_i32 = arith.constant 0 : i32
    return %arg0, %arg2 : i32, i32
  }
  func.func @transform_1(%arg0: i32, %arg1: i32, %arg2: i32) -> (i32, i32) {
    %c0_i32 = arith.constant 0 : i32
    return %arg2, %arg1 : i32, i32
  }
  func.func @transform_2(%arg0: i32, %arg1: i32, %arg2: i32) -> (i32, i32) {
    %c0_i32 = arith.constant 0 : i32
    return %arg0, %arg1 : i32, i32
  }
}

module attributes {stable_mosaic.version = 11 : i64} {
  func.func @kernel(%arg0: i32, %arg1: memref<34x32xf32, #tpu.memory_space<vmem>>, %arg2: memref<1x32xf32, #tpu.memory_space<vmem>>, %arg3: memref<1x32xf32, #tpu.memory_space<vmem>>, %arg4: memref<34x32xf32, #tpu.memory_space<vmem>>) attributes {dimension_semantics = [#tpu.dimension_semantics<parallel>], iteration_bounds = array<i64: 1>, scalar_prefetch = 0 : i64, scratch_operands = 0 : i64, tpu.core_type = #tpu.core_type<tc>, window_params = [{transform_indices = @transform_0, window_bounds = array<i64: 34, 32>}, {pipeline_mode = #tpu.pipeline_mode<synchronous>, transform_indices = @transform_1, window_bounds = array<i64: 1, 32>}, {pipeline_mode = #tpu.pipeline_mode<synchronous>, transform_indices = @transform_2, window_bounds = array<i64: 1, 32>}, {transform_indices = @transform_3, window_bounds = array<i64: 34, 32>}]} {
    %c0 = arith.constant 0 : index
    %c0_0 = arith.constant 0 : index
    %0 = vector.load %arg1[%c0, %c0_0] : memref<34x32xf32, #tpu.memory_space<vmem>>, vector<34x32xf32>
    %c0_1 = arith.constant 0 : index
    %c0_2 = arith.constant 0 : index
    %1 = vector.load %arg2[%c0_1, %c0_2] : memref<1x32xf32, #tpu.memory_space<vmem>>, vector<1x32xf32>
    %c0_3 = arith.constant 0 : index
    %c0_4 = arith.constant 0 : index
    %2 = vector.load %arg3[%c0_3, %c0_4] : memref<1x32xf32, #tpu.memory_space<vmem>>, vector<1x32xf32>
    %cst = arith.constant dense<0.000000e+00> : vector<34xf32>
    %3 = vector.multi_reduction <add>, %0, %cst [1] : vector<34x32xf32> to vector<34xf32>
    %4 = vector.shape_cast %3 : vector<34xf32> to vector<34x1xf32>
    %cst_5 = arith.constant 3.200000e+01 : f32
    %5 = vector.broadcast %cst_5 : f32 to vector<34x1xf32>
    %6 = arith.divf %4, %5 : vector<34x1xf32>
    %7 = vector.broadcast %6 : vector<34x1xf32> to vector<34x32xf32>
    %8 = arith.subf %0, %7 : vector<34x32xf32>
    %9 = arith.mulf %8, %8 : vector<34x32xf32>
    %cst_6 = arith.constant dense<0.000000e+00> : vector<34xf32>
    %10 = vector.multi_reduction <add>, %9, %cst_6 [1] : vector<34x32xf32> to vector<34xf32>
    %11 = vector.shape_cast %10 : vector<34xf32> to vector<34x1xf32>
    %cst_7 = arith.constant 3.200000e+01 : f32
    %12 = vector.broadcast %cst_7 : f32 to vector<34x1xf32>
    %13 = arith.divf %11, %12 : vector<34x1xf32>
    %14 = vector.broadcast %6 : vector<34x1xf32> to vector<34x32xf32>
    %15 = arith.subf %0, %14 : vector<34x32xf32>
    %cst_8 = arith.constant 9.99999974E-6 : f32
    %16 = vector.broadcast %cst_8 : f32 to vector<34x1xf32>
    %17 = arith.addf %13, %16 : vector<34x1xf32>
    %18 = math.rsqrt %17 : vector<34x1xf32>
    %19 = vector.broadcast %18 : vector<34x1xf32> to vector<34x32xf32>
    %20 = arith.mulf %15, %19 : vector<34x32xf32>
    %21 = vector.broadcast %1 : vector<1x32xf32> to vector<34x32xf32>
    %22 = arith.mulf %20, %21 : vector<34x32xf32>
    %23 = vector.broadcast %2 : vector<1x32xf32> to vector<34x32xf32>
    %24 = arith.addf %22, %23 : vector<34x32xf32>
    %c0_9 = arith.constant 0 : index
    %c0_10 = arith.constant 0 : index
    %25 = vector.load %arg4[%c0_9, %c0_10] : memref<34x32xf32, #tpu.memory_space<vmem>>, vector<34x32xf32>
    tpu.vector_store %arg4[%c0_9, %c0_10], %24 {strides = array<i32>} : memref<34x32xf32, #tpu.memory_space<vmem>>, vector<34x32xf32>,
    return
  }
  func.func @transform_0(%arg0: i32) -> (i32, i32) {
    %c0_i32 = arith.constant 0 : i32
    %c0_i32_0 = arith.constant 0 : i32
    return %arg0, %c0_i32 : i32, i32
  }
  func.func @transform_1(%arg0: i32) -> (i32, i32) {
    %c0_i32 = arith.constant 0 : i32
    %c0_i32_0 = arith.constant 0 : i32
    %c0_i32_1 = arith.constant 0 : i32
    return %c0_i32, %c0_i32_0 : i32, i32
  }
  func.func @transform_2(%arg0: i32) -> (i32, i32) {
    %c0_i32 = arith.constant 0 : i32
    %c0_i32_0 = arith.constant 0 : i32
    %c0_i32_1 = arith.constant 0 : i32
    return %c0_i32, %c0_i32_0 : i32, i32
  }
  func.func @transform_3(%arg0: i32) -> (i32, i32) {
    %c0_i32 = arith.constant 0 : i32
    %c0_i32_0 = arith.constant 0 : i32
    return %arg0, %c0_i32 : i32, i32
  }
}

module attributes {stable_mosaic.version = 11 : i64} {
  func.func @kernel(%arg0: i32, %arg1: i32, %arg2: memref<34x32xf32, #tpu.memory_space<vmem>>, %arg3: memref<1x32xf32, #tpu.memory_space<vmem>>, %arg4: memref<1x32xf32, #tpu.memory_space<vmem>>, %arg5: memref<32x96xf32, #tpu.memory_space<vmem>>, %arg6: memref<1x96xf32, #tpu.memory_space<vmem>>, %arg7: memref<34x96xf32, #tpu.memory_space<vmem>>) attributes {dimension_semantics = [#tpu.dimension_semantics<parallel>, #tpu.dimension_semantics<parallel>], iteration_bounds = array<i64: 1, 1>, scalar_prefetch = 0 : i64, scratch_operands = 0 : i64, tpu.core_type = #tpu.core_type<tc>, window_params = [{transform_indices = @transform_0, window_bounds = array<i64: 34, 32>}, {pipeline_mode = #tpu.pipeline_mode<synchronous>, transform_indices = @transform_1, window_bounds = array<i64: 1, 32>}, {pipeline_mode = #tpu.pipeline_mode<synchronous>, transform_indices = @transform_2, window_bounds = array<i64: 1, 32>}, {transform_indices = @transform_3, window_bounds = array<i64: 32, 96>}, {transform_indices = @transform_4, window_bounds = array<i64: 1, 96>}, {transform_indices = @transform_5, window_bounds = array<i64: 34, 96>}]} {
    %c0 = arith.constant 0 : index
    %c0_0 = arith.constant 0 : index
    %0 = vector.load %arg2[%c0, %c0_0] : memref<34x32xf32, #tpu.memory_space<vmem>>, vector<34x32xf32>
    %c0_1 = arith.constant 0 : index
    %c0_2 = arith.constant 0 : index
    %1 = vector.load %arg3[%c0_1, %c0_2] : memref<1x32xf32, #tpu.memory_space<vmem>>, vector<1x32xf32>
    %c0_3 = arith.constant 0 : index
    %c0_4 = arith.constant 0 : index
    %2 = vector.load %arg4[%c0_3, %c0_4] : memref<1x32xf32, #tpu.memory_space<vmem>>, vector<1x32xf32>
    %cst = arith.constant dense<0.000000e+00> : vector<34xf32>
    %3 = vector.multi_reduction <add>, %0, %cst [1] : vector<34x32xf32> to vector<34xf32>
    %4 = vector.shape_cast %3 : vector<34xf32> to vector<34x1xf32>
    %cst_5 = arith.constant 3.200000e+01 : f32
    %5 = vector.broadcast %cst_5 : f32 to vector<34x1xf32>
    %6 = arith.divf %4, %5 : vector<34x1xf32>
    %7 = vector.broadcast %6 : vector<34x1xf32> to vector<34x32xf32>
    %8 = arith.subf %0, %7 : vector<34x32xf32>
    %9 = arith.mulf %8, %8 : vector<34x32xf32>
    %cst_6 = arith.constant dense<0.000000e+00> : vector<34xf32>
    %10 = vector.multi_reduction <add>, %9, %cst_6 [1] : vector<34x32xf32> to vector<34xf32>
    %11 = vector.shape_cast %10 : vector<34xf32> to vector<34x1xf32>
    %cst_7 = arith.constant 3.200000e+01 : f32
    %12 = vector.broadcast %cst_7 : f32 to vector<34x1xf32>
    %13 = arith.divf %11, %12 : vector<34x1xf32>
    %14 = vector.broadcast %6 : vector<34x1xf32> to vector<34x32xf32>
    %15 = arith.subf %0, %14 : vector<34x32xf32>
    %cst_8 = arith.constant 9.99999974E-6 : f32
    %16 = vector.broadcast %cst_8 : f32 to vector<34x1xf32>
    %17 = arith.addf %13, %16 : vector<34x1xf32>
    %18 = math.rsqrt %17 : vector<34x1xf32>
    %19 = vector.broadcast %18 : vector<34x1xf32> to vector<34x32xf32>
    %20 = arith.mulf %15, %19 : vector<34x32xf32>
    %21 = vector.broadcast %1 : vector<1x32xf32> to vector<34x32xf32>
    %22 = arith.mulf %20, %21 : vector<34x32xf32>
    %23 = vector.broadcast %2 : vector<1x32xf32> to vector<34x32xf32>
    %24 = arith.addf %22, %23 : vector<34x32xf32>
    %c0_9 = arith.constant 0 : index
    %c0_10 = arith.constant 0 : index
    %25 = vector.load %arg5[%c0_9, %c0_10] : memref<32x96xf32, #tpu.memory_space<vmem>>, vector<32x96xf32>
    %cst_11 = arith.constant dense<0.000000e+00> : vector<34x96xf32>
    %26 = tpu.matmul %24, %25, %cst_11 {dimension_numbers = #tpu.dot_dimension_numbers<[1], [0], [0], [1], [0, 0, 1, 1], [], []>} : vector<34x32xf32>, vector<32x96xf32>, vector<34x96xf32> -> vector<34x96xf32>
    %c0_12 = arith.constant 0 : index
    %c0_13 = arith.constant 0 : index
    %27 = vector.load %arg6[%c0_12, %c0_13] : memref<1x96xf32, #tpu.memory_space<vmem>>, vector<1x96xf32>
    %28 = vector.broadcast %27 : vector<1x96xf32> to vector<34x96xf32>
    %29 = arith.addf %26, %28 : vector<34x96xf32>
    %c0_14 = arith.constant 0 : index
    %c0_15 = arith.constant 0 : index
    %30 = vector.load %arg7[%c0_14, %c0_15] : memref<34x96xf32, #tpu.memory_space<vmem>>, vector<34x96xf32>
    tpu.vector_store %arg7[%c0_14, %c0_15], %29 {strides = array<i32>} : memref<34x96xf32, #tpu.memory_space<vmem>>, vector<34x96xf32>,
    return
  }
  func.func @transform_0(%arg0: i32, %arg1: i32) -> (i32, i32) {
    %c0_i32 = arith.constant 0 : i32
    %c0_i32_0 = arith.constant 0 : i32
    return %arg0, %c0_i32 : i32, i32
  }
  func.func @transform_1(%arg0: i32, %arg1: i32) -> (i32, i32) {
    %c0_i32 = arith.constant 0 : i32
    %c0_i32_0 = arith.constant 0 : i32
    %c0_i32_1 = arith.constant 0 : i32
    return %c0_i32, %c0_i32_0 : i32, i32
  }
  func.func @transform_2(%arg0: i32, %arg1: i32) -> (i32, i32) {
    %c0_i32 = arith.constant 0 : i32
    %c0_i32_0 = arith.constant 0 : i32
    %c0_i32_1 = arith.constant 0 : i32
    return %c0_i32, %c0_i32_0 : i32, i32
  }
  func.func @transform_3(%arg0: i32, %arg1: i32) -> (i32, i32) {
    %c0_i32 = arith.constant 0 : i32
    %c0_i32_0 = arith.constant 0 : i32
    return %c0_i32, %arg1 : i32, i32
  }
  func.func @transform_4(%arg0: i32, %arg1: i32) -> (i32, i32) {
    %c0_i32 = arith.constant 0 : i32
    %c0_i32_0 = arith.constant 0 : i32
    return %c0_i32, %arg1 : i32, i32
  }
  func.func @transform_5(%arg0: i32, %arg1: i32) -> (i32, i32) {
    %c0_i32 = arith.constant 0 : i32
    return %arg0, %arg1 : i32, i32
  }
}

module attributes {stable_mosaic.version = 11 : i64} {
  func.func @kernel(%arg0: i32, %arg1: i32, %arg2: i32, %arg3: memref<34x32xf32, #tpu.memory_space<vmem>>, %arg4: memref<32x32xf32, #tpu.memory_space<vmem>>, %arg5: memref<1x32xf32, #tpu.memory_space<vmem>>, %arg6: memref<34x32xf32, #tpu.memory_space<vmem>>, %arg7: memref<34x32xf32, #tpu.memory_space<vmem>>, %arg8: memref<34x32xf32, #tpu.memory_space<vmem>>) attributes {dimension_semantics = [#tpu.dimension_semantics<parallel>, #tpu.dimension_semantics<parallel>, #tpu.dimension_semantics<arbitrary>], iteration_bounds = array<i64: 1, 1, 1>, scalar_prefetch = 0 : i64, scratch_operands = 1 : i64, tpu.core_type = #tpu.core_type<tc>, window_params = [{transform_indices = @transform_0, window_bounds = array<i64: 34, 32>}, {transform_indices = @transform_1, window_bounds = array<i64: 32, 32>}, {transform_indices = @transform_2, window_bounds = array<i64: 1, 32>}, {transform_indices = @transform_3, window_bounds = array<i64: 34, 32>}, {transform_indices = @transform_4, window_bounds = array<i64: 34, 32>}]} {
    %c0_i32 = arith.constant 0 : i32
    %0 = arith.cmpi eq, %arg2, %c0_i32 : i32
    %1 = arith.extui %0 : i1 to i32
    %c0_i32_0 = arith.constant 0 : i32
    %2 = arith.cmpi ne, %1, %c0_i32_0 : i32
    scf.if %2 {
      %cst_10 = arith.constant 0.000000e+00 : f32
      %12 = vector.broadcast %cst_10 : f32 to vector<34x32xf32>
      %c0_11 = arith.constant 0 : index
      %c0_12 = arith.constant 0 : index
      %13 = vector.load %arg8[%c0_11, %c0_12] : memref<34x32xf32, #tpu.memory_space<vmem>>, vector<34x32xf32>
      tpu.vector_store %arg8[%c0_11, %c0_12], %12 {strides = array<i32>} : memref<34x32xf32, #tpu.memory_space<vmem>>, vector<34x32xf32>,
    } else {
    }
    %c0 = arith.constant 0 : index
    %c0_1 = arith.constant 0 : index
    %3 = vector.load %arg8[%c0, %c0_1] : memref<34x32xf32, #tpu.memory_space<vmem>>, vector<34x32xf32>
    %c0_2 = arith.constant 0 : index
    %c0_3 = arith.constant 0 : index
    %4 = vector.load %arg3[%c0_2, %c0_3] : memref<34x32xf32, #tpu.memory_space<vmem>>, vector<34x32xf32>
    %c0_4 = arith.constant 0 : index
    %c0_5 = arith.constant 0 : index
    %5 = vector.load %arg4[%c0_4, %c0_5] : memref<32x32xf32, #tpu.memory_space<vmem>>, vector<32x32xf32>
    %cst = arith.constant dense<0.000000e+00> : vector<34x32xf32>
    %6 = tpu.matmul %4, %5, %cst {dimension_numbers = #tpu.dot_dimension_numbers<[1], [0], [0], [1], [0, 0, 1, 1], [], []>} : vector<34x32xf32>, vector<32x32xf32>, vector<34x32xf32> -> vector<34x32xf32>
    %7 = arith.addf %3, %6 : vector<34x32xf32>
    %c0_6 = arith.constant 0 : index
    %c0_7 = arith.constant 0 : index
    %8 = vector.load %arg8[%c0_6, %c0_7] : memref<34x32xf32, #tpu.memory_space<vmem>>, vector<34x32xf32>
    tpu.vector_store %arg8[%c0_6, %c0_7], %7 {strides = array<i32>} : memref<34x32xf32, #tpu.memory_space<vmem>>, vector<34x32xf32>,
    %c0_i32_8 = arith.constant 0 : i32
    %9 = arith.cmpi eq, %arg2, %c0_i32_8 : i32
    %10 = arith.extui %9 : i1 to i32
    %c0_i32_9 = arith.constant 0 : i32
    %11 = arith.cmpi ne, %10, %c0_i32_9 : i32
    scf.if %11 {
      %c0_10 = arith.constant 0 : index
      %c0_11 = arith.constant 0 : index
      %12 = vector.load %arg8[%c0_10, %c0_11] : memref<34x32xf32, #tpu.memory_space<vmem>>, vector<34x32xf32>
      %c0_12 = arith.constant 0 : index
      %c0_13 = arith.constant 0 : index
      %13 = vector.load %arg5[%c0_12, %c0_13] : memref<1x32xf32, #tpu.memory_space<vmem>>, vector<1x32xf32>
      %14 = vector.broadcast %13 : vector<1x32xf32> to vector<34x32xf32>
      %15 = arith.addf %12, %14 : vector<34x32xf32>
      %c0_14 = arith.constant 0 : index
      %c0_15 = arith.constant 0 : index
      %16 = vector.load %arg6[%c0_14, %c0_15] : memref<34x32xf32, #tpu.memory_space<vmem>>, vector<34x32xf32>
      %17 = arith.addf %15, %16 : vector<34x32xf32>
      %c0_16 = arith.constant 0 : index
      %c0_17 = arith.constant 0 : index
      %18 = vector.load %arg7[%c0_16, %c0_17] : memref<34x32xf32, #tpu.memory_space<vmem>>, vector<34x32xf32>
      tpu.vector_store %arg7[%c0_16, %c0_17], %17 {strides = array<i32>} : memref<34x32xf32, #tpu.memory_space<vmem>>, vector<34x32xf32>,
    } else {
    }
    return
  }
  func.func @transform_0(%arg0: i32, %arg1: i32, %arg2: i32) -> (i32, i32) {
    %c0_i32 = arith.constant 0 : i32
    return %arg0, %arg2 : i32, i32
  }
  func.func @transform_1(%arg0: i32, %arg1: i32, %arg2: i32) -> (i32, i32) {
    %c0_i32 = arith.constant 0 : i32
    return %arg2, %arg1 : i32, i32
  }
  func.func @transform_2(%arg0: i32, %arg1: i32, %arg2: i32) -> (i32, i32) {
    %c0_i32 = arith.constant 0 : i32
    %c0_i32_0 = arith.constant 0 : i32
    return %c0_i32, %arg1 : i32, i32
  }
  func.func @transform_3(%arg0: i32, %arg1: i32, %arg2: i32) -> (i32, i32) {
    %c0_i32 = arith.constant 0 : i32
    return %arg0, %arg1 : i32, i32
  }
  func.func @transform_4(%arg0: i32, %arg1: i32, %arg2: i32) -> (i32, i32) {
    %c0_i32 = arith.constant 0 : i32
    return %arg0, %arg1 : i32, i32
  }
}

module attributes {stable_mosaic.version = 11 : i64} {
  func.func @_attn_kernel(%arg0: i32, %arg1: memref<1x17x8xf32, #tpu.memory_space<vmem>>, %arg2: memref<1x17x8xf32, #tpu.memory_space<vmem>>, %arg3: memref<1x17x8xf32, #tpu.memory_space<vmem>>, %arg4: memref<1x17x8xf32, #tpu.memory_space<vmem>>) attributes {dimension_semantics = [#tpu.dimension_semantics<parallel>], iteration_bounds = array<i64: 8>, scalar_prefetch = 0 : i64, scratch_operands = 0 : i64, tpu.core_type = #tpu.core_type<tc>, window_params = [{transform_indices = @transform_0, window_bounds = array<i64: 1, 17, 8>}, {transform_indices = @transform_1, window_bounds = array<i64: 1, 17, 8>}, {transform_indices = @transform_2, window_bounds = array<i64: 1, 17, 8>}, {transform_indices = @transform_3, window_bounds = array<i64: 1, 17, 8>}]} {
    %c0 = arith.constant 0 : index
    %c0_0 = arith.constant 0 : index
    %c0_1 = arith.constant 0 : index
    %0 = vector.load %arg1[%c0, %c0_0, %c0_1] : memref<1x17x8xf32, #tpu.memory_space<vmem>>, vector<1x17x8xf32>
    %1 = vector.shape_cast %0 : vector<1x17x8xf32> to vector<17x8xf32>
    %c0_2 = arith.constant 0 : index
    %c0_3 = arith.constant 0 : index
    %c0_4 = arith.constant 0 : index
    %2 = vector.load %arg2[%c0_2, %c0_3, %c0_4] : memref<1x17x8xf32, #tpu.memory_space<vmem>>, vector<1x17x8xf32>
    %3 = vector.shape_cast %2 : vector<1x17x8xf32> to vector<17x8xf32>
    %c0_5 = arith.constant 0 : index
    %c0_6 = arith.constant 0 : index
    %c0_7 = arith.constant 0 : index
    %4 = vector.load %arg3[%c0_5, %c0_6, %c0_7] : memref<1x17x8xf32, #tpu.memory_space<vmem>>, vector<1x17x8xf32>
    %5 = vector.shape_cast %4 : vector<1x17x8xf32> to vector<17x8xf32>
    %cst = arith.constant dense<0.000000e+00> : vector<17x17xf32>
    %6 = tpu.matmul %1, %3, %cst {dimension_numbers = #tpu.dot_dimension_numbers<[1], [1], [0], [0], [0, 0, 1, 0], [], []>} : vector<17x8xf32>, vector<17x8xf32>, vector<17x17xf32> -> vector<17x17xf32>
    %cst_8 = arith.constant 0.353553385 : f32
    %7 = vector.broadcast %cst_8 : f32 to vector<17x17xf32>
    %8 = arith.mulf %6, %7 : vector<17x17xf32>
    %cst_9 = arith.constant dense<0xFF800000> : vector<17xf32>
    %9 = vector.multi_reduction <maximumf>, %8, %cst_9 [1] : vector<17x17xf32> to vector<17xf32>
    %10 = vector.shape_cast %9 : vector<17xf32> to vector<17x1xf32>
    %11 = vector.broadcast %10 : vector<17x1xf32> to vector<17x17xf32>
    %12 = arith.subf %8, %11 : vector<17x17xf32>
    %13 = math.exp %12 : vector<17x17xf32>
    %cst_10 = arith.constant dense<0.000000e+00> : vector<17xf32>
    %14 = vector.multi_reduction <add>, %13, %cst_10 [1] : vector<17x17xf32> to vector<17xf32>
    %15 = vector.shape_cast %14 : vector<17xf32> to vector<17x1xf32>
    %16 = tpu.reciprocal %15 {approx = true} : vector<17x1xf32> -> vector<17x1xf32>
    %17 = vector.broadcast %16 : vector<17x1xf32> to vector<17x17xf32>
    %18 = arith.mulf %13, %17 : vector<17x17xf32>
    %cst_11 = arith.constant dense<0.000000e+00> : vector<17x8xf32>
    %19 = tpu.matmul %18, %5, %cst_11 {dimension_numbers = #tpu.dot_dimension_numbers<[1], [0], [0], [1], [0, 0, 1, 1], [], []>} : vector<17x17xf32>, vector<17x8xf32>, vector<17x8xf32> -> vector<17x8xf32>
    %c0_12 = arith.constant 0 : index
    %c0_13 = arith.constant 0 : index
    %c0_14 = arith.constant 0 : index
    %20 = vector.load %arg4[%c0_12, %c0_13, %c0_14] : memref<1x17x8xf32, #tpu.memory_space<vmem>>, vector<1x17x8xf32>
    %21 = vector.shape_cast %20 : vector<1x17x8xf32> to vector<17x8xf32>
    %22 = vector.shape_cast %19 : vector<17x8xf32> to vector<1x17x8xf32>
    tpu.vector_store %arg4[%c0_12, %c0_13, %c0_14], %22 {strides = array<i32>} : memref<1x17x8xf32, #tpu.memory_space<vmem>>, vector<1x17x8xf32>,
    return
  }
  func.func @transform_0(%arg0: i32) -> (i32, i32, i32) {
    %c0_i32 = arith.constant 0 : i32
    %c0_i32_0 = arith.constant 0 : i32
    %c0_i32_1 = arith.constant 0 : i32
    return %arg0, %c0_i32, %c0_i32_0 : i32, i32, i32
  }
  func.func @transform_1(%arg0: i32) -> (i32, i32, i32) {
    %c0_i32 = arith.constant 0 : i32
    %c0_i32_0 = arith.constant 0 : i32
    %c0_i32_1 = arith.constant 0 : i32
    return %arg0, %c0_i32, %c0_i32_0 : i32, i32, i32
  }
  func.func @transform_2(%arg0: i32) -> (i32, i32, i32) {
    %c0_i32 = arith.constant 0 : i32
    %c0_i32_0 = arith.constant 0 : i32
    %c0_i32_1 = arith.constant 0 : i32
    return %arg0, %c0_i32, %c0_i32_0 : i32, i32, i32
  }
  func.func @transform_3(%arg0: i32) -> (i32, i32, i32) {
    %c0_i32 = arith.constant 0 : i32
    %c0_i32_0 = arith.constant 0 : i32
    %c0_i32_1 = arith.constant 0 : i32
    return %arg0, %c0_i32, %c0_i32_0 : i32, i32, i32
  }
}

module attributes {stable_mosaic.version = 11 : i64} {
  func.func @_ln_mlp_kernel(%arg0: i32, %arg1: i32, %arg2: memref<34x32xf32, #tpu.memory_space<vmem>>, %arg3: memref<1x32xf32, #tpu.memory_space<vmem>>, %arg4: memref<1x32xf32, #tpu.memory_space<vmem>>, %arg5: memref<32x128xf32, #tpu.memory_space<vmem>>, %arg6: memref<1x128xf32, #tpu.memory_space<vmem>>, %arg7: memref<128x32xf32, #tpu.memory_space<vmem>>, %arg8: memref<1x32xf32, #tpu.memory_space<vmem>>, %arg9: memref<34x32xf32, #tpu.memory_space<vmem>>, %arg10: memref<34x32xf32, #tpu.memory_space<vmem>>, %arg11: memref<34x32xf32, #tpu.memory_space<vmem>>) attributes {dimension_semantics = [#tpu.dimension_semantics<parallel>, #tpu.dimension_semantics<arbitrary>], iteration_bounds = array<i64: 1, 1>, scalar_prefetch = 0 : i64, scratch_operands = 2 : i64, tpu.core_type = #tpu.core_type<tc>, window_params = [{transform_indices = @transform_0, window_bounds = array<i64: 34, 32>}, {pipeline_mode = #tpu.pipeline_mode<synchronous>, transform_indices = @transform_1, window_bounds = array<i64: 1, 32>}, {pipeline_mode = #tpu.pipeline_mode<synchronous>, transform_indices = @transform_2, window_bounds = array<i64: 1, 32>}, {transform_indices = @transform_3, window_bounds = array<i64: 32, 128>}, {transform_indices = @transform_4, window_bounds = array<i64: 1, 128>}, {transform_indices = @transform_5, window_bounds = array<i64: 128, 32>}, {pipeline_mode = #tpu.pipeline_mode<synchronous>, transform_indices = @transform_6, window_bounds = array<i64: 1, 32>}, {transform_indices = @transform_7, window_bounds = array<i64: 34, 32>}]} {
    %c0_i32 = arith.constant 0 : i32
    %0 = arith.cmpi eq, %arg1, %c0_i32 : i32
    %1 = arith.extui %0 : i1 to i32
    %c0_i32_0 = arith.constant 0 : i32
    %2 = arith.cmpi ne, %1, %c0_i32_0 : i32
    scf.if %2 {
      %c0_18 = arith.constant 0 : index
      %c0_19 = arith.constant 0 : index
      %26 = vector.load %arg2[%c0_18, %c0_19] : memref<34x32xf32, #tpu.memory_space<vmem>>, vector<34x32xf32>
      %c0_20 = arith.constant 0 : index
      %c0_21 = arith.constant 0 : index
      %27 = vector.load %arg3[%c0_20, %c0_21] : memref<1x32xf32, #tpu.memory_space<vmem>>, vector<1x32xf32>
      %c0_22 = arith.constant 0 : index
      %c0_23 = arith.constant 0 : index
      %28 = vector.load %arg4[%c0_22, %c0_23] : memref<1x32xf32, #tpu.memory_space<vmem>>, vector<1x32xf32>
      %cst_24 = arith.constant dense<0.000000e+00> : vector<34xf32>
      %29 = vector.multi_reduction <add>, %26, %cst_24 [1] : vector<34x32xf32> to vector<34xf32>
      %30 = vector.shape_cast %29 : vector<34xf32> to vector<34x1xf32>
      %cst_25 = arith.constant 3.200000e+01 : f32
      %31 = vector.broadcast %cst_25 : f32 to vector<34x1xf32>
      %32 = arith.divf %30, %31 : vector<34x1xf32>
      %33 = vector.broadcast %32 : vector<34x1xf32> to vector<34x32xf32>
      %34 = arith.subf %26, %33 : vector<34x32xf32>
      %35 = arith.mulf %34, %34 : vector<34x32xf32>
      %cst_26 = arith.constant dense<0.000000e+00> : vector<34xf32>
      %36 = vector.multi_reduction <add>, %35, %cst_26 [1] : vector<34x32xf32> to vector<34xf32>
      %37 = vector.shape_cast %36 : vector<34xf32> to vector<34x1xf32>
      %cst_27 = arith.constant 3.200000e+01 : f32
      %38 = vector.broadcast %cst_27 : f32 to vector<34x1xf32>
      %39 = arith.divf %37, %38 : vector<34x1xf32>
      %40 = vector.broadcast %32 : vector<34x1xf32> to vector<34x32xf32>
      %41 = arith.subf %26, %40 : vector<34x32xf32>
      %cst_28 = arith.constant 9.99999974E-6 : f32
      %42 = vector.broadcast %cst_28 : f32 to vector<34x1xf32>
      %43 = arith.addf %39, %42 : vector<34x1xf32>
      %44 = math.rsqrt %43 : vector<34x1xf32>
      %45 = vector.broadcast %44 : vector<34x1xf32> to vector<34x32xf32>
      %46 = arith.mulf %41, %45 : vector<34x32xf32>
      %47 = vector.broadcast %27 : vector<1x32xf32> to vector<34x32xf32>
      %48 = arith.mulf %46, %47 : vector<34x32xf32>
      %49 = vector.broadcast %28 : vector<1x32xf32> to vector<34x32xf32>
      %50 = arith.addf %48, %49 : vector<34x32xf32>
      %c0_29 = arith.constant 0 : index
      %c0_30 = arith.constant 0 : index
      %51 = vector.load %arg10[%c0_29, %c0_30] : memref<34x32xf32, #tpu.memory_space<vmem>>, vector<34x32xf32>
      tpu.vector_store %arg10[%c0_29, %c0_30], %50 {strides = array<i32>} : memref<34x32xf32, #tpu.memory_space<vmem>>, vector<34x32xf32>,
      %cst_31 = arith.constant 0.000000e+00 : f32
      %52 = vector.broadcast %cst_31 : f32 to vector<34x32xf32>
      %c0_32 = arith.constant 0 : index
      %c0_33 = arith.constant 0 : index
      %53 = vector.load %arg11[%c0_32, %c0_33] : memref<34x32xf32, #tpu.memory_space<vmem>>, vector<34x32xf32>
      tpu.vector_store %arg11[%c0_32, %c0_33], %52 {strides = array<i32>} : memref<34x32xf32, #tpu.memory_space<vmem>>, vector<34x32xf32>,
    } else {
    }
    %c0 = arith.constant 0 : index
    %c0_1 = arith.constant 0 : index
    %3 = vector.load %arg10[%c0, %c0_1] : memref<34x32xf32, #tpu.memory_space<vmem>>, vector<34x32xf32>
    %c0_2 = arith.constant 0 : index
    %c0_3 = arith.constant 0 : index
    %4 = vector.load %arg5[%c0_2, %c0_3] : memref<32x128xf32, #tpu.memory_space<vmem>>, vector<32x128xf32>
    %cst = arith.constant dense<0.000000e+00> : vector<34x128xf32>
    %5 = tpu.matmul %3, %4, %cst {dimension_numbers = #tpu.dot_dimension_numbers<[1], [0], [0], [1], [0, 0, 1, 1], [], []>} : vector<34x32xf32>, vector<32x128xf32>, vector<34x128xf32> -> vector<34x128xf32>
    %c0_4 = arith.constant 0 : index
    %c0_5 = arith.constant 0 : index
    %6 = vector.load %arg6[%c0_4, %c0_5] : memref<1x128xf32, #tpu.memory_space<vmem>>, vector<1x128xf32>
    %7 = vector.broadcast %6 : vector<1x128xf32> to vector<34x128xf32>
    %8 = arith.addf %5, %7 : vector<34x128xf32>
    %cst_6 = arith.constant 1.702000e+00 : f32
    %9 = vector.broadcast %cst_6 : f32 to vector<34x128xf32>
    %10 = arith.mulf %9, %8 : vector<34x128xf32>
    %cst_7 = arith.constant 0.000000e+00 : f32
    %11 = vector.broadcast %cst_7 : f32 to vector<34x128xf32>
    %12 = arith.subf %11, %10 : vector<34x128xf32>
    %13 = math.exp %12 : vector<34x128xf32>
    %cst_8 = arith.constant 1.000000e+00 : f32
    %14 = vector.broadcast %cst_8 : f32 to vector<34x128xf32>
    %15 = arith.addf %14, %13 : vector<34x128xf32>
    %16 = tpu.reciprocal %15 {approx = true} : vector<34x128xf32> -> vector<34x128xf32>
    %17 = arith.mulf %8, %16 : vector<34x128xf32>
    %c0_9 = arith.constant 0 : index
    %c0_10 = arith.constant 0 : index
    %18 = vector.load %arg11[%c0_9, %c0_10] : memref<34x32xf32, #tpu.memory_space<vmem>>, vector<34x32xf32>
    %c0_11 = arith.constant 0 : index
    %c0_12 = arith.constant 0 : index
    %19 = vector.load %arg7[%c0_11, %c0_12] : memref<128x32xf32, #tpu.memory_space<vmem>>, vector<128x32xf32>
    %cst_13 = arith.constant dense<0.000000e+00> : vector<34x32xf32>
    %20 = tpu.matmul %17, %19, %cst_13 {dimension_numbers = #tpu.dot_dimension_numbers<[1], [0], [0], [1], [0, 0, 1, 1], [], []>} : vector<34x128xf32>, vector<128x32xf32>, vector<34x32xf32> -> vector<34x32xf32>
    %21 = arith.addf %18, %20 : vector<34x32xf32>
    %c0_14 = arith.constant 0 : index
    %c0_15 = arith.constant 0 : index
    %22 = vector.load %arg11[%c0_14, %c0_15] : memref<34x32xf32, #tpu.memory_space<vmem>>, vector<34x32xf32>
    tpu.vector_store %arg11[%c0_14, %c0_15], %21 {strides = array<i32>} : memref<34x32xf32, #tpu.memory_space<vmem>>, vector<34x32xf32>,
    %c0_i32_16 = arith.constant 0 : i32
    %23 = arith.cmpi eq, %arg1, %c0_i32_16 : i32
    %24 = arith.extui %23 : i1 to i32
    %c0_i32_17 = arith.constant 0 : i32
    %25 = arith.cmpi ne, %24, %c0_i32_17 : i32
    scf.if %25 {
      %c0_18 = arith.constant 0 : index
      %c0_19 = arith.constant 0 : index
      %26 = vector.load %arg11[%c0_18, %c0_19] : memref<34x32xf32, #tpu.memory_space<vmem>>, vector<34x32xf32>
      %c0_20 = arith.constant 0 : index
      %c0_21 = arith.constant 0 : index
      %27 = vector.load %arg8[%c0_20, %c0_21] : memref<1x32xf32, #tpu.memory_space<vmem>>, vector<1x32xf32>
      %28 = vector.broadcast %27 : vector<1x32xf32> to vector<34x32xf32>
      %29 = arith.addf %26, %28 : vector<34x32xf32>
      %c0_22 = arith.constant 0 : index
      %c0_23 = arith.constant 0 : index
      %30 = vector.load %arg2[%c0_22, %c0_23] : memref<34x32xf32, #tpu.memory_space<vmem>>, vector<34x32xf32>
      %31 = arith.addf %29, %30 : vector<34x32xf32>
      %c0_24 = arith.constant 0 : index
      %c0_25 = arith.constant 0 : index
      %32 = vector.load %arg9[%c0_24, %c0_25] : memref<34x32xf32, #tpu.memory_space<vmem>>, vector<34x32xf32>
      tpu.vector_store %arg9[%c0_24, %c0_25], %31 {strides = array<i32>} : memref<34x32xf32, #tpu.memory_space<vmem>>, vector<34x32xf32>,
    } else {
    }
    return
  }
  func.func @transform_0(%arg0: i32, %arg1: i32) -> (i32, i32) {
    %c0_i32 = arith.constant 0 : i32
    %c0_i32_0 = arith.constant 0 : i32
    return %arg0, %c0_i32 : i32, i32
  }
  func.func @transform_1(%arg0: i32, %arg1: i32) -> (i32, i32) {
    %c0_i32 = arith.constant 0 : i32
    %c0_i32_0 = arith.constant 0 : i32
    %c0_i32_1 = arith.constant 0 : i32
    return %c0_i32, %c0_i32_0 : i32, i32
  }
  func.func @transform_2(%arg0: i32, %arg1: i32) -> (i32, i32) {
    %c0_i32 = arith.constant 0 : i32
    %c0_i32_0 = arith.constant 0 : i32
    %c0_i32_1 = arith.constant 0 : i32
    return %c0_i32, %c0_i32_0 : i32, i32
  }
  func.func @transform_3(%arg0: i32, %arg1: i32) -> (i32, i32) {
    %c0_i32 = arith.constant 0 : i32
    %c0_i32_0 = arith.constant 0 : i32
    return %c0_i32, %arg1 : i32, i32
  }
  func.func @transform_4(%arg0: i32, %arg1: i32) -> (i32, i32) {
    %c0_i32 = arith.constant 0 : i32
    %c0_i32_0 = arith.constant 0 : i32
    return %c0_i32, %arg1 : i32, i32
  }
  func.func @transform_5(%arg0: i32, %arg1: i32) -> (i32, i32) {
    %c0_i32 = arith.constant 0 : i32
    %c0_i32_0 = arith.constant 0 : i32
    return %arg1, %c0_i32 : i32, i32
  }
  func.func @transform_6(%arg0: i32, %arg1: i32) -> (i32, i32) {
    %c0_i32 = arith.constant 0 : i32
    %c0_i32_0 = arith.constant 0 : i32
    %c0_i32_1 = arith.constant 0 : i32
    return %c0_i32, %c0_i32_0 : i32, i32
  }
  func.func @transform_7(%arg0: i32, %arg1: i32) -> (i32, i32) {
    %c0_i32 = arith.constant 0 : i32
    %c0_i32_0 = arith.constant 0 : i32
    return %arg0, %c0_i32 : i32, i32
  }
}

module attributes {stable_mosaic.version = 11 : i64} {
  func.func @_gate_linear_kernel(%arg0: i32, %arg1: i32, %arg2: memref<8x32xf32, #tpu.memory_space<vmem>>, %arg3: memref<32x32xf32, #tpu.memory_space<vmem>>, %arg4: memref<1x32xf32, #tpu.memory_space<vmem>>, %arg5: memref<8x32xf32, #tpu.memory_space<vmem>>) attributes {dimension_semantics = [#tpu.dimension_semantics<parallel>, #tpu.dimension_semantics<parallel>], iteration_bounds = array<i64: 1, 1>, scalar_prefetch = 0 : i64, scratch_operands = 0 : i64, tpu.core_type = #tpu.core_type<tc>, window_params = [{transform_indices = @transform_0, window_bounds = array<i64: 8, 32>}, {transform_indices = @transform_1, window_bounds = array<i64: 32, 32>}, {transform_indices = @transform_2, window_bounds = array<i64: 1, 32>}, {transform_indices = @transform_3, window_bounds = array<i64: 8, 32>}]} {
    %c0 = arith.constant 0 : index
    %c0_0 = arith.constant 0 : index
    %0 = vector.load %arg2[%c0, %c0_0] : memref<8x32xf32, #tpu.memory_space<vmem>>, vector<8x32xf32>
    %cst = arith.constant dense<0.000000e+00> : vector<8xf32>
    %1 = vector.multi_reduction <add>, %0, %cst [1] : vector<8x32xf32> to vector<8xf32>
    %2 = vector.shape_cast %1 : vector<8xf32> to vector<8x1xf32>
    %cst_1 = arith.constant 3.200000e+01 : f32
    %3 = vector.broadcast %cst_1 : f32 to vector<8x1xf32>
    %4 = arith.divf %2, %3 : vector<8x1xf32>
    %cst_2 = arith.constant 0.000000e+00 : f32
    %5 = vector.broadcast %cst_2 : f32 to vector<8x1xf32>
    %6 = arith.subf %5, %4 : vector<8x1xf32>
    %7 = math.exp %6 : vector<8x1xf32>
    %cst_3 = arith.constant 1.000000e+00 : f32
    %8 = vector.broadcast %cst_3 : f32 to vector<8x1xf32>
    %9 = arith.addf %8, %7 : vector<8x1xf32>
    %10 = tpu.reciprocal %9 {approx = true} : vector<8x1xf32> -> vector<8x1xf32>
    %11 = vector.broadcast %10 : vector<8x1xf32> to vector<8x32xf32>
    %12 = arith.mulf %0, %11 : vector<8x32xf32>
    %c0_4 = arith.constant 0 : index
    %c0_5 = arith.constant 0 : index
    %13 = vector.load %arg3[%c0_4, %c0_5] : memref<32x32xf32, #tpu.memory_space<vmem>>, vector<32x32xf32>
    %cst_6 = arith.constant dense<0.000000e+00> : vector<8x32xf32>
    %14 = tpu.matmul %12, %13, %cst_6 {dimension_numbers = #tpu.dot_dimension_numbers<[1], [0], [0], [1], [0, 0, 1, 1], [], []>} : vector<8x32xf32>, vector<32x32xf32>, vector<8x32xf32> -> vector<8x32xf32>
    %c0_7 = arith.constant 0 : index
    %c0_8 = arith.constant 0 : index
    %15 = vector.load %arg4[%c0_7, %c0_8] : memref<1x32xf32, #tpu.memory_space<vmem>>, vector<1x32xf32>
    %16 = vector.broadcast %15 : vector<1x32xf32> to vector<8x32xf32>
    %17 = arith.addf %14, %16 : vector<8x32xf32>
    %cst_9 = arith.constant 1.702000e+00 : f32
    %18 = vector.broadcast %cst_9 : f32 to vector<8x32xf32>
    %19 = arith.mulf %18, %17 : vector<8x32xf32>
    %cst_10 = arith.constant 0.000000e+00 : f32
    %20 = vector.broadcast %cst_10 : f32 to vector<8x32xf32>
    %21 = arith.subf %20, %19 : vector<8x32xf32>
    %22 = math.exp %21 : vector<8x32xf32>
    %cst_11 = arith.constant 1.000000e+00 : f32
    %23 = vector.broadcast %cst_11 : f32 to vector<8x32xf32>
    %24 = arith.addf %23, %22 : vector<8x32xf32>
    %25 = tpu.reciprocal %24 {approx = true} : vector<8x32xf32> -> vector<8x32xf32>
    %26 = arith.mulf %17, %25 : vector<8x32xf32>
    %c0_12 = arith.constant 0 : index
    %c0_13 = arith.constant 0 : index
    %27 = vector.load %arg5[%c0_12, %c0_13] : memref<8x32xf32, #tpu.memory_space<vmem>>, vector<8x32xf32>
    tpu.vector_store %arg5[%c0_12, %c0_13], %26 {strides = array<i32>} : memref<8x32xf32, #tpu.memory_space<vmem>>, vector<8x32xf32>,
    return
  }
  func.func @transform_0(%arg0: i32, %arg1: i32) -> (i32, i32) {
    %c0_i32 = arith.constant 0 : i32
    %c0_i32_0 = arith.constant 0 : i32
    return %arg0, %c0_i32 : i32, i32
  }
  func.func @transform_1(%arg0: i32, %arg1: i32) -> (i32, i32) {
    %c0_i32 = arith.constant 0 : i32
    %c0_i32_0 = arith.constant 0 : i32
    return %c0_i32, %arg1 : i32, i32
  }
  func.func @transform_2(%arg0: i32, %arg1: i32) -> (i32, i32) {
    %c0_i32 = arith.constant 0 : i32
    %c0_i32_0 = arith.constant 0 : i32
    return %c0_i32, %arg1 : i32, i32
  }
  func.func @transform_3(%arg0: i32, %arg1: i32) -> (i32, i32) {
    %c0_i32 = arith.constant 0 : i32
    return %arg0, %arg1 : i32, i32
  }
}

module attributes {stable_mosaic.version = 11 : i64} {
  func.func @_dwconv_ln_kernel(%arg0: i32, %arg1: memref<9x8x32xf32, #tpu.memory_space<vmem>>, %arg2: memref<9x1x32xf32, #tpu.memory_space<vmem>>, %arg3: memref<1x32xf32, #tpu.memory_space<vmem>>, %arg4: memref<1x32xf32, #tpu.memory_space<vmem>>, %arg5: memref<1x32xf32, #tpu.memory_space<vmem>>, %arg6: memref<8x32xf32, #tpu.memory_space<vmem>>) attributes {dimension_semantics = [#tpu.dimension_semantics<parallel>], iteration_bounds = array<i64: 1>, scalar_prefetch = 0 : i64, scratch_operands = 0 : i64, tpu.core_type = #tpu.core_type<tc>, window_params = [{transform_indices = @transform_0, window_bounds = array<i64: 9, 8, 32>}, {pipeline_mode = #tpu.pipeline_mode<synchronous>, transform_indices = @transform_1, window_bounds = array<i64: 9, 1, 32>}, {pipeline_mode = #tpu.pipeline_mode<synchronous>, transform_indices = @transform_2, window_bounds = array<i64: 1, 32>}, {pipeline_mode = #tpu.pipeline_mode<synchronous>, transform_indices = @transform_3, window_bounds = array<i64: 1, 32>}, {pipeline_mode = #tpu.pipeline_mode<synchronous>, transform_indices = @transform_4, window_bounds = array<i64: 1, 32>}, {transform_indices = @transform_5, window_bounds = array<i64: 8, 32>}]} {
    %c0 = arith.constant 0 : index
    %c0_0 = arith.constant 0 : index
    %c0_1 = arith.constant 0 : index
    %0 = vector.load %arg1[%c0, %c0_0, %c0_1] : memref<9x8x32xf32, #tpu.memory_space<vmem>>, vector<1x8x32xf32>
    %1 = vector.shape_cast %0 : vector<1x8x32xf32> to vector<8x32xf32>
    %c0_2 = arith.constant 0 : index
    %c0_3 = arith.constant 0 : index
    %c0_4 = arith.constant 0 : index
    %2 = vector.load %arg2[%c0_2, %c0_3, %c0_4] : memref<9x1x32xf32, #tpu.memory_space<vmem>>, vector<1x1x32xf32>
    %3 = vector.shape_cast %2 : vector<1x1x32xf32> to vector<1x32xf32>
    %4 = vector.broadcast %3 : vector<1x32xf32> to vector<8x32xf32>
    %5 = arith.mulf %1, %4 : vector<8x32xf32>
    %c1 = arith.constant 1 : index
    %c0_5 = arith.constant 0 : index
    %c0_6 = arith.constant 0 : index
    %6 = vector.load %arg1[%c1, %c0_5, %c0_6] : memref<9x8x32xf32, #tpu.memory_space<vmem>>, vector<1x8x32xf32>
    %7 = vector.shape_cast %6 : vector<1x8x32xf32> to vector<8x32xf32>
    %c1_7 = arith.constant 1 : index
    %c0_8 = arith.constant 0 : index
    %c0_9 = arith.constant 0 : index
    %8 = vector.load %arg2[%c1_7, %c0_8, %c0_9] : memref<9x1x32xf32, #tpu.memory_space<vmem>>, vector<1x1x32xf32>
    %9 = vector.shape_cast %8 : vector<1x1x32xf32> to vector<1x32xf32>
    %10 = vector.broadcast %9 : vector<1x32xf32> to vector<8x32xf32>
    %11 = arith.mulf %7, %10 : vector<8x32xf32>
    %12 = arith.addf %5, %11 : vector<8x32xf32>
    %c2 = arith.constant 2 : index
    %c0_10 = arith.constant 0 : index
    %c0_11 = arith.constant 0 : index
    %13 = vector.load %arg1[%c2, %c0_10, %c0_11] : memref<9x8x32xf32, #tpu.memory_space<vmem>>, vector<1x8x32xf32>
    %14 = vector.shape_cast %13 : vector<1x8x32xf32> to vector<8x32xf32>
    %c2_12 = arith.constant 2 : index
    %c0_13 = arith.constant 0 : index
    %c0_14 = arith.constant 0 : index
    %15 = vector.load %arg2[%c2_12, %c0_13, %c0_14] : memref<9x1x32xf32, #tpu.memory_space<vmem>>, vector<1x1x32xf32>
    %16 = vector.shape_cast %15 : vector<1x1x32xf32> to vector<1x32xf32>
    %17 = vector.broadcast %16 : vector<1x32xf32> to vector<8x32xf32>
    %18 = arith.mulf %14, %17 : vector<8x32xf32>
    %19 = arith.addf %12, %18 : vector<8x32xf32>
    %c3 = arith.constant 3 : index
    %c0_15 = arith.constant 0 : index
    %c0_16 = arith.constant 0 : index
    %20 = vector.load %arg1[%c3, %c0_15, %c0_16] : memref<9x8x32xf32, #tpu.memory_space<vmem>>, vector<1x8x32xf32>
    %21 = vector.shape_cast %20 : vector<1x8x32xf32> to vector<8x32xf32>
    %c3_17 = arith.constant 3 : index
    %c0_18 = arith.constant 0 : index
    %c0_19 = arith.constant 0 : index
    %22 = vector.load %arg2[%c3_17, %c0_18, %c0_19] : memref<9x1x32xf32, #tpu.memory_space<vmem>>, vector<1x1x32xf32>
    %23 = vector.shape_cast %22 : vector<1x1x32xf32> to vector<1x32xf32>
    %24 = vector.broadcast %23 : vector<1x32xf32> to vector<8x32xf32>
    %25 = arith.mulf %21, %24 : vector<8x32xf32>
    %26 = arith.addf %19, %25 : vector<8x32xf32>
    %c4 = arith.constant 4 : index
    %c0_20 = arith.constant 0 : index
    %c0_21 = arith.constant 0 : index
    %27 = vector.load %arg1[%c4, %c0_20, %c0_21] : memref<9x8x32xf32, #tpu.memory_space<vmem>>, vector<1x8x32xf32>
    %28 = vector.shape_cast %27 : vector<1x8x32xf32> to vector<8x32xf32>
    %c4_22 = arith.constant 4 : index
    %c0_23 = arith.constant 0 : index
    %c0_24 = arith.constant 0 : index
    %29 = vector.load %arg2[%c4_22, %c0_23, %c0_24] : memref<9x1x32xf32, #tpu.memory_space<vmem>>, vector<1x1x32xf32>
    %30 = vector.shape_cast %29 : vector<1x1x32xf32> to vector<1x32xf32>
    %31 = vector.broadcast %30 : vector<1x32xf32> to vector<8x32xf32>
    %32 = arith.mulf %28, %31 : vector<8x32xf32>
    %33 = arith.addf %26, %32 : vector<8x32xf32>
    %c5 = arith.constant 5 : index
    %c0_25 = arith.constant 0 : index
    %c0_26 = arith.constant 0 : index
    %34 = vector.load %arg1[%c5, %c0_25, %c0_26] : memref<9x8x32xf32, #tpu.memory_space<vmem>>, vector<1x8x32xf32>
    %35 = vector.shape_cast %34 : vector<1x8x32xf32> to vector<8x32xf32>
    %c5_27 = arith.constant 5 : index
    %c0_28 = arith.constant 0 : index
    %c0_29 = arith.constant 0 : index
    %36 = vector.load %arg2[%c5_27, %c0_28, %c0_29] : memref<9x1x32xf32, #tpu.memory_space<vmem>>, vector<1x1x32xf32>
    %37 = vector.shape_cast %36 : vector<1x1x32xf32> to vector<1x32xf32>
    %38 = vector.broadcast %37 : vector<1x32xf32> to vector<8x32xf32>
    %39 = arith.mulf %35, %38 : vector<8x32xf32>
    %40 = arith.addf %33, %39 : vector<8x32xf32>
    %c6 = arith.constant 6 : index
    %c0_30 = arith.constant 0 : index
    %c0_31 = arith.constant 0 : index
    %41 = vector.load %arg1[%c6, %c0_30, %c0_31] : memref<9x8x32xf32, #tpu.memory_space<vmem>>, vector<1x8x32xf32>
    %42 = vector.shape_cast %41 : vector<1x8x32xf32> to vector<8x32xf32>
    %c6_32 = arith.constant 6 : index
    %c0_33 = arith.constant 0 : index
    %c0_34 = arith.constant 0 : index
    %43 = vector.load %arg2[%c6_32, %c0_33, %c0_34] : memref<9x1x32xf32, #tpu.memory_space<vmem>>, vector<1x1x32xf32>
    %44 = vector.shape_cast %43 : vector<1x1x32xf32> to vector<1x32xf32>
    %45 = vector.broadcast %44 : vector<1x32xf32> to vector<8x32xf32>
    %46 = arith.mulf %42, %45 : vector<8x32xf32>
    %47 = arith.addf %40, %46 : vector<8x32xf32>
    %c7 = arith.constant 7 : index
    %c0_35 = arith.constant 0 : index
    %c0_36 = arith.constant 0 : index
    %48 = vector.load %arg1[%c7, %c0_35, %c0_36] : memref<9x8x32xf32, #tpu.memory_space<vmem>>, vector<1x8x32xf32>
    %49 = vector.shape_cast %48 : vector<1x8x32xf32> to vector<8x32xf32>
    %c7_37 = arith.constant 7 : index
    %c0_38 = arith.constant 0 : index
    %c0_39 = arith.constant 0 : index
    %50 = vector.load %arg2[%c7_37, %c0_38, %c0_39] : memref<9x1x32xf32, #tpu.memory_space<vmem>>, vector<1x1x32xf32>
    %51 = vector.shape_cast %50 : vector<1x1x32xf32> to vector<1x32xf32>
    %52 = vector.broadcast %51 : vector<1x32xf32> to vector<8x32xf32>
    %53 = arith.mulf %49, %52 : vector<8x32xf32>
    %54 = arith.addf %47, %53 : vector<8x32xf32>
    %c8 = arith.constant 8 : index
    %c0_40 = arith.constant 0 : index
    %c0_41 = arith.constant 0 : index
    %55 = vector.load %arg1[%c8, %c0_40, %c0_41] : memref<9x8x32xf32, #tpu.memory_space<vmem>>, vector<1x8x32xf32>
    %56 = vector.shape_cast %55 : vector<1x8x32xf32> to vector<8x32xf32>
    %c8_42 = arith.constant 8 : index
    %c0_43 = arith.constant 0 : index
    %c0_44 = arith.constant 0 : index
    %57 = vector.load %arg2[%c8_42, %c0_43, %c0_44] : memref<9x1x32xf32, #tpu.memory_space<vmem>>, vector<1x1x32xf32>
    %58 = vector.shape_cast %57 : vector<1x1x32xf32> to vector<1x32xf32>
    %59 = vector.broadcast %58 : vector<1x32xf32> to vector<8x32xf32>
    %60 = arith.mulf %56, %59 : vector<8x32xf32>
    %61 = arith.addf %54, %60 : vector<8x32xf32>
    %c0_45 = arith.constant 0 : index
    %c0_46 = arith.constant 0 : index
    %62 = vector.load %arg3[%c0_45, %c0_46] : memref<1x32xf32, #tpu.memory_space<vmem>>, vector<1x32xf32>
    %63 = vector.broadcast %62 : vector<1x32xf32> to vector<8x32xf32>
    %64 = arith.addf %61, %63 : vector<8x32xf32>
    %c0_47 = arith.constant 0 : index
    %c0_48 = arith.constant 0 : index
    %65 = vector.load %arg4[%c0_47, %c0_48] : memref<1x32xf32, #tpu.memory_space<vmem>>, vector<1x32xf32>
    %c0_49 = arith.constant 0 : index
    %c0_50 = arith.constant 0 : index
    %66 = vector.load %arg5[%c0_49, %c0_50] : memref<1x32xf32, #tpu.memory_space<vmem>>, vector<1x32xf32>
    %cst = arith.constant dense<0.000000e+00> : vector<8xf32>
    %67 = vector.multi_reduction <add>, %64, %cst [1] : vector<8x32xf32> to vector<8xf32>
    %68 = vector.shape_cast %67 : vector<8xf32> to vector<8x1xf32>
    %cst_51 = arith.constant 3.200000e+01 : f32
    %69 = vector.broadcast %cst_51 : f32 to vector<8x1xf32>
    %70 = arith.divf %68, %69 : vector<8x1xf32>
    %71 = vector.broadcast %70 : vector<8x1xf32> to vector<8x32xf32>
    %72 = arith.subf %64, %71 : vector<8x32xf32>
    %73 = arith.mulf %72, %72 : vector<8x32xf32>
    %cst_52 = arith.constant dense<0.000000e+00> : vector<8xf32>
    %74 = vector.multi_reduction <add>, %73, %cst_52 [1] : vector<8x32xf32> to vector<8xf32>
    %75 = vector.shape_cast %74 : vector<8xf32> to vector<8x1xf32>
    %cst_53 = arith.constant 3.200000e+01 : f32
    %76 = vector.broadcast %cst_53 : f32 to vector<8x1xf32>
    %77 = arith.divf %75, %76 : vector<8x1xf32>
    %78 = vector.broadcast %70 : vector<8x1xf32> to vector<8x32xf32>
    %79 = arith.subf %64, %78 : vector<8x32xf32>
    %cst_54 = arith.constant 9.99999974E-6 : f32
    %80 = vector.broadcast %cst_54 : f32 to vector<8x1xf32>
    %81 = arith.addf %77, %80 : vector<8x1xf32>
    %82 = math.rsqrt %81 : vector<8x1xf32>
    %83 = vector.broadcast %82 : vector<8x1xf32> to vector<8x32xf32>
    %84 = arith.mulf %79, %83 : vector<8x32xf32>
    %85 = vector.broadcast %65 : vector<1x32xf32> to vector<8x32xf32>
    %86 = arith.mulf %84, %85 : vector<8x32xf32>
    %87 = vector.broadcast %66 : vector<1x32xf32> to vector<8x32xf32>
    %88 = arith.addf %86, %87 : vector<8x32xf32>
    %c0_55 = arith.constant 0 : index
    %c0_56 = arith.constant 0 : index
    %89 = vector.load %arg6[%c0_55, %c0_56] : memref<8x32xf32, #tpu.memory_space<vmem>>, vector<8x32xf32>
    tpu.vector_store %arg6[%c0_55, %c0_56], %88 {strides = array<i32>} : memref<8x32xf32, #tpu.memory_space<vmem>>, vector<8x32xf32>,
    return
  }
  func.func @transform_0(%arg0: i32) -> (i32, i32, i32) {
    %c0_i32 = arith.constant 0 : i32
    %c0_i32_0 = arith.constant 0 : i32
    %c0_i32_1 = arith.constant 0 : i32
    return %c0_i32, %arg0, %c0_i32_0 : i32, i32, i32
  }
  func.func @transform_1(%arg0: i32) -> (i32, i32, i32) {
    %c0_i32 = arith.constant 0 : i32
    %c0_i32_0 = arith.constant 0 : i32
    %c0_i32_1 = arith.constant 0 : i32
    %c0_i32_2 = arith.constant 0 : i32
    return %c0_i32, %c0_i32_0, %c0_i32_1 : i32, i32, i32
  }
  func.func @transform_2(%arg0: i32) -> (i32, i32) {
    %c0_i32 = arith.constant 0 : i32
    %c0_i32_0 = arith.constant 0 : i32
    %c0_i32_1 = arith.constant 0 : i32
    return %c0_i32, %c0_i32_0 : i32, i32
  }
  func.func @transform_3(%arg0: i32) -> (i32, i32) {
    %c0_i32 = arith.constant 0 : i32
    %c0_i32_0 = arith.constant 0 : i32
    %c0_i32_1 = arith.constant 0 : i32
    return %c0_i32, %c0_i32_0 : i32, i32
  }
  func.func @transform_4(%arg0: i32) -> (i32, i32) {
    %c0_i32 = arith.constant 0 : i32
    %c0_i32_0 = arith.constant 0 : i32
    %c0_i32_1 = arith.constant 0 : i32
    return %c0_i32, %c0_i32_0 : i32, i32
  }
  func.func @transform_5(%arg0: i32) -> (i32, i32) {
    %c0_i32 = arith.constant 0 : i32
    %c0_i32_0 = arith.constant 0 : i32
    return %arg0, %c0_i32 : i32, i32
  }
}

module attributes {stable_mosaic.version = 11 : i64} {
  func.func @kernel(%arg0: i32, %arg1: memref<8x32xf32, #tpu.memory_space<vmem>>, %arg2: memref<1x32xf32, #tpu.memory_space<vmem>>, %arg3: memref<1x32xf32, #tpu.memory_space<vmem>>, %arg4: memref<8x32xf32, #tpu.memory_space<vmem>>, %arg5: memref<8x32xf32, #tpu.memory_space<vmem>>) attributes {dimension_semantics = [#tpu.dimension_semantics<parallel>], iteration_bounds = array<i64: 1>, scalar_prefetch = 0 : i64, scratch_operands = 0 : i64, tpu.core_type = #tpu.core_type<tc>, window_params = [{transform_indices = @transform_0, window_bounds = array<i64: 8, 32>}, {pipeline_mode = #tpu.pipeline_mode<synchronous>, transform_indices = @transform_1, window_bounds = array<i64: 1, 32>}, {pipeline_mode = #tpu.pipeline_mode<synchronous>, transform_indices = @transform_2, window_bounds = array<i64: 1, 32>}, {transform_indices = @transform_3, window_bounds = array<i64: 8, 32>}, {transform_indices = @transform_4, window_bounds = array<i64: 8, 32>}]} {
    %c0 = arith.constant 0 : index
    %c0_0 = arith.constant 0 : index
    %0 = vector.load %arg1[%c0, %c0_0] : memref<8x32xf32, #tpu.memory_space<vmem>>, vector<8x32xf32>
    %c0_1 = arith.constant 0 : index
    %c0_2 = arith.constant 0 : index
    %1 = vector.load %arg2[%c0_1, %c0_2] : memref<1x32xf32, #tpu.memory_space<vmem>>, vector<1x32xf32>
    %c0_3 = arith.constant 0 : index
    %c0_4 = arith.constant 0 : index
    %2 = vector.load %arg3[%c0_3, %c0_4] : memref<1x32xf32, #tpu.memory_space<vmem>>, vector<1x32xf32>
    %cst = arith.constant dense<0.000000e+00> : vector<8xf32>
    %3 = vector.multi_reduction <add>, %0, %cst [1] : vector<8x32xf32> to vector<8xf32>
    %4 = vector.shape_cast %3 : vector<8xf32> to vector<8x1xf32>
    %cst_5 = arith.constant 3.200000e+01 : f32
    %5 = vector.broadcast %cst_5 : f32 to vector<8x1xf32>
    %6 = arith.divf %4, %5 : vector<8x1xf32>
    %7 = vector.broadcast %6 : vector<8x1xf32> to vector<8x32xf32>
    %8 = arith.subf %0, %7 : vector<8x32xf32>
    %9 = arith.mulf %8, %8 : vector<8x32xf32>
    %cst_6 = arith.constant dense<0.000000e+00> : vector<8xf32>
    %10 = vector.multi_reduction <add>, %9, %cst_6 [1] : vector<8x32xf32> to vector<8xf32>
    %11 = vector.shape_cast %10 : vector<8xf32> to vector<8x1xf32>
    %cst_7 = arith.constant 3.200000e+01 : f32
    %12 = vector.broadcast %cst_7 : f32 to vector<8x1xf32>
    %13 = arith.divf %11, %12 : vector<8x1xf32>
    %14 = vector.broadcast %6 : vector<8x1xf32> to vector<8x32xf32>
    %15 = arith.subf %0, %14 : vector<8x32xf32>
    %cst_8 = arith.constant 9.99999974E-6 : f32
    %16 = vector.broadcast %cst_8 : f32 to vector<8x1xf32>
    %17 = arith.addf %13, %16 : vector<8x1xf32>
    %18 = math.rsqrt %17 : vector<8x1xf32>
    %19 = vector.broadcast %18 : vector<8x1xf32> to vector<8x32xf32>
    %20 = arith.mulf %15, %19 : vector<8x32xf32>
    %21 = vector.broadcast %1 : vector<1x32xf32> to vector<8x32xf32>
    %22 = arith.mulf %20, %21 : vector<8x32xf32>
    %23 = vector.broadcast %2 : vector<1x32xf32> to vector<8x32xf32>
    %24 = arith.addf %22, %23 : vector<8x32xf32>
    %c0_9 = arith.constant 0 : index
    %c0_10 = arith.constant 0 : index
    %25 = vector.load %arg4[%c0_9, %c0_10] : memref<8x32xf32, #tpu.memory_space<vmem>>, vector<8x32xf32>
    %26 = arith.addf %24, %25 : vector<8x32xf32>
    %c0_11 = arith.constant 0 : index
    %c0_12 = arith.constant 0 : index
    %27 = vector.load %arg5[%c0_11, %c0_12] : memref<8x32xf32, #tpu.memory_space<vmem>>, vector<8x32xf32>
    tpu.vector_store %arg5[%c0_11, %c0_12], %26 {strides = array<i32>} : memref<8x32xf32, #tpu.memory_space<vmem>>, vector<8x32xf32>,
    return
  }
  func.func @transform_0(%arg0: i32) -> (i32, i32) {
    %c0_i32 = arith.constant 0 : i32
    %c0_i32_0 = arith.constant 0 : i32
    return %arg0, %c0_i32 : i32, i32
  }
  func.func @transform_1(%arg0: i32) -> (i32, i32) {
    %c0_i32 = arith.constant 0 : i32
    %c0_i32_0 = arith.constant 0 : i32
    %c0_i32_1 = arith.constant 0 : i32
    return %c0_i32, %c0_i32_0 : i32, i32
  }
  func.func @transform_2(%arg0: i32) -> (i32, i32) {
    %c0_i32 = arith.constant 0 : i32
    %c0_i32_0 = arith.constant 0 : i32
    %c0_i32_1 = arith.constant 0 : i32
    return %c0_i32, %c0_i32_0 : i32, i32
  }
  func.func @transform_3(%arg0: i32) -> (i32, i32) {
    %c0_i32 = arith.constant 0 : i32
    %c0_i32_0 = arith.constant 0 : i32
    return %arg0, %c0_i32 : i32, i32
  }
  func.func @transform_4(%arg0: i32) -> (i32, i32) {
    %c0_i32 = arith.constant 0 : i32
    %c0_i32_0 = arith.constant 0 : i32
    return %arg0, %c0_i32 : i32, i32
  }
}

module attributes {stable_mosaic.version = 11 : i64} {
  func.func @kernel(%arg0: i32, %arg1: i32, %arg2: memref<10x32xf32, #tpu.memory_space<vmem>>, %arg3: memref<1x32xf32, #tpu.memory_space<vmem>>, %arg4: memref<1x32xf32, #tpu.memory_space<vmem>>, %arg5: memref<32x96xf32, #tpu.memory_space<vmem>>, %arg6: memref<1x96xf32, #tpu.memory_space<vmem>>, %arg7: memref<10x96xf32, #tpu.memory_space<vmem>>) attributes {dimension_semantics = [#tpu.dimension_semantics<parallel>, #tpu.dimension_semantics<parallel>], iteration_bounds = array<i64: 1, 1>, scalar_prefetch = 0 : i64, scratch_operands = 0 : i64, tpu.core_type = #tpu.core_type<tc>, window_params = [{transform_indices = @transform_0, window_bounds = array<i64: 10, 32>}, {pipeline_mode = #tpu.pipeline_mode<synchronous>, transform_indices = @transform_1, window_bounds = array<i64: 1, 32>}, {pipeline_mode = #tpu.pipeline_mode<synchronous>, transform_indices = @transform_2, window_bounds = array<i64: 1, 32>}, {transform_indices = @transform_3, window_bounds = array<i64: 32, 96>}, {transform_indices = @transform_4, window_bounds = array<i64: 1, 96>}, {transform_indices = @transform_5, window_bounds = array<i64: 10, 96>}]} {
    %c0 = arith.constant 0 : index
    %c0_0 = arith.constant 0 : index
    %0 = vector.load %arg2[%c0, %c0_0] : memref<10x32xf32, #tpu.memory_space<vmem>>, vector<10x32xf32>
    %c0_1 = arith.constant 0 : index
    %c0_2 = arith.constant 0 : index
    %1 = vector.load %arg3[%c0_1, %c0_2] : memref<1x32xf32, #tpu.memory_space<vmem>>, vector<1x32xf32>
    %c0_3 = arith.constant 0 : index
    %c0_4 = arith.constant 0 : index
    %2 = vector.load %arg4[%c0_3, %c0_4] : memref<1x32xf32, #tpu.memory_space<vmem>>, vector<1x32xf32>
    %cst = arith.constant dense<0.000000e+00> : vector<10xf32>
    %3 = vector.multi_reduction <add>, %0, %cst [1] : vector<10x32xf32> to vector<10xf32>
    %4 = vector.shape_cast %3 : vector<10xf32> to vector<10x1xf32>
    %cst_5 = arith.constant 3.200000e+01 : f32
    %5 = vector.broadcast %cst_5 : f32 to vector<10x1xf32>
    %6 = arith.divf %4, %5 : vector<10x1xf32>
    %7 = vector.broadcast %6 : vector<10x1xf32> to vector<10x32xf32>
    %8 = arith.subf %0, %7 : vector<10x32xf32>
    %9 = arith.mulf %8, %8 : vector<10x32xf32>
    %cst_6 = arith.constant dense<0.000000e+00> : vector<10xf32>
    %10 = vector.multi_reduction <add>, %9, %cst_6 [1] : vector<10x32xf32> to vector<10xf32>
    %11 = vector.shape_cast %10 : vector<10xf32> to vector<10x1xf32>
    %cst_7 = arith.constant 3.200000e+01 : f32
    %12 = vector.broadcast %cst_7 : f32 to vector<10x1xf32>
    %13 = arith.divf %11, %12 : vector<10x1xf32>
    %14 = vector.broadcast %6 : vector<10x1xf32> to vector<10x32xf32>
    %15 = arith.subf %0, %14 : vector<10x32xf32>
    %cst_8 = arith.constant 9.99999974E-6 : f32
    %16 = vector.broadcast %cst_8 : f32 to vector<10x1xf32>
    %17 = arith.addf %13, %16 : vector<10x1xf32>
    %18 = math.rsqrt %17 : vector<10x1xf32>
    %19 = vector.broadcast %18 : vector<10x1xf32> to vector<10x32xf32>
    %20 = arith.mulf %15, %19 : vector<10x32xf32>
    %21 = vector.broadcast %1 : vector<1x32xf32> to vector<10x32xf32>
    %22 = arith.mulf %20, %21 : vector<10x32xf32>
    %23 = vector.broadcast %2 : vector<1x32xf32> to vector<10x32xf32>
    %24 = arith.addf %22, %23 : vector<10x32xf32>
    %c0_9 = arith.constant 0 : index
    %c0_10 = arith.constant 0 : index
    %25 = vector.load %arg5[%c0_9, %c0_10] : memref<32x96xf32, #tpu.memory_space<vmem>>, vector<32x96xf32>
    %cst_11 = arith.constant dense<0.000000e+00> : vector<10x96xf32>
    %26 = tpu.matmul %24, %25, %cst_11 {dimension_numbers = #tpu.dot_dimension_numbers<[1], [0], [0], [1], [0, 0, 1, 1], [], []>} : vector<10x32xf32>, vector<32x96xf32>, vector<10x96xf32> -> vector<10x96xf32>
    %c0_12 = arith.constant 0 : index
    %c0_13 = arith.constant 0 : index
    %27 = vector.load %arg6[%c0_12, %c0_13] : memref<1x96xf32, #tpu.memory_space<vmem>>, vector<1x96xf32>
    %28 = vector.broadcast %27 : vector<1x96xf32> to vector<10x96xf32>
    %29 = arith.addf %26, %28 : vector<10x96xf32>
    %c0_14 = arith.constant 0 : index
    %c0_15 = arith.constant 0 : index
    %30 = vector.load %arg7[%c0_14, %c0_15] : memref<10x96xf32, #tpu.memory_space<vmem>>, vector<10x96xf32>
    tpu.vector_store %arg7[%c0_14, %c0_15], %29 {strides = array<i32>} : memref<10x96xf32, #tpu.memory_space<vmem>>, vector<10x96xf32>,
    return
  }
  func.func @transform_0(%arg0: i32, %arg1: i32) -> (i32, i32) {
    %c0_i32 = arith.constant 0 : i32
    %c0_i32_0 = arith.constant 0 : i32
    return %arg0, %c0_i32 : i32, i32
  }
  func.func @transform_1(%arg0: i32, %arg1: i32) -> (i32, i32) {
    %c0_i32 = arith.constant 0 : i32
    %c0_i32_0 = arith.constant 0 : i32
    %c0_i32_1 = arith.constant 0 : i32
    return %c0_i32, %c0_i32_0 : i32, i32
  }
  func.func @transform_2(%arg0: i32, %arg1: i32) -> (i32, i32) {
    %c0_i32 = arith.constant 0 : i32
    %c0_i32_0 = arith.constant 0 : i32
    %c0_i32_1 = arith.constant 0 : i32
    return %c0_i32, %c0_i32_0 : i32, i32
  }
  func.func @transform_3(%arg0: i32, %arg1: i32) -> (i32, i32) {
    %c0_i32 = arith.constant 0 : i32
    %c0_i32_0 = arith.constant 0 : i32
    return %c0_i32, %arg1 : i32, i32
  }
  func.func @transform_4(%arg0: i32, %arg1: i32) -> (i32, i32) {
    %c0_i32 = arith.constant 0 : i32
    %c0_i32_0 = arith.constant 0 : i32
    return %c0_i32, %arg1 : i32, i32
  }
  func.func @transform_5(%arg0: i32, %arg1: i32) -> (i32, i32) {
    %c0_i32 = arith.constant 0 : i32
    return %arg0, %arg1 : i32, i32
  }
}

module attributes {stable_mosaic.version = 11 : i64} {
  func.func @_attn_kernel(%arg0: i32, %arg1: memref<1x5x8xf32, #tpu.memory_space<vmem>>, %arg2: memref<1x5x8xf32, #tpu.memory_space<vmem>>, %arg3: memref<1x5x8xf32, #tpu.memory_space<vmem>>, %arg4: memref<1x5x8xf32, #tpu.memory_space<vmem>>) attributes {dimension_semantics = [#tpu.dimension_semantics<parallel>], iteration_bounds = array<i64: 8>, scalar_prefetch = 0 : i64, scratch_operands = 0 : i64, tpu.core_type = #tpu.core_type<tc>, window_params = [{transform_indices = @transform_0, window_bounds = array<i64: 1, 5, 8>}, {transform_indices = @transform_1, window_bounds = array<i64: 1, 5, 8>}, {transform_indices = @transform_2, window_bounds = array<i64: 1, 5, 8>}, {transform_indices = @transform_3, window_bounds = array<i64: 1, 5, 8>}]} {
    %c0 = arith.constant 0 : index
    %c0_0 = arith.constant 0 : index
    %c0_1 = arith.constant 0 : index
    %0 = vector.load %arg1[%c0, %c0_0, %c0_1] : memref<1x5x8xf32, #tpu.memory_space<vmem>>, vector<1x5x8xf32>
    %1 = vector.shape_cast %0 : vector<1x5x8xf32> to vector<5x8xf32>
    %c0_2 = arith.constant 0 : index
    %c0_3 = arith.constant 0 : index
    %c0_4 = arith.constant 0 : index
    %2 = vector.load %arg2[%c0_2, %c0_3, %c0_4] : memref<1x5x8xf32, #tpu.memory_space<vmem>>, vector<1x5x8xf32>
    %3 = vector.shape_cast %2 : vector<1x5x8xf32> to vector<5x8xf32>
    %c0_5 = arith.constant 0 : index
    %c0_6 = arith.constant 0 : index
    %c0_7 = arith.constant 0 : index
    %4 = vector.load %arg3[%c0_5, %c0_6, %c0_7] : memref<1x5x8xf32, #tpu.memory_space<vmem>>, vector<1x5x8xf32>
    %5 = vector.shape_cast %4 : vector<1x5x8xf32> to vector<5x8xf32>
    %cst = arith.constant dense<0.000000e+00> : vector<5x5xf32>
    %6 = tpu.matmul %1, %3, %cst {dimension_numbers = #tpu.dot_dimension_numbers<[1], [1], [0], [0], [0, 0, 1, 0], [], []>} : vector<5x8xf32>, vector<5x8xf32>, vector<5x5xf32> -> vector<5x5xf32>
    %cst_8 = arith.constant 0.353553385 : f32
    %7 = vector.broadcast %cst_8 : f32 to vector<5x5xf32>
    %8 = arith.mulf %6, %7 : vector<5x5xf32>
    %cst_9 = arith.constant dense<0xFF800000> : vector<5xf32>
    %9 = vector.multi_reduction <maximumf>, %8, %cst_9 [1] : vector<5x5xf32> to vector<5xf32>
    %10 = vector.shape_cast %9 : vector<5xf32> to vector<5x1xf32>
    %11 = vector.broadcast %10 : vector<5x1xf32> to vector<5x5xf32>
    %12 = arith.subf %8, %11 : vector<5x5xf32>
    %13 = math.exp %12 : vector<5x5xf32>
    %cst_10 = arith.constant dense<0.000000e+00> : vector<5xf32>
    %14 = vector.multi_reduction <add>, %13, %cst_10 [1] : vector<5x5xf32> to vector<5xf32>
    %15 = vector.shape_cast %14 : vector<5xf32> to vector<5x1xf32>
    %16 = tpu.reciprocal %15 {approx = true} : vector<5x1xf32> -> vector<5x1xf32>
    %17 = vector.broadcast %16 : vector<5x1xf32> to vector<5x5xf32>
    %18 = arith.mulf %13, %17 : vector<5x5xf32>
    %cst_11 = arith.constant dense<0.000000e+00> : vector<5x8xf32>
    %19 = tpu.matmul %18, %5, %cst_11 {dimension_numbers = #tpu.dot_dimension_numbers<[1], [0], [0], [1], [0, 0, 1, 1], [], []>} : vector<5x5xf32>, vector<5x8xf32>, vector<5x8xf32> -> vector<5x8xf32>
    %c0_12 = arith.constant 0 : index
    %c0_13 = arith.constant 0 : index
    %c0_14 = arith.constant 0 : index
    %20 = vector.load %arg4[%c0_12, %c0_13, %c0_14] : memref<1x5x8xf32, #tpu.memory_space<vmem>>, vector<1x5x8xf32>
    %21 = vector.shape_cast %20 : vector<1x5x8xf32> to vector<5x8xf32>
    %22 = vector.shape_cast %19 : vector<5x8xf32> to vector<1x5x8xf32>
    tpu.vector_store %arg4[%c0_12, %c0_13, %c0_14], %22 {strides = array<i32>} : memref<1x5x8xf32, #tpu.memory_space<vmem>>, vector<1x5x8xf32>,
    return
  }
  func.func @transform_0(%arg0: i32) -> (i32, i32, i32) {
    %c0_i32 = arith.constant 0 : i32
    %c0_i32_0 = arith.constant 0 : i32
    %c0_i32_1 = arith.constant 0 : i32
    return %arg0, %c0_i32, %c0_i32_0 : i32, i32, i32
  }
  func.func @transform_1(%arg0: i32) -> (i32, i32, i32) {
    %c0_i32 = arith.constant 0 : i32
    %c0_i32_0 = arith.constant 0 : i32
    %c0_i32_1 = arith.constant 0 : i32
    return %arg0, %c0_i32, %c0_i32_0 : i32, i32, i32
  }
  func.func @transform_2(%arg0: i32) -> (i32, i32, i32) {
    %c0_i32 = arith.constant 0 : i32
    %c0_i32_0 = arith.constant 0 : i32
    %c0_i32_1 = arith.constant 0 : i32
    return %arg0, %c0_i32, %c0_i32_0 : i32, i32, i32
  }
  func.func @transform_3(%arg0: i32) -> (i32, i32, i32) {
    %c0_i32 = arith.constant 0 : i32
    %c0_i32_0 = arith.constant 0 : i32
    %c0_i32_1 = arith.constant 0 : i32
    return %arg0, %c0_i32, %c0_i32_0 : i32, i32, i32
  }
}

module attributes {stable_mosaic.version = 11 : i64} {
  func.func @kernel(%arg0: i32, %arg1: i32, %arg2: i32, %arg3: memref<10x32xf32, #tpu.memory_space<vmem>>, %arg4: memref<32x32xf32, #tpu.memory_space<vmem>>, %arg5: memref<1x32xf32, #tpu.memory_space<vmem>>, %arg6: memref<10x32xf32, #tpu.memory_space<vmem>>, %arg7: memref<10x32xf32, #tpu.memory_space<vmem>>, %arg8: memref<10x32xf32, #tpu.memory_space<vmem>>) attributes {dimension_semantics = [#tpu.dimension_semantics<parallel>, #tpu.dimension_semantics<parallel>, #tpu.dimension_semantics<arbitrary>], iteration_bounds = array<i64: 1, 1, 1>, scalar_prefetch = 0 : i64, scratch_operands = 1 : i64, tpu.core_type = #tpu.core_type<tc>, window_params = [{transform_indices = @transform_0, window_bounds = array<i64: 10, 32>}, {transform_indices = @transform_1, window_bounds = array<i64: 32, 32>}, {transform_indices = @transform_2, window_bounds = array<i64: 1, 32>}, {transform_indices = @transform_3, window_bounds = array<i64: 10, 32>}, {transform_indices = @transform_4, window_bounds = array<i64: 10, 32>}]} {
    %c0_i32 = arith.constant 0 : i32
    %0 = arith.cmpi eq, %arg2, %c0_i32 : i32
    %1 = arith.extui %0 : i1 to i32
    %c0_i32_0 = arith.constant 0 : i32
    %2 = arith.cmpi ne, %1, %c0_i32_0 : i32
    scf.if %2 {
      %cst_10 = arith.constant 0.000000e+00 : f32
      %12 = vector.broadcast %cst_10 : f32 to vector<10x32xf32>
      %c0_11 = arith.constant 0 : index
      %c0_12 = arith.constant 0 : index
      %13 = vector.load %arg8[%c0_11, %c0_12] : memref<10x32xf32, #tpu.memory_space<vmem>>, vector<10x32xf32>
      tpu.vector_store %arg8[%c0_11, %c0_12], %12 {strides = array<i32>} : memref<10x32xf32, #tpu.memory_space<vmem>>, vector<10x32xf32>,
    } else {
    }
    %c0 = arith.constant 0 : index
    %c0_1 = arith.constant 0 : index
    %3 = vector.load %arg8[%c0, %c0_1] : memref<10x32xf32, #tpu.memory_space<vmem>>, vector<10x32xf32>
    %c0_2 = arith.constant 0 : index
    %c0_3 = arith.constant 0 : index
    %4 = vector.load %arg3[%c0_2, %c0_3] : memref<10x32xf32, #tpu.memory_space<vmem>>, vector<10x32xf32>
    %c0_4 = arith.constant 0 : index
    %c0_5 = arith.constant 0 : index
    %5 = vector.load %arg4[%c0_4, %c0_5] : memref<32x32xf32, #tpu.memory_space<vmem>>, vector<32x32xf32>
    %cst = arith.constant dense<0.000000e+00> : vector<10x32xf32>
    %6 = tpu.matmul %4, %5, %cst {dimension_numbers = #tpu.dot_dimension_numbers<[1], [0], [0], [1], [0, 0, 1, 1], [], []>} : vector<10x32xf32>, vector<32x32xf32>, vector<10x32xf32> -> vector<10x32xf32>
    %7 = arith.addf %3, %6 : vector<10x32xf32>
    %c0_6 = arith.constant 0 : index
    %c0_7 = arith.constant 0 : index
    %8 = vector.load %arg8[%c0_6, %c0_7] : memref<10x32xf32, #tpu.memory_space<vmem>>, vector<10x32xf32>
    tpu.vector_store %arg8[%c0_6, %c0_7], %7 {strides = array<i32>} : memref<10x32xf32, #tpu.memory_space<vmem>>, vector<10x32xf32>,
    %c0_i32_8 = arith.constant 0 : i32
    %9 = arith.cmpi eq, %arg2, %c0_i32_8 : i32
    %10 = arith.extui %9 : i1 to i32
    %c0_i32_9 = arith.constant 0 : i32
    %11 = arith.cmpi ne, %10, %c0_i32_9 : i32
    scf.if %11 {
      %c0_10 = arith.constant 0 : index
      %c0_11 = arith.constant 0 : index
      %12 = vector.load %arg8[%c0_10, %c0_11] : memref<10x32xf32, #tpu.memory_space<vmem>>, vector<10x32xf32>
      %c0_12 = arith.constant 0 : index
      %c0_13 = arith.constant 0 : index
      %13 = vector.load %arg5[%c0_12, %c0_13] : memref<1x32xf32, #tpu.memory_space<vmem>>, vector<1x32xf32>
      %14 = vector.broadcast %13 : vector<1x32xf32> to vector<10x32xf32>
      %15 = arith.addf %12, %14 : vector<10x32xf32>
      %c0_14 = arith.constant 0 : index
      %c0_15 = arith.constant 0 : index
      %16 = vector.load %arg6[%c0_14, %c0_15] : memref<10x32xf32, #tpu.memory_space<vmem>>, vector<10x32xf32>
      %17 = arith.addf %15, %16 : vector<10x32xf32>
      %c0_16 = arith.constant 0 : index
      %c0_17 = arith.constant 0 : index
      %18 = vector.load %arg7[%c0_16, %c0_17] : memref<10x32xf32, #tpu.memory_space<vmem>>, vector<10x32xf32>
      tpu.vector_store %arg7[%c0_16, %c0_17], %17 {strides = array<i32>} : memref<10x32xf32, #tpu.memory_space<vmem>>, vector<10x32xf32>,
    } else {
    }
    return
  }
  func.func @transform_0(%arg0: i32, %arg1: i32, %arg2: i32) -> (i32, i32) {
    %c0_i32 = arith.constant 0 : i32
    return %arg0, %arg2 : i32, i32
  }
  func.func @transform_1(%arg0: i32, %arg1: i32, %arg2: i32) -> (i32, i32) {
    %c0_i32 = arith.constant 0 : i32
    return %arg2, %arg1 : i32, i32
  }
  func.func @transform_2(%arg0: i32, %arg1: i32, %arg2: i32) -> (i32, i32) {
    %c0_i32 = arith.constant 0 : i32
    %c0_i32_0 = arith.constant 0 : i32
    return %c0_i32, %arg1 : i32, i32
  }
  func.func @transform_3(%arg0: i32, %arg1: i32, %arg2: i32) -> (i32, i32) {
    %c0_i32 = arith.constant 0 : i32
    return %arg0, %arg1 : i32, i32
  }
  func.func @transform_4(%arg0: i32, %arg1: i32, %arg2: i32) -> (i32, i32) {
    %c0_i32 = arith.constant 0 : i32
    return %arg0, %arg1 : i32, i32
  }
}

module attributes {stable_mosaic.version = 11 : i64} {
  func.func @_ln_mlp_kernel(%arg0: i32, %arg1: i32, %arg2: memref<10x32xf32, #tpu.memory_space<vmem>>, %arg3: memref<1x32xf32, #tpu.memory_space<vmem>>, %arg4: memref<1x32xf32, #tpu.memory_space<vmem>>, %arg5: memref<32x128xf32, #tpu.memory_space<vmem>>, %arg6: memref<1x128xf32, #tpu.memory_space<vmem>>, %arg7: memref<128x32xf32, #tpu.memory_space<vmem>>, %arg8: memref<1x32xf32, #tpu.memory_space<vmem>>, %arg9: memref<10x32xf32, #tpu.memory_space<vmem>>, %arg10: memref<10x32xf32, #tpu.memory_space<vmem>>, %arg11: memref<10x32xf32, #tpu.memory_space<vmem>>) attributes {dimension_semantics = [#tpu.dimension_semantics<parallel>, #tpu.dimension_semantics<arbitrary>], iteration_bounds = array<i64: 1, 1>, scalar_prefetch = 0 : i64, scratch_operands = 2 : i64, tpu.core_type = #tpu.core_type<tc>, window_params = [{transform_indices = @transform_0, window_bounds = array<i64: 10, 32>}, {pipeline_mode = #tpu.pipeline_mode<synchronous>, transform_indices = @transform_1, window_bounds = array<i64: 1, 32>}, {pipeline_mode = #tpu.pipeline_mode<synchronous>, transform_indices = @transform_2, window_bounds = array<i64: 1, 32>}, {transform_indices = @transform_3, window_bounds = array<i64: 32, 128>}, {transform_indices = @transform_4, window_bounds = array<i64: 1, 128>}, {transform_indices = @transform_5, window_bounds = array<i64: 128, 32>}, {pipeline_mode = #tpu.pipeline_mode<synchronous>, transform_indices = @transform_6, window_bounds = array<i64: 1, 32>}, {transform_indices = @transform_7, window_bounds = array<i64: 10, 32>}]} {
    %c0_i32 = arith.constant 0 : i32
    %0 = arith.cmpi eq, %arg1, %c0_i32 : i32
    %1 = arith.extui %0 : i1 to i32
    %c0_i32_0 = arith.constant 0 : i32
    %2 = arith.cmpi ne, %1, %c0_i32_0 : i32
    scf.if %2 {
      %c0_18 = arith.constant 0 : index
      %c0_19 = arith.constant 0 : index
      %26 = vector.load %arg2[%c0_18, %c0_19] : memref<10x32xf32, #tpu.memory_space<vmem>>, vector<10x32xf32>
      %c0_20 = arith.constant 0 : index
      %c0_21 = arith.constant 0 : index
      %27 = vector.load %arg3[%c0_20, %c0_21] : memref<1x32xf32, #tpu.memory_space<vmem>>, vector<1x32xf32>
      %c0_22 = arith.constant 0 : index
      %c0_23 = arith.constant 0 : index
      %28 = vector.load %arg4[%c0_22, %c0_23] : memref<1x32xf32, #tpu.memory_space<vmem>>, vector<1x32xf32>
      %cst_24 = arith.constant dense<0.000000e+00> : vector<10xf32>
      %29 = vector.multi_reduction <add>, %26, %cst_24 [1] : vector<10x32xf32> to vector<10xf32>
      %30 = vector.shape_cast %29 : vector<10xf32> to vector<10x1xf32>
      %cst_25 = arith.constant 3.200000e+01 : f32
      %31 = vector.broadcast %cst_25 : f32 to vector<10x1xf32>
      %32 = arith.divf %30, %31 : vector<10x1xf32>
      %33 = vector.broadcast %32 : vector<10x1xf32> to vector<10x32xf32>
      %34 = arith.subf %26, %33 : vector<10x32xf32>
      %35 = arith.mulf %34, %34 : vector<10x32xf32>
      %cst_26 = arith.constant dense<0.000000e+00> : vector<10xf32>
      %36 = vector.multi_reduction <add>, %35, %cst_26 [1] : vector<10x32xf32> to vector<10xf32>
      %37 = vector.shape_cast %36 : vector<10xf32> to vector<10x1xf32>
      %cst_27 = arith.constant 3.200000e+01 : f32
      %38 = vector.broadcast %cst_27 : f32 to vector<10x1xf32>
      %39 = arith.divf %37, %38 : vector<10x1xf32>
      %40 = vector.broadcast %32 : vector<10x1xf32> to vector<10x32xf32>
      %41 = arith.subf %26, %40 : vector<10x32xf32>
      %cst_28 = arith.constant 9.99999974E-6 : f32
      %42 = vector.broadcast %cst_28 : f32 to vector<10x1xf32>
      %43 = arith.addf %39, %42 : vector<10x1xf32>
      %44 = math.rsqrt %43 : vector<10x1xf32>
      %45 = vector.broadcast %44 : vector<10x1xf32> to vector<10x32xf32>
      %46 = arith.mulf %41, %45 : vector<10x32xf32>
      %47 = vector.broadcast %27 : vector<1x32xf32> to vector<10x32xf32>
      %48 = arith.mulf %46, %47 : vector<10x32xf32>
      %49 = vector.broadcast %28 : vector<1x32xf32> to vector<10x32xf32>
      %50 = arith.addf %48, %49 : vector<10x32xf32>
      %c0_29 = arith.constant 0 : index
      %c0_30 = arith.constant 0 : index
      %51 = vector.load %arg10[%c0_29, %c0_30] : memref<10x32xf32, #tpu.memory_space<vmem>>, vector<10x32xf32>
      tpu.vector_store %arg10[%c0_29, %c0_30], %50 {strides = array<i32>} : memref<10x32xf32, #tpu.memory_space<vmem>>, vector<10x32xf32>,
      %cst_31 = arith.constant 0.000000e+00 : f32
      %52 = vector.broadcast %cst_31 : f32 to vector<10x32xf32>
      %c0_32 = arith.constant 0 : index
      %c0_33 = arith.constant 0 : index
      %53 = vector.load %arg11[%c0_32, %c0_33] : memref<10x32xf32, #tpu.memory_space<vmem>>, vector<10x32xf32>
      tpu.vector_store %arg11[%c0_32, %c0_33], %52 {strides = array<i32>} : memref<10x32xf32, #tpu.memory_space<vmem>>, vector<10x32xf32>,
    } else {
    }
    %c0 = arith.constant 0 : index
    %c0_1 = arith.constant 0 : index
    %3 = vector.load %arg10[%c0, %c0_1] : memref<10x32xf32, #tpu.memory_space<vmem>>, vector<10x32xf32>
    %c0_2 = arith.constant 0 : index
    %c0_3 = arith.constant 0 : index
    %4 = vector.load %arg5[%c0_2, %c0_3] : memref<32x128xf32, #tpu.memory_space<vmem>>, vector<32x128xf32>
    %cst = arith.constant dense<0.000000e+00> : vector<10x128xf32>
    %5 = tpu.matmul %3, %4, %cst {dimension_numbers = #tpu.dot_dimension_numbers<[1], [0], [0], [1], [0, 0, 1, 1], [], []>} : vector<10x32xf32>, vector<32x128xf32>, vector<10x128xf32> -> vector<10x128xf32>
    %c0_4 = arith.constant 0 : index
    %c0_5 = arith.constant 0 : index
    %6 = vector.load %arg6[%c0_4, %c0_5] : memref<1x128xf32, #tpu.memory_space<vmem>>, vector<1x128xf32>
    %7 = vector.broadcast %6 : vector<1x128xf32> to vector<10x128xf32>
    %8 = arith.addf %5, %7 : vector<10x128xf32>
    %cst_6 = arith.constant 1.702000e+00 : f32
    %9 = vector.broadcast %cst_6 : f32 to vector<10x128xf32>
    %10 = arith.mulf %9, %8 : vector<10x128xf32>
    %cst_7 = arith.constant 0.000000e+00 : f32
    %11 = vector.broadcast %cst_7 : f32 to vector<10x128xf32>
    %12 = arith.subf %11, %10 : vector<10x128xf32>
    %13 = math.exp %12 : vector<10x128xf32>
    %cst_8 = arith.constant 1.000000e+00 : f32
    %14 = vector.broadcast %cst_8 : f32 to vector<10x128xf32>
    %15 = arith.addf %14, %13 : vector<10x128xf32>
    %16 = tpu.reciprocal %15 {approx = true} : vector<10x128xf32> -> vector<10x128xf32>
    %17 = arith.mulf %8, %16 : vector<10x128xf32>
    %c0_9 = arith.constant 0 : index
    %c0_10 = arith.constant 0 : index
    %18 = vector.load %arg11[%c0_9, %c0_10] : memref<10x32xf32, #tpu.memory_space<vmem>>, vector<10x32xf32>
    %c0_11 = arith.constant 0 : index
    %c0_12 = arith.constant 0 : index
    %19 = vector.load %arg7[%c0_11, %c0_12] : memref<128x32xf32, #tpu.memory_space<vmem>>, vector<128x32xf32>
    %cst_13 = arith.constant dense<0.000000e+00> : vector<10x32xf32>
    %20 = tpu.matmul %17, %19, %cst_13 {dimension_numbers = #tpu.dot_dimension_numbers<[1], [0], [0], [1], [0, 0, 1, 1], [], []>} : vector<10x128xf32>, vector<128x32xf32>, vector<10x32xf32> -> vector<10x32xf32>
    %21 = arith.addf %18, %20 : vector<10x32xf32>
    %c0_14 = arith.constant 0 : index
    %c0_15 = arith.constant 0 : index
    %22 = vector.load %arg11[%c0_14, %c0_15] : memref<10x32xf32, #tpu.memory_space<vmem>>, vector<10x32xf32>
    tpu.vector_store %arg11[%c0_14, %c0_15], %21 {strides = array<i32>} : memref<10x32xf32, #tpu.memory_space<vmem>>, vector<10x32xf32>,
    %c0_i32_16 = arith.constant 0 : i32
    %23 = arith.cmpi eq, %arg1, %c0_i32_16 : i32
    %24 = arith.extui %23 : i1 to i32
    %c0_i32_17 = arith.constant 0 : i32
    %25 = arith.cmpi ne, %24, %c0_i32_17 : i32
    scf.if %25 {
      %c0_18 = arith.constant 0 : index
      %c0_19 = arith.constant 0 : index
      %26 = vector.load %arg11[%c0_18, %c0_19] : memref<10x32xf32, #tpu.memory_space<vmem>>, vector<10x32xf32>
      %c0_20 = arith.constant 0 : index
      %c0_21 = arith.constant 0 : index
      %27 = vector.load %arg8[%c0_20, %c0_21] : memref<1x32xf32, #tpu.memory_space<vmem>>, vector<1x32xf32>
      %28 = vector.broadcast %27 : vector<1x32xf32> to vector<10x32xf32>
      %29 = arith.addf %26, %28 : vector<10x32xf32>
      %c0_22 = arith.constant 0 : index
      %c0_23 = arith.constant 0 : index
      %30 = vector.load %arg2[%c0_22, %c0_23] : memref<10x32xf32, #tpu.memory_space<vmem>>, vector<10x32xf32>
      %31 = arith.addf %29, %30 : vector<10x32xf32>
      %c0_24 = arith.constant 0 : index
      %c0_25 = arith.constant 0 : index
      %32 = vector.load %arg9[%c0_24, %c0_25] : memref<10x32xf32, #tpu.memory_space<vmem>>, vector<10x32xf32>
      tpu.vector_store %arg9[%c0_24, %c0_25], %31 {strides = array<i32>} : memref<10x32xf32, #tpu.memory_space<vmem>>, vector<10x32xf32>,
    } else {
    }
    return
  }
  func.func @transform_0(%arg0: i32, %arg1: i32) -> (i32, i32) {
    %c0_i32 = arith.constant 0 : i32
    %c0_i32_0 = arith.constant 0 : i32
    return %arg0, %c0_i32 : i32, i32
  }
  func.func @transform_1(%arg0: i32, %arg1: i32) -> (i32, i32) {
    %c0_i32 = arith.constant 0 : i32
    %c0_i32_0 = arith.constant 0 : i32
    %c0_i32_1 = arith.constant 0 : i32
    return %c0_i32, %c0_i32_0 : i32, i32
  }
  func.func @transform_2(%arg0: i32, %arg1: i32) -> (i32, i32) {
    %c0_i32 = arith.constant 0 : i32
    %c0_i32_0 = arith.constant 0 : i32
    %c0_i32_1 = arith.constant 0 : i32
    return %c0_i32, %c0_i32_0 : i32, i32
  }
  func.func @transform_3(%arg0: i32, %arg1: i32) -> (i32, i32) {
    %c0_i32 = arith.constant 0 : i32
    %c0_i32_0 = arith.constant 0 : i32
    return %c0_i32, %arg1 : i32, i32
  }
  func.func @transform_4(%arg0: i32, %arg1: i32) -> (i32, i32) {
    %c0_i32 = arith.constant 0 : i32
    %c0_i32_0 = arith.constant 0 : i32
    return %c0_i32, %arg1 : i32, i32
  }
  func.func @transform_5(%arg0: i32, %arg1: i32) -> (i32, i32) {
    %c0_i32 = arith.constant 0 : i32
    %c0_i32_0 = arith.constant 0 : i32
    return %arg1, %c0_i32 : i32, i32
  }
  func.func @transform_6(%arg0: i32, %arg1: i32) -> (i32, i32) {
    %c0_i32 = arith.constant 0 : i32
    %c0_i32_0 = arith.constant 0 : i32
    %c0_i32_1 = arith.constant 0 : i32
    return %c0_i32, %c0_i32_0 : i32, i32
  }
  func.func @transform_7(%arg0: i32, %arg1: i32) -> (i32, i32) {
    %c0_i32 = arith.constant 0 : i32
    %c0_i32_0 = arith.constant 0 : i32
    return %arg0, %c0_i32 : i32, i32
  }
}

module attributes {stable_mosaic.version = 11 : i64} {
  func.func @kernel(%arg0: i32, %arg1: memref<2x32xf32, #tpu.memory_space<vmem>>, %arg2: memref<1x32xf32, #tpu.memory_space<vmem>>, %arg3: memref<1x32xf32, #tpu.memory_space<vmem>>, %arg4: memref<2x32xf32, #tpu.memory_space<vmem>>) attributes {dimension_semantics = [#tpu.dimension_semantics<parallel>], iteration_bounds = array<i64: 1>, scalar_prefetch = 0 : i64, scratch_operands = 0 : i64, tpu.core_type = #tpu.core_type<tc>, window_params = [{transform_indices = @transform_0, window_bounds = array<i64: 2, 32>}, {pipeline_mode = #tpu.pipeline_mode<synchronous>, transform_indices = @transform_1, window_bounds = array<i64: 1, 32>}, {pipeline_mode = #tpu.pipeline_mode<synchronous>, transform_indices = @transform_2, window_bounds = array<i64: 1, 32>}, {transform_indices = @transform_3, window_bounds = array<i64: 2, 32>}]} {
    %c0 = arith.constant 0 : index
    %c0_0 = arith.constant 0 : index
    %0 = vector.load %arg1[%c0, %c0_0] : memref<2x32xf32, #tpu.memory_space<vmem>>, vector<2x32xf32>
    %c0_1 = arith.constant 0 : index
    %c0_2 = arith.constant 0 : index
    %1 = vector.load %arg2[%c0_1, %c0_2] : memref<1x32xf32, #tpu.memory_space<vmem>>, vector<1x32xf32>
    %c0_3 = arith.constant 0 : index
    %c0_4 = arith.constant 0 : index
    %2 = vector.load %arg3[%c0_3, %c0_4] : memref<1x32xf32, #tpu.memory_space<vmem>>, vector<1x32xf32>
    %cst = arith.constant dense<0.000000e+00> : vector<2xf32>
    %3 = vector.multi_reduction <add>, %0, %cst [1] : vector<2x32xf32> to vector<2xf32>
    %4 = vector.shape_cast %3 : vector<2xf32> to vector<2x1xf32>
    %cst_5 = arith.constant 3.200000e+01 : f32
    %5 = vector.broadcast %cst_5 : f32 to vector<2x1xf32>
    %6 = arith.divf %4, %5 : vector<2x1xf32>
    %7 = vector.broadcast %6 : vector<2x1xf32> to vector<2x32xf32>
    %8 = arith.subf %0, %7 : vector<2x32xf32>
    %9 = arith.mulf %8, %8 : vector<2x32xf32>
    %cst_6 = arith.constant dense<0.000000e+00> : vector<2xf32>
    %10 = vector.multi_reduction <add>, %9, %cst_6 [1] : vector<2x32xf32> to vector<2xf32>
    %11 = vector.shape_cast %10 : vector<2xf32> to vector<2x1xf32>
    %cst_7 = arith.constant 3.200000e+01 : f32
    %12 = vector.broadcast %cst_7 : f32 to vector<2x1xf32>
    %13 = arith.divf %11, %12 : vector<2x1xf32>
    %14 = vector.broadcast %6 : vector<2x1xf32> to vector<2x32xf32>
    %15 = arith.subf %0, %14 : vector<2x32xf32>
    %cst_8 = arith.constant 9.99999974E-6 : f32
    %16 = vector.broadcast %cst_8 : f32 to vector<2x1xf32>
    %17 = arith.addf %13, %16 : vector<2x1xf32>
    %18 = math.rsqrt %17 : vector<2x1xf32>
    %19 = vector.broadcast %18 : vector<2x1xf32> to vector<2x32xf32>
    %20 = arith.mulf %15, %19 : vector<2x32xf32>
    %21 = vector.broadcast %1 : vector<1x32xf32> to vector<2x32xf32>
    %22 = arith.mulf %20, %21 : vector<2x32xf32>
    %23 = vector.broadcast %2 : vector<1x32xf32> to vector<2x32xf32>
    %24 = arith.addf %22, %23 : vector<2x32xf32>
    %c0_9 = arith.constant 0 : index
    %c0_10 = arith.constant 0 : index
    %25 = vector.load %arg4[%c0_9, %c0_10] : memref<2x32xf32, #tpu.memory_space<vmem>>, vector<2x32xf32>
    tpu.vector_store %arg4[%c0_9, %c0_10], %24 {strides = array<i32>} : memref<2x32xf32, #tpu.memory_space<vmem>>, vector<2x32xf32>,
    return
  }
  func.func @transform_0(%arg0: i32) -> (i32, i32) {
    %c0_i32 = arith.constant 0 : i32
    %c0_i32_0 = arith.constant 0 : i32
    return %arg0, %c0_i32 : i32, i32
  }
  func.func @transform_1(%arg0: i32) -> (i32, i32) {
    %c0_i32 = arith.constant 0 : i32
    %c0_i32_0 = arith.constant 0 : i32
    %c0_i32_1 = arith.constant 0 : i32
    return %c0_i32, %c0_i32_0 : i32, i32
  }
  func.func @transform_2(%arg0: i32) -> (i32, i32) {
    %c0_i32 = arith.constant 0 : i32
    %c0_i32_0 = arith.constant 0 : i32
    %c0_i32_1 = arith.constant 0 : i32
    return %c0_i32, %c0_i32_0 : i32, i32
  }
  func.func @transform_3(%arg0: i32) -> (i32, i32) {
    %c0_i32 = arith.constant 0 : i32
    %c0_i32_0 = arith.constant 0 : i32
    return %arg0, %c0_i32 : i32, i32
  }
}

module attributes {stable_mosaic.version = 11 : i64} {
  func.func @kernel(%arg0: i32, %arg1: i32, %arg2: i32, %arg3: memref<2x32xf32, #tpu.memory_space<vmem>>, %arg4: memref<32x16xf32, #tpu.memory_space<vmem>>, %arg5: memref<2x16xf32, #tpu.memory_space<vmem>>, %arg6: memref<2x16xf32, #tpu.memory_space<vmem>>) attributes {dimension_semantics = [#tpu.dimension_semantics<parallel>, #tpu.dimension_semantics<parallel>, #tpu.dimension_semantics<arbitrary>], iteration_bounds = array<i64: 1, 1, 1>, scalar_prefetch = 0 : i64, scratch_operands = 1 : i64, tpu.core_type = #tpu.core_type<tc>, window_params = [{transform_indices = @transform_0, window_bounds = array<i64: 2, 32>}, {transform_indices = @transform_1, window_bounds = array<i64: 32, 16>}, {transform_indices = @transform_2, window_bounds = array<i64: 2, 16>}]} {
    %c0_i32 = arith.constant 0 : i32
    %0 = arith.cmpi eq, %arg2, %c0_i32 : i32
    %1 = arith.extui %0 : i1 to i32
    %c0_i32_0 = arith.constant 0 : i32
    %2 = arith.cmpi ne, %1, %c0_i32_0 : i32
    scf.if %2 {
      %cst_10 = arith.constant 0.000000e+00 : f32
      %12 = vector.broadcast %cst_10 : f32 to vector<2x16xf32>
      %c0_11 = arith.constant 0 : index
      %c0_12 = arith.constant 0 : index
      %13 = vector.load %arg6[%c0_11, %c0_12] : memref<2x16xf32, #tpu.memory_space<vmem>>, vector<2x16xf32>
      tpu.vector_store %arg6[%c0_11, %c0_12], %12 {strides = array<i32>} : memref<2x16xf32, #tpu.memory_space<vmem>>, vector<2x16xf32>,
    } else {
    }
    %c0 = arith.constant 0 : index
    %c0_1 = arith.constant 0 : index
    %3 = vector.load %arg6[%c0, %c0_1] : memref<2x16xf32, #tpu.memory_space<vmem>>, vector<2x16xf32>
    %c0_2 = arith.constant 0 : index
    %c0_3 = arith.constant 0 : index
    %4 = vector.load %arg3[%c0_2, %c0_3] : memref<2x32xf32, #tpu.memory_space<vmem>>, vector<2x32xf32>
    %c0_4 = arith.constant 0 : index
    %c0_5 = arith.constant 0 : index
    %5 = vector.load %arg4[%c0_4, %c0_5] : memref<32x16xf32, #tpu.memory_space<vmem>>, vector<32x16xf32>
    %cst = arith.constant dense<0.000000e+00> : vector<2x16xf32>
    %6 = tpu.matmul %4, %5, %cst {dimension_numbers = #tpu.dot_dimension_numbers<[1], [0], [0], [1], [0, 0, 1, 1], [], []>} : vector<2x32xf32>, vector<32x16xf32>, vector<2x16xf32> -> vector<2x16xf32>
    %7 = arith.addf %3, %6 : vector<2x16xf32>
    %c0_6 = arith.constant 0 : index
    %c0_7 = arith.constant 0 : index
    %8 = vector.load %arg6[%c0_6, %c0_7] : memref<2x16xf32, #tpu.memory_space<vmem>>, vector<2x16xf32>
    tpu.vector_store %arg6[%c0_6, %c0_7], %7 {strides = array<i32>} : memref<2x16xf32, #tpu.memory_space<vmem>>, vector<2x16xf32>,
    %c0_i32_8 = arith.constant 0 : i32
    %9 = arith.cmpi eq, %arg2, %c0_i32_8 : i32
    %10 = arith.extui %9 : i1 to i32
    %c0_i32_9 = arith.constant 0 : i32
    %11 = arith.cmpi ne, %10, %c0_i32_9 : i32
    scf.if %11 {
      %c0_10 = arith.constant 0 : index
      %c0_11 = arith.constant 0 : index
      %12 = vector.load %arg6[%c0_10, %c0_11] : memref<2x16xf32, #tpu.memory_space<vmem>>, vector<2x16xf32>
      %c0_12 = arith.constant 0 : index
      %c0_13 = arith.constant 0 : index
      %13 = vector.load %arg5[%c0_12, %c0_13] : memref<2x16xf32, #tpu.memory_space<vmem>>, vector<2x16xf32>
      tpu.vector_store %arg5[%c0_12, %c0_13], %12 {strides = array<i32>} : memref<2x16xf32, #tpu.memory_space<vmem>>, vector<2x16xf32>,
    } else {
    }
    return
  }
  func.func @transform_0(%arg0: i32, %arg1: i32, %arg2: i32) -> (i32, i32) {
    %c0_i32 = arith.constant 0 : i32
    return %arg0, %arg2 : i32, i32
  }
  func.func @transform_1(%arg0: i32, %arg1: i32, %arg2: i32) -> (i32, i32) {
    %c0_i32 = arith.constant 0 : i32
    return %arg2, %arg1 : i32, i32
  }
  func.func @transform_2(%arg0: i32, %arg1: i32, %arg2: i32) -> (i32, i32) {
    %c0_i32 = arith.constant 0 : i32
    return %arg0, %arg1 : i32, i32
  }
}

</mosaic_0001>

<llo_original>
// kernel: _lambda_.27
$region0: #{_lambda_.27}
  #allocation0 [shape = 'u32[]', space=smem, size = 0x4, offset = 0x4, fixed_abs, tag = 'smem constant byte address 0x4 - core index']
  #allocation1 [shape = 'u32[144,128]{1,0:T(1,128)}', space=vmem, size = 0x12000, scoped, tag = 'internal scratch']
  #allocation2 [shape = 'f32[32,32]{1,0:T(8,128)}', space=vmem, size = 0x4000, scoped, tag = 'scratch operand']
  %s0 = inlined_call_operand.vmem [shape: f32[32,48], index: 0, kind: input, shape index: {}]
  %s1 = inlined_call_operand.vmem [shape: f32[48,32], index: 1, kind: input, shape index: {}]
  %s2 = inlined_call_operand.vmem [shape: f32[32,32], index: 2, kind: output, shape index: {}]
  %s3 = sld [smem:[#allocation0]]
  $region26: #{_lambda_.27} parent=0
    _
  %s5 = ssub.s32 1, %s3
  %s6 = scalar_select 0, %s5, %s3
  // Predicated region
  $region2: #{_lambda_.27} parent=0 // pred_check
    _
  $region3: #{_lambda_.27} parent=0 // pred_check_branch
    %8 = sbr.rel (0) target = $region5
  $region4: #{_lambda_.27} parent=0 // pred_region
    _
  $region5: #{_lambda_.27} parent=0 // pred_fallthru
    _
  // Predicated region
  $region6: #{_lambda_.27} parent=0 // pred_check
    _
  $region7: #{_lambda_.27} parent=0 // pred_check_branch
    %10 = sbr.rel (0) target = $region9
  $region8: #{_lambda_.27} parent=0 // pred_region
    _
  $region9: #{_lambda_.27} parent=0 // pred_fallthru
    _
  %p11 = scmp.eq.s32.totalorder 0, 0
  // Predicated region
  $region10: #{_lambda_.27} parent=0 // pred_check
    %p12 = pneg %p11
  $region11: #{_lambda_.27} parent=0 // pred_check_branch
    %14 = sbr.rel (%p12) target = $region13
  $region12: #{_lambda_.27} parent=0 // pred_region
    %vm15 = vcmask 261120
    %16 = vst.msk [vmem:[#allocation2] sm:$0xff] %vm15, 0.0
    %17 = vst.msk [vmem:[#allocation2 + $0x8] sm:$0xff] %vm15, 0.0
    %18 = vst.msk [vmem:[#allocation2 + $0x10] sm:$0xff] %vm15, 0.0
    %19 = vst.msk [vmem:[#allocation2 + $0x18] sm:$0xff] %vm15, 0.0
  $region13: #{_lambda_.27} parent=0 // pred_fallthru
    _
  %v20 = vld [vmem:[#allocation2] sm:$0xff]
  %v21 = vld [vmem:[#allocation2 + $0x8] sm:$0xff]
  %v22 = vld [vmem:[#allocation2 + $0x10] sm:$0xff]
  %v23 = vld [vmem:[#allocation2 + $0x18] sm:$0xff]
  %v24 = vld [vmem:[%s0] sm:$0xff]
  %v25 = vld [vmem:[%s0 + $0x8] sm:$0xff]
  %v26 = vld [vmem:[%s0 + $0x10] sm:$0xff]
  %v27 = vld [vmem:[%s0 + $0x18] sm:$0xff]
  %v28 = vld [vmem:[%s1] sm:$0xff]
  %v29 = vld [vmem:[%s1 + $0x8] sm:$0xff]
  %v30 = vld [vmem:[%s1 + $0x10] sm:$0xff]
  %v31 = vld [vmem:[%s1 + $0x18] sm:$0xff]
  %v32 = vld [vmem:[%s1 + $0x20] sm:$0xff]
  %v33 = vld [vmem:[%s1 + $0x28] sm:$0xff]
  %vm34 = vcmask 392192
  %v36 = vsel %vm34, %v24, 0
  %v39 = vsel %vm34, %v25, 0
  %v42 = vsel %vm34, %v26, 0
  %v45 = vsel %vm34, %v27, 0
  %47 = vmatprep.subr.mxu0 0.0
  %48 = vmatpush1.msra.mxu0 0.0
  %49 = vmatprep.subr.mxu0 0.0
  %50 = vmatpush1.msra.mxu0 0.0
  %51 = vmatprep.subr.mxu0 0.0
  %52 = vmatpush1.msra.mxu0 0.0
  %53 = vmatprep.subr.mxu0 0.0
  %54 = vmatpush1.msra.mxu0 0.0
  %55 = vmatprep.subr.mxu0 0.0
  %56 = vmatpush1.msra.mxu0 0.0
  %57 = vmatprep.subr.mxu0 0.0
  %58 = vmatpush1.msra.mxu0 0.0
  %59 = vmatprep.subr.mxu0 0.0
  %60 = vmatpush1.msra.mxu0 0.0
  %61 = vmatprep.subr.mxu0 0.0
  %62 = vmatpush1.msra.mxu0 0.0
  %63 = vmatprep.subr.mxu0 0.0
  %64 = vmatpush1.msra.mxu0 0.0
  %65 = vmatprep.subr.mxu0 0.0
  %66 = vmatpush1.msra.mxu0 0.0
  %67 = vmatprep.subr.mxu0 0.0
  %68 = vmatpush1.msra.mxu0 %v33
  %69 = vmatprep.subr.mxu0 0.0
  %70 = vmatpush1.msra.mxu0 %v32
  %71 = vmatprep.subr.mxu0 0.0
  %72 = vmatpush1.msra.mxu0 %v31
  %73 = vmatprep.subr.mxu0 0.0
  %74 = vmatpush1.msra.mxu0 %v30
  %75 = vmatprep.subr.mxu0 0.0
  %76 = vmatpush1.msra.mxu0 %v29
  %77 = vmatprep.subr.mxu0 0.0
  %78 = vmatpush1.msra.mxu0 %v28
  %79 = vmatprep.subr.mxu0 0.0
  %80 = vmatpush2.msra.mxu0 0.0
  %81 = vmatprep.subr.mxu0 0.0
  %82 = vmatpush2.msra.mxu0 0.0
  %83 = vmatprep.subr.mxu0 0.0
  %84 = vmatpush2.msra.mxu0 0.0
  %85 = vmatprep.subr.mxu0 0.0
  %86 = vmatpush2.msra.mxu0 0.0
  %87 = vmatprep.subr.mxu0 0.0
  %88 = vmatpush2.msra.mxu0 0.0
  %89 = vmatprep.subr.mxu0 0.0
  %90 = vmatpush2.msra.mxu0 0.0
  %91 = vmatprep.subr.mxu0 0.0
  %92 = vmatpush2.msra.mxu0 0.0
  %93 = vmatprep.subr.mxu0 0.0
  %94 = vmatpush2.msra.mxu0 0.0
  %95 = vmatprep.subr.mxu0 0.0
  %96 = vmatpush2.msra.mxu0 0.0
  %97 = vmatprep.subr.mxu0 0.0
  %98 = vmatpush2.msra.mxu0 0.0
  %99 = vmatprep.subr.mxu0 0.0
  %100 = vmatpush2.msra.mxu0 0.0
  %101 = vmatprep.subr.mxu0 0.0
  %102 = vmatpush2.msra.mxu0 0.0
  %103 = vmatprep.subr.mxu0 0.0
  %104 = vmatpush2.msra.mxu0 0.0
  %105 = vmatprep.subr.mxu0 0.0
  %106 = vmatpush2.msra.mxu0 0.0
  %107 = vmatprep.subr.mxu0 0.0
  %108 = vmatpush2.msra.mxu0 0.0
  %109 = vmatprep.subr.mxu0 0.0
  %110 = vmatpush2.msra.mxu0 0.0
  %111 = vmatprep.mubr.f32.mxu0 0.0
  %112 = vmatmul.mubr.f32.gmra.mxu0 %v36
  %v113 = vpop.f32.mrf.mxu0
  %v114 = vadd.f32 0.0, %v113
  %v115 = vpop.f32.mrf.mxu0
  %116 = vmatprep.mubr.f32.mxu0 0.0
  %117 = vmatmul.mubr.f32.gmra.mxu0 %v39
  %v118 = vpop.f32.mrf.mxu0
  %v119 = vadd.f32 0.0, %v118
  %v120 = vpop.f32.mrf.mxu0
  %121 = vmatprep.mubr.f32.mxu0 0.0
  %122 = vmatmul.mubr.f32.gmra.mxu0 %v42
  %v123 = vpop.f32.mrf.mxu0
  %v124 = vadd.f32 0.0, %v123
  %v125 = vpop.f32.mrf.mxu0
  %126 = vmatprep.mubr.f32.mxu0 0.0
  %127 = vmatmul.mubr.f32.gmra.mxu0 %v45
  %v128 = vpop.f32.mrf.mxu0
  %v129 = vadd.f32 0.0, %v128
  %v130 = vpop.f32.mrf.mxu0
  %131 = vdwg.mxu0
  %v132 = vadd.f32 %v20, %v114
  %v133 = vadd.f32 %v21, %v119
  %v134 = vadd.f32 %v22, %v124
  %v135 = vadd.f32 %v23, %v129
  %vm136 = vcmask 261120
  %137 = vst.msk [vmem:[#allocation2] sm:$0xff] %vm136, %v132
  %138 = vst.msk [vmem:[#allocation2 + $0x8] sm:$0xff] %vm136, %v133
  %139 = vst.msk [vmem:[#allocation2 + $0x10] sm:$0xff] %vm136, %v134
  %140 = vst.msk [vmem:[#allocation2 + $0x18] sm:$0xff] %vm136, %v135
  // Predicated region
  $region14: #{_lambda_.27} parent=0 // pred_check
    %p141 = pneg %p11
  $region15: #{_lambda_.27} parent=0 // pred_check_branch
    %143 = sbr.rel (%p141) target = $region17
  $region16: #{_lambda_.27} parent=0 // pred_region
    %v144 = vld [vmem:[#allocation2] sm:$0xff]
    %v145 = vld [vmem:[#allocation2 + $0x8] sm:$0xff]
    %v146 = vld [vmem:[#allocation2 + $0x10] sm:$0xff]
    %v147 = vld [vmem:[#allocation2 + $0x18] sm:$0xff]
    %148 = vst.msk [vmem:[%s2] sm:$0xff] %vm136, %v144
    %149 = vst.msk [vmem:[%s2 + $0x8] sm:$0xff] %vm136, %v145
    %150 = vst.msk [vmem:[%s2 + $0x10] sm:$0xff] %vm136, %v146
    %151 = vst.msk [vmem:[%s2 + $0x18] sm:$0xff] %vm136, %v147
  $region17: #{_lambda_.27} parent=0 // pred_fallthru
    _
  // Predicated region
  $region18: #{_lambda_.27} parent=0 // pred_check
    _
  $region19: #{_lambda_.27} parent=0 // pred_check_branch
    %153 = sbr.rel (0) target = $region21
  $region20: #{_lambda_.27} parent=0 // pred_region
    _
  $region21: #{_lambda_.27} parent=0 // pred_fallthru
    _
  // Predicated region
  $region22: #{_lambda_.27} parent=0 // pred_check
    _
  $region23: #{_lambda_.27} parent=0 // pred_check_branch
    %155 = sbr.rel (0) target = $region25
  $region24: #{_lambda_.27} parent=0 // pred_region
    _
  $region25: #{_lambda_.27} parent=0 // pred_fallthru
    _

// kernel: _lambda_.28
$region0: #{_lambda_.28}
  #allocation0 [shape = 'u32[]', space=smem, size = 0x4, offset = 0x4, fixed_abs, tag = 'smem constant byte address 0x4 - core index']
  #allocation1 [shape = 'u32[144,128]{1,0:T(1,128)}', space=vmem, size = 0x12000, scoped, tag = 'internal scratch']
  %s0 = inlined_call_operand.vmem [shape: f32[34,32], index: 0, kind: input, shape index: {}]
  %s1 = inlined_call_operand.vmem [shape: f32[1,32], index: 1, kind: input, shape index: {}]
  %s2 = inlined_call_operand.vmem [shape: f32[1,32], index: 2, kind: input, shape index: {}]
  %s3 = inlined_call_operand.vmem [shape: f32[34,32], index: 3, kind: output, shape index: {}]
  %s4 = sld [smem:[#allocation0]]
  $region22: #{_lambda_.28} parent=0
    _
  %s6 = ssub.s32 1, %s4
  %s7 = scalar_select 0, %s6, %s4
  // Predicated region
  $region2: #{_lambda_.28} parent=0 // pred_check
    _
  $region3: #{_lambda_.28} parent=0 // pred_check_branch
    %9 = sbr.rel (0) target = $region5
  $region4: #{_lambda_.28} parent=0 // pred_region
    _
  $region5: #{_lambda_.28} parent=0 // pred_fallthru
    _
  // Predicated region
  $region6: #{_lambda_.28} parent=0 // pred_check
    _
  $region7: #{_lambda_.28} parent=0 // pred_check_branch
    %11 = sbr.rel (0) target = $region9
  $region8: #{_lambda_.28} parent=0 // pred_region
    _
  $region9: #{_lambda_.28} parent=0 // pred_fallthru
    _
  // Predicated region
  $region10: #{_lambda_.28} parent=0 // pred_check
    _
  $region11: #{_lambda_.28} parent=0 // pred_check_branch
    %13 = sbr.rel (0) target = $region13
  $region12: #{_lambda_.28} parent=0 // pred_region
    _
  $region13: #{_lambda_.28} parent=0 // pred_fallthru
    _
  %v14 = vld [vmem:[%s0] sm:$0xff]
  %v15 = vld [vmem:[%s0 + $0x8] sm:$0xff]
  %v16 = vld [vmem:[%s0 + $0x10] sm:$0xff]
  %v17 = vld [vmem:[%s0 + $0x18] sm:$0xff]
  %v18 = vld [vmem:[%s0 + $0x20] sm:$0x3]
  %v19 = vld [vmem:[%s1] sm:$0x1]
  %v20 = vld [vmem:[%s2] sm:$0x1]
  %vm21 = vcmask 261120
  %v22 = vsel %vm21, %v14, 0.0
  %23 = vadd.xlane.f32.xlu0 %v22
  %v24 = vpop.xlane.xlu0 %23
  %v25 = vsel %vm21, %v15, 0.0
  %26 = vadd.xlane.f32.xlu0 %v25
  %v27 = vpop.xlane.xlu0 %26
  %v28 = vsel %vm21, %v16, 0.0
  %29 = vadd.xlane.f32.xlu0 %v28
  %v30 = vpop.xlane.xlu0 %29
  %v31 = vsel %vm21, %v17, 0.0
  %32 = vadd.xlane.f32.xlu0 %v31
  %v33 = vpop.xlane.xlu0 %32
  %vm34 = vcmask 254976
  %v35 = vsel %vm34, %v18, 0.0
  %36 = vadd.xlane.f32.xlu0 %v35
  %v37 = vpop.xlane.xlu0 %36
  %v38 = vrcp.pop 32.0
  %v39 = vmul.f32 %v24, %v38
  %v40 = vmul.f32 %v27, %v38
  %v41 = vmul.f32 %v30, %v38
  %v42 = vmul.f32 %v33, %v38
  %v43 = vmul.f32 %v37, %v38
  %v44 = vsub.f32 %v14, %v39
  %v45 = vsub.f32 %v15, %v40
  %v46 = vsub.f32 %v16, %v41
  %v47 = vsub.f32 %v17, %v42
  %v48 = vsub.f32 %v18, %v43
  %v49 = vmul.f32 %v44, %v44
  %v50 = vmul.f32 %v45, %v45
  %v51 = vmul.f32 %v46, %v46
  %v52 = vmul.f32 %v47, %v47
  %v53 = vmul.f32 %v48, %v48
  %v54 = vsel %vm21, %v49, 0.0
  %55 = vadd.xlane.f32.xlu0 %v54
  %v56 = vpop.xlane.xlu0 %55
  %v57 = vsel %vm21, %v50, 0.0
  %58 = vadd.xlane.f32.xlu0 %v57
  %v59 = vpop.xlane.xlu0 %58
  %v60 = vsel %vm21, %v51, 0.0
  %61 = vadd.xlane.f32.xlu0 %v60
  %v62 = vpop.xlane.xlu0 %61
  %v63 = vsel %vm21, %v52, 0.0
  %64 = vadd.xlane.f32.xlu0 %v63
  %v65 = vpop.xlane.xlu0 %64
  %v66 = vsel %vm34, %v53, 0.0
  %67 = vadd.xlane.f32.xlu0 %v66
  %v68 = vpop.xlane.xlu0 %67
  %v69 = vmul.f32 %v56, %v38
  %v70 = vmul.f32 %v59, %v38
  %v71 = vmul.f32 %v62, %v38
  %v72 = vmul.f32 %v65, %v38
  %v73 = vmul.f32 %v68, %v38
  %v74 = vadd.f32 %v69, 1e-05
  %v75 = vadd.f32 %v70, 1e-05
  %v76 = vadd.f32 %v71, 1e-05
  %v77 = vadd.f32 %v72, 1e-05
  %v78 = vadd.f32 %v73, 1e-05
  %v79 = vrsqrt.pop %v74
  %v80 = vrsqrt.pop %v75
  %v81 = vrsqrt.pop %v76
  %v82 = vrsqrt.pop %v77
  %v83 = vrsqrt.pop %v78
  %v84 = vmul.f32 %v44, %v79
  %v85 = vmul.f32 %v45, %v80
  %v86 = vmul.f32 %v46, %v81
  %v87 = vmul.f32 %v47, %v82
  %v88 = vmul.f32 %v48, %v83
  %v90 = vlaneseq
  %v91 = vshrl.u32 %v90, 7
  %v92 = vsub.s32 0, %v91
  %v93 = vrot.slane %v19, %v92
  %v95 = vmul.f32 %v84, %v93
  %v96 = vmul.f32 %v85, %v93
  %v97 = vmul.f32 %v86, %v93
  %v98 = vmul.f32 %v87, %v93
  %v99 = vmul.f32 %v88, %v93
  %v101 = vlaneseq
  %v102 = vshrl.u32 %v101, 7
  %v103 = vsub.s32 0, %v102
  %v104 = vrot.slane %v20, %v103
  %v106 = vadd.f32 %v95, %v104
  %v107 = vadd.f32 %v96, %v104
  %v108 = vadd.f32 %v97, %v104
  %v109 = vadd.f32 %v98, %v104
  %v110 = vadd.f32 %v99, %v104
  %111 = vst.msk [vmem:[%s3] sm:$0xff] %vm21, %v106
  %112 = vst.msk [vmem:[%s3 + $0x8] sm:$0xff] %vm21, %v107
  %113 = vst.msk [vmem:[%s3 + $0x10] sm:$0xff] %vm21, %v108
  %114 = vst.msk [vmem:[%s3 + $0x18] sm:$0xff] %vm21, %v109
  %115 = vst.msk [vmem:[%s3 + $0x20] sm:$0x3] %vm34, %v110
  // Predicated region
  $region14: #{_lambda_.28} parent=0 // pred_check
    _
  $region15: #{_lambda_.28} parent=0 // pred_check_branch
    %117 = sbr.rel (0) target = $region17
  $region16: #{_lambda_.28} parent=0 // pred_region
    _
  $region17: #{_lambda_.28} parent=0 // pred_fallthru
    _
  // Predicated region
  $region18: #{_lambda_.28} parent=0 // pred_check
    _
  $region19: #{_lambda_.28} parent=0 // pred_check_branch
    %119 = sbr.rel (0) target = $region21
  $region20: #{_lambda_.28} parent=0 // pred_region
    _
  $region21: #{_lambda_.28} parent=0 // pred_fallthru
    _

// kernel: _lambda_.29
$region0: #{_lambda_.29}
  #allocation0 [shape = 'u32[]', space=smem, size = 0x4, offset = 0x4, fixed_abs, tag = 'smem constant byte address 0x4 - core index']
  #allocation1 [shape = 'u32[144,128]{1,0:T(1,128)}', space=vmem, size = 0x12000, scoped, tag = 'internal scratch']
  %s0 = inlined_call_operand.vmem [shape: f32[34,32], index: 0, kind: input, shape index: {}]
  %s1 = inlined_call_operand.vmem [shape: f32[1,32], index: 1, kind: input, shape index: {}]
  %s2 = inlined_call_operand.vmem [shape: f32[1,32], index: 2, kind: input, shape index: {}]
  %s3 = inlined_call_operand.vmem [shape: f32[32,96], index: 3, kind: input, shape index: {}]
  %s4 = inlined_call_operand.vmem [shape: f32[1,96], index: 4, kind: input, shape index: {}]
  %s5 = inlined_call_operand.vmem [shape: f32[34,96], index: 5, kind: output, shape index: {}]
  %s6 = sld [smem:[#allocation0]]
  $region30: #{_lambda_.29} parent=0
    _
  %s8 = ssub.s32 1, %s6
  %s9 = scalar_select 0, %s8, %s6
  // Predicated region
  $region2: #{_lambda_.29} parent=0 // pred_check
    _
  $region3: #{_lambda_.29} parent=0 // pred_check_branch
    %11 = sbr.rel (0) target = $region5
  $region4: #{_lambda_.29} parent=0 // pred_region
    _
  $region5: #{_lambda_.29} parent=0 // pred_fallthru
    _
  // Predicated region
  $region6: #{_lambda_.29} parent=0 // pred_check
    _
  $region7: #{_lambda_.29} parent=0 // pred_check_branch
    %13 = sbr.rel (0) target = $region9
  $region8: #{_lambda_.29} parent=0 // pred_region
    _
  $region9: #{_lambda_.29} parent=0 // pred_fallthru
    _
  // Predicated region
  $region10: #{_lambda_.29} parent=0 // pred_check
    _
  $region11: #{_lambda_.29} parent=0 // pred_check_branch
    %15 = sbr.rel (0) target = $region13
  $region12: #{_lambda_.29} parent=0 // pred_region
    _
  $region13: #{_lambda_.29} parent=0 // pred_fallthru
    _
  // Predicated region
  $region14: #{_lambda_.29} parent=0 // pred_check
    _
  $region15: #{_lambda_.29} parent=0 // pred_check_branch
    %17 = sbr.rel (0) target = $region17
  $region16: #{_lambda_.29} parent=0 // pred_region
    _
  $region17: #{_lambda_.29} parent=0 // pred_fallthru
    _
  // Predicated region
  $region18: #{_lambda_.29} parent=0 // pred_check
    _
  $region19: #{_lambda_.29} parent=0 // pred_check_branch
    %19 = sbr.rel (0) target = $region21
  $region20: #{_lambda_.29} parent=0 // pred_region
    _
  $region21: #{_lambda_.29} parent=0 // pred_fallthru
    _
  %v20 = vld [vmem:[%s0] sm:$0xff]
  %v21 = vld [vmem:[%s0 + $0x8] sm:$0xff]
  %v22 = vld [vmem:[%s0 + $0x10] sm:$0xff]
  %v23 = vld [vmem:[%s0 + $0x18] sm:$0xff]
  %v24 = vld [vmem:[%s0 + $0x20] sm:$0x3]
  %v25 = vld [vmem:[%s1] sm:$0x1]
  %v26 = vld [vmem:[%s2] sm:$0x1]
  %vm27 = vcmask 261120
  %v28 = vsel %vm27, %v20, 0.0
  %29 = vadd.xlane.f32.xlu0 %v28
  %v30 = vpop.xlane.xlu0 %29
  %v31 = vsel %vm27, %v21, 0.0
  %32 = vadd.xlane.f32.xlu0 %v31
  %v33 = vpop.xlane.xlu0 %32
  %v34 = vsel %vm27, %v22, 0.0
  %35 = vadd.xlane.f32.xlu0 %v34
  %v36 = vpop.xlane.xlu0 %35
  %v37 = vsel %vm27, %v23, 0.0
  %38 = vadd.xlane.f32.xlu0 %v37
  %v39 = vpop.xlane.xlu0 %38
  %vm40 = vcmask 254976
  %v41 = vsel %vm40, %v24, 0.0
  %42 = vadd.xlane.f32.xlu0 %v41
  %v43 = vpop.xlane.xlu0 %42
  %v44 = vrcp.pop 32.0
  %v45 = vmul.f32 %v30, %v44
  %v46 = vmul.f32 %v33, %v44
  %v47 = vmul.f32 %v36, %v44
  %v48 = vmul.f32 %v39, %v44
  %v49 = vmul.f32 %v43, %v44
  %v50 = vsub.f32 %v20, %v45
  %v51 = vsub.f32 %v21, %v46
  %v52 = vsub.f32 %v22, %v47
  %v53 = vsub.f32 %v23, %v48
  %v54 = vsub.f32 %v24, %v49
  %v55 = vmul.f32 %v50, %v50
  %v56 = vmul.f32 %v51, %v51
  %v57 = vmul.f32 %v52, %v52
  %v58 = vmul.f32 %v53, %v53
  %v59 = vmul.f32 %v54, %v54
  %v60 = vsel %vm27, %v55, 0.0
  %61 = vadd.xlane.f32.xlu0 %v60
  %v62 = vpop.xlane.xlu0 %61
  %v63 = vsel %vm27, %v56, 0.0
  %64 = vadd.xlane.f32.xlu0 %v63
  %v65 = vpop.xlane.xlu0 %64
  %v66 = vsel %vm27, %v57, 0.0
  %67 = vadd.xlane.f32.xlu0 %v66
  %v68 = vpop.xlane.xlu0 %67
  %v69 = vsel %vm27, %v58, 0.0
  %70 = vadd.xlane.f32.xlu0 %v69
  %v71 = vpop.xlane.xlu0 %70
  %v72 = vsel %vm40, %v59, 0.0
  %73 = vadd.xlane.f32.xlu0 %v72
  %v74 = vpop.xlane.xlu0 %73
  %v75 = vmul.f32 %v62, %v44
  %v76 = vmul.f32 %v65, %v44
  %v77 = vmul.f32 %v68, %v44
  %v78 = vmul.f32 %v71, %v44
  %v79 = vmul.f32 %v74, %v44
  %v80 = vadd.f32 %v75, 1e-05
  %v81 = vadd.f32 %v76, 1e-05
  %v82 = vadd.f32 %v77, 1e-05
  %v83 = vadd.f32 %v78, 1e-05
  %v84 = vadd.f32 %v79, 1e-05
  %v85 = vrsqrt.pop %v80
  %v86 = vrsqrt.pop %v81
  %v87 = vrsqrt.pop %v82
  %v88 = vrsqrt.pop %v83
  %v89 = vrsqrt.pop %v84
  %v90 = vmul.f32 %v50, %v85
  %v91 = vmul.f32 %v51, %v86
  %v92 = vmul.f32 %v52, %v87
  %v93 = vmul.f32 %v53, %v88
  %v94 = vmul.f32 %v54, %v89
  %v96 = vlaneseq
  %v97 = vshrl.u32 %v96, 7
  %v98 = vsub.s32 0, %v97
  %v99 = vrot.slane %v25, %v98
  %v101 = vmul.f32 %v90, %v99
  %v102 = vmul.f32 %v91, %v99
  %v103 = vmul.f32 %v92, %v99
  %v104 = vmul.f32 %v93, %v99
  %v105 = vmul.f32 %v94, %v99
  %v107 = vlaneseq
  %v108 = vshrl.u32 %v107, 7
  %v109 = vsub.s32 0, %v108
  %v110 = vrot.slane %v26, %v109
  %v112 = vadd.f32 %v101, %v110
  %v113 = vadd.f32 %v102, %v110
  %v114 = vadd.f32 %v103, %v110
  %v115 = vadd.f32 %v104, %v110
  %v116 = vadd.f32 %v105, %v110
  %v117 = vld [vmem:[%s3] sm:$0xff]
  %v118 = vld [vmem:[%s3 + $0x8] sm:$0xff]
  %v119 = vld [vmem:[%s3 + $0x10] sm:$0xff]
  %v120 = vld [vmem:[%s3 + $0x18] sm:$0xff]
  %v121 = vld [vmem:[%s4] sm:$0x1]
  %v123 = vlaneseq
  %v124 = vshrl.u32 %v123, 7
  %v125 = vsub.s32 0, %v124
  %v126 = vrot.slane %v121, %v125
  %v129 = vsel %vm27, %v112, 0
  %v132 = vsel %vm27, %v113, 0
  %v135 = vsel %vm27, %v114, 0
  %v138 = vsel %vm27, %v115, 0
  %v141 = vsel %vm27, %v116, 0
  %143 = vmatprep.subr.mxu0 0.0
  %144 = vmatpush1.msra.mxu0 0.0
  %145 = vmatprep.subr.mxu0 0.0
  %146 = vmatpush1.msra.mxu0 0.0
  %147 = vmatprep.subr.mxu0 0.0
  %148 = vmatpush1.msra.mxu0 0.0
  %149 = vmatprep.subr.mxu0 0.0
  %150 = vmatpush1.msra.mxu0 0.0
  %151 = vmatprep.subr.mxu0 0.0
  %152 = vmatpush1.msra.mxu0 0.0
  %153 = vmatprep.subr.mxu0 0.0
  %154 = vmatpush1.msra.mxu0 0.0
  %155 = vmatprep.subr.mxu0 0.0
  %156 = vmatpush1.msra.mxu0 0.0
  %157 = vmatprep.subr.mxu0 0.0
  %158 = vmatpush1.msra.mxu0 0.0
  %159 = vmatprep.subr.mxu0 0.0
  %160 = vmatpush1.msra.mxu0 0.0
  %161 = vmatprep.subr.mxu0 0.0
  %162 = vmatpush1.msra.mxu0 0.0
  %163 = vmatprep.subr.mxu0 0.0
  %164 = vmatpush1.msra.mxu0 0.0
  %165 = vmatprep.subr.mxu0 0.0
  %166 = vmatpush1.msra.mxu0 0.0
  %167 = vmatprep.subr.mxu0 0.0
  %168 = vmatpush1.msra.mxu0 %v120
  %169 = vmatprep.subr.mxu0 0.0
  %170 = vmatpush1.msra.mxu0 %v119
  %171 = vmatprep.subr.mxu0 0.0
  %172 = vmatpush1.msra.mxu0 %v118
  %173 = vmatprep.subr.mxu0 0.0
  %174 = vmatpush1.msra.mxu0 %v117
  %175 = vmatprep.subr.mxu0 0.0
  %176 = vmatpush2.msra.mxu0 0.0
  %177 = vmatprep.subr.mxu0 0.0
  %178 = vmatpush2.msra.mxu0 0.0
  %179 = vmatprep.subr.mxu0 0.0
  %180 = vmatpush2.msra.mxu0 0.0
  %181 = vmatprep.subr.mxu0 0.0
  %182 = vmatpush2.msra.mxu0 0.0
  %183 = vmatprep.subr.mxu0 0.0
  %184 = vmatpush2.msra.mxu0 0.0
  %185 = vmatprep.subr.mxu0 0.0
  %186 = vmatpush2.msra.mxu0 0.0
  %187 = vmatprep.subr.mxu0 0.0
  %188 = vmatpush2.msra.mxu0 0.0
  %189 = vmatprep.subr.mxu0 0.0
  %190 = vmatpush2.msra.mxu0 0.0
  %191 = vmatprep.subr.mxu0 0.0
  %192 = vmatpush2.msra.mxu0 0.0
  %193 = vmatprep.subr.mxu0 0.0
  %194 = vmatpush2.msra.mxu0 0.0
  %195 = vmatprep.subr.mxu0 0.0
  %196 = vmatpush2.msra.mxu0 0.0
  %197 = vmatprep.subr.mxu0 0.0
  %198 = vmatpush2.msra.mxu0 0.0
  %199 = vmatprep.subr.mxu0 0.0
  %200 = vmatpush2.msra.mxu0 0.0
  %201 = vmatprep.subr.mxu0 0.0
  %202 = vmatpush2.msra.mxu0 0.0
  %203 = vmatprep.subr.mxu0 0.0
  %204 = vmatpush2.msra.mxu0 0.0
  %205 = vmatprep.subr.mxu0 0.0
  %206 = vmatpush2.msra.mxu0 0.0
  %207 = vmatprep.mubr.f32.mxu0 0.0
  %208 = vmatmul.mubr.f32.gmra.mxu0 %v129
  %v209 = vpop.f32.mrf.mxu0
  %v210 = vadd.f32 %v126, %v209
  %v211 = vpop.f32.mrf.mxu0
  %212 = vmatprep.mubr.f32.mxu0 0.0
  %213 = vmatmul.mubr.f32.gmra.mxu0 %v132
  %v214 = vpop.f32.mrf.mxu0
  %v215 = vadd.f32 %v126, %v214
  %v216 = vpop.f32.mrf.mxu0
  %217 = vmatprep.mubr.f32.mxu0 0.0
  %218 = vmatmul.mubr.f32.gmra.mxu0 %v135
  %v219 = vpop.f32.mrf.mxu0
  %v220 = vadd.f32 %v126, %v219
  %v221 = vpop.f32.mrf.mxu0
  %222 = vmatprep.mubr.f32.mxu0 0.0
  %223 = vmatmul.mubr.f32.gmra.mxu0 %v138
  %v224 = vpop.f32.mrf.mxu0
  %v225 = vadd.f32 %v126, %v224
  %v226 = vpop.f32.mrf.mxu0
  %227 = vmatprep.mubr.f32.mxu0 0.0
  %228 = vmatmul.mubr.f32.gmra.mxu0 %v141
  %v229 = vpop.f32.mrf.mxu0
  %v230 = vadd.f32 %v126, %v229
  %v231 = vpop.f32.mrf.mxu0
  %232 = vdwg.mxu0
  %vm233 = vcmask 785408
  %234 = vst.msk [vmem:[%s5] sm:$0xff] %vm233, %v210
  %235 = vst.msk [vmem:[%s5 + $0x8] sm:$0xff] %vm233, %v215
  %236 = vst.msk [vmem:[%s5 + $0x10] sm:$0xff] %vm233, %v220
  %237 = vst.msk [vmem:[%s5 + $0x18] sm:$0xff] %vm233, %v225
  %vm238 = vcmask 779264
  %239 = vst.msk [vmem:[%s5 + $0x20] sm:$0x3] %vm238, %v230
  // Predicated region
  $region22: #{_lambda_.29} parent=0 // pred_check
    _
  $region23: #{_lambda_.29} parent=0 // pred_check_branch
    %241 = sbr.rel (0) target = $region25
  $region24: #{_lambda_.29} parent=0 // pred_region
    _
  $region25: #{_lambda_.29} parent=0 // pred_fallthru
    _
  // Predicated region
  $region26: #{_lambda_.29} parent=0 // pred_check
    _
  $region27: #{_lambda_.29} parent=0 // pred_check_branch
    %243 = sbr.rel (0) target = $region29
  $region28: #{_lambda_.29} parent=0 // pred_region
    _
  $region29: #{_lambda_.29} parent=0 // pred_fallthru
    _

// kernel: _lambda_.31
$region0: #{_lambda_.31}
  #allocation0 [shape = 'u32[]', space=smem, size = 0x4, offset = 0x4, fixed_abs, tag = 'smem constant byte address 0x4 - core index']
  #allocation1 [shape = 'u32[144,128]{1,0:T(1,128)}', space=vmem, size = 0x12000, scoped, tag = 'internal scratch']
  #allocation2 [shape = 'f32[34,32]{1,0:T(8,128)}', space=vmem, size = 0x5000, scoped, tag = 'scratch operand']
  %s0 = inlined_call_operand.vmem [shape: f32[34,32], index: 0, kind: input, shape index: {}]
  %s1 = inlined_call_operand.vmem [shape: f32[32,32], index: 1, kind: input, shape index: {}]
  %s2 = inlined_call_operand.vmem [shape: f32[1,32], index: 2, kind: input, shape index: {}]
  %s3 = inlined_call_operand.vmem [shape: f32[34,32], index: 3, kind: input, shape index: {}]
  %s4 = inlined_call_operand.vmem [shape: f32[34,32], index: 4, kind: output, shape index: {}]
  %s5 = sld [smem:[#allocation0]]
  $region34: #{_lambda_.31} parent=0
    _
  %s7 = ssub.s32 1, %s5
  %s8 = scalar_select 0, %s7, %s5
  // Predicated region
  $region2: #{_lambda_.31} parent=0 // pred_check
    _
  $region3: #{_lambda_.31} parent=0 // pred_check_branch
    %10 = sbr.rel (0) target = $region5
  $region4: #{_lambda_.31} parent=0 // pred_region
    _
  $region5: #{_lambda_.31} parent=0 // pred_fallthru
    _
  // Predicated region
  $region6: #{_lambda_.31} parent=0 // pred_check
    _
  $region7: #{_lambda_.31} parent=0 // pred_check_branch
    %12 = sbr.rel (0) target = $region9
  $region8: #{_lambda_.31} parent=0 // pred_region
    _
  $region9: #{_lambda_.31} parent=0 // pred_fallthru
    _
  // Predicated region
  $region10: #{_lambda_.31} parent=0 // pred_check
    _
  $region11: #{_lambda_.31} parent=0 // pred_check_branch
    %14 = sbr.rel (0) target = $region13
  $region12: #{_lambda_.31} parent=0 // pred_region
    _
  $region13: #{_lambda_.31} parent=0 // pred_fallthru
    _
  // Predicated region
  $region14: #{_lambda_.31} parent=0 // pred_check
    _
  $region15: #{_lambda_.31} parent=0 // pred_check_branch
    %16 = sbr.rel (0) target = $region17
  $region16: #{_lambda_.31} parent=0 // pred_region
    _
  $region17: #{_lambda_.31} parent=0 // pred_fallthru
    _
  %p17 = scmp.eq.s32.totalorder 0, 0
  // Predicated region
  $region18: #{_lambda_.31} parent=0 // pred_check
    %p18 = pneg %p17
  $region19: #{_lambda_.31} parent=0 // pred_check_branch
    %20 = sbr.rel (%p18) target = $region21
  $region20: #{_lambda_.31} parent=0 // pred_region
    %vm21 = vcmask 261120
    %22 = vst.msk [vmem:[#allocation2] sm:$0xff] %vm21, 0.0
    %23 = vst.msk [vmem:[#allocation2 + $0x8] sm:$0xff] %vm21, 0.0
    %24 = vst.msk [vmem:[#allocation2 + $0x10] sm:$0xff] %vm21, 0.0
    %25 = vst.msk [vmem:[#allocation2 + $0x18] sm:$0xff] %vm21, 0.0
    %vm26 = vcmask 254976
    %27 = vst.msk [vmem:[#allocation2 + $0x20] sm:$0x3] %vm26, 0.0
  $region21: #{_lambda_.31} parent=0 // pred_fallthru
    _
  %v28 = vld [vmem:[#allocation2] sm:$0xff]
  %v29 = vld [vmem:[#allocation2 + $0x8] sm:$0xff]
  %v30 = vld [vmem:[#allocation2 + $0x10] sm:$0xff]
  %v31 = vld [vmem:[#allocation2 + $0x18] sm:$0xff]
  %v32 = vld [vmem:[#allocation2 + $0x20] sm:$0x3]
  %v33 = vld [vmem:[%s0] sm:$0xff]
  %v34 = vld [vmem:[%s0 + $0x8] sm:$0xff]
  %v35 = vld [vmem:[%s0 + $0x10] sm:$0xff]
  %v36 = vld [vmem:[%s0 + $0x18] sm:$0xff]
  %v37 = vld [vmem:[%s0 + $0x20] sm:$0x3]
  %v38 = vld [vmem:[%s1] sm:$0xff]
  %v39 = vld [vmem:[%s1 + $0x8] sm:$0xff]
  %v40 = vld [vmem:[%s1 + $0x10] sm:$0xff]
  %v41 = vld [vmem:[%s1 + $0x18] sm:$0xff]
  %vm42 = vcmask 261120
  %v44 = vsel %vm42, %v33, 0
  %v47 = vsel %vm42, %v34, 0
  %v50 = vsel %vm42, %v35, 0
  %v53 = vsel %vm42, %v36, 0
  %v56 = vsel %vm42, %v37, 0
  %58 = vmatprep.subr.mxu0 0.0
  %59 = vmatpush1.msra.mxu0 0.0
  %60 = vmatprep.subr.mxu0 0.0
  %61 = vmatpush1.msra.mxu0 0.0
  %62 = vmatprep.subr.mxu0 0.0
  %63 = vmatpush1.msra.mxu0 0.0
  %64 = vmatprep.subr.mxu0 0.0
  %65 = vmatpush1.msra.mxu0 0.0
  %66 = vmatprep.subr.mxu0 0.0
  %67 = vmatpush1.msra.mxu0 0.0
  %68 = vmatprep.subr.mxu0 0.0
  %69 = vmatpush1.msra.mxu0 0.0
  %70 = vmatprep.subr.mxu0 0.0
  %71 = vmatpush1.msra.mxu0 0.0
  %72 = vmatprep.subr.mxu0 0.0
  %73 = vmatpush1.msra.mxu0 0.0
  %74 = vmatprep.subr.mxu0 0.0
  %75 = vmatpush1.msra.mxu0 0.0
  %76 = vmatprep.subr.mxu0 0.0
  %77 = vmatpush1.msra.mxu0 0.0
  %78 = vmatprep.subr.mxu0 0.0
  %79 = vmatpush1.msra.mxu0 0.0
  %80 = vmatprep.subr.mxu0 0.0
  %81 = vmatpush1.msra.mxu0 0.0
  %82 = vmatprep.subr.mxu0 0.0
  %83 = vmatpush1.msra.mxu0 %v41
  %84 = vmatprep.subr.mxu0 0.0
  %85 = vmatpush1.msra.mxu0 %v40
  %86 = vmatprep.subr.mxu0 0.0
  %87 = vmatpush1.msra.mxu0 %v39
  %88 = vmatprep.subr.mxu0 0.0
  %89 = vmatpush1.msra.mxu0 %v38
  %90 = vmatprep.subr.mxu0 0.0
  %91 = vmatpush2.msra.mxu0 0.0
  %92 = vmatprep.subr.mxu0 0.0
  %93 = vmatpush2.msra.mxu0 0.0
  %94 = vmatprep.subr.mxu0 0.0
  %95 = vmatpush2.msra.mxu0 0.0
  %96 = vmatprep.subr.mxu0 0.0
  %97 = vmatpush2.msra.mxu0 0.0
  %98 = vmatprep.subr.mxu0 0.0
  %99 = vmatpush2.msra.mxu0 0.0
  %100 = vmatprep.subr.mxu0 0.0
  %101 = vmatpush2.msra.mxu0 0.0
  %102 = vmatprep.subr.mxu0 0.0
  %103 = vmatpush2.msra.mxu0 0.0
  %104 = vmatprep.subr.mxu0 0.0
  %105 = vmatpush2.msra.mxu0 0.0
  %106 = vmatprep.subr.mxu0 0.0
  %107 = vmatpush2.msra.mxu0 0.0
  %108 = vmatprep.subr.mxu0 0.0
  %109 = vmatpush2.msra.mxu0 0.0
  %110 = vmatprep.subr.mxu0 0.0
  %111 = vmatpush2.msra.mxu0 0.0
  %112 = vmatprep.subr.mxu0 0.0
  %113 = vmatpush2.msra.mxu0 0.0
  %114 = vmatprep.subr.mxu0 0.0
  %115 = vmatpush2.msra.mxu0 0.0
  %116 = vmatprep.subr.mxu0 0.0
  %117 = vmatpush2.msra.mxu0 0.0
  %118 = vmatprep.subr.mxu0 0.0
  %119 = vmatpush2.msra.mxu0 0.0
  %120 = vmatprep.subr.mxu0 0.0
  %121 = vmatpush2.msra.mxu0 0.0
  %122 = vmatprep.mubr.f32.mxu0 0.0
  %123 = vmatmul.mubr.f32.gmra.mxu0 %v44
  %v124 = vpop.f32.mrf.mxu0
  %v125 = vadd.f32 0.0, %v124
  %v126 = vpop.f32.mrf.mxu0
  %127 = vmatprep.mubr.f32.mxu0 0.0
  %128 = vmatmul.mubr.f32.gmra.mxu0 %v47
  %v129 = vpop.f32.mrf.mxu0
  %v130 = vadd.f32 0.0, %v129
  %v131 = vpop.f32.mrf.mxu0
  %132 = vmatprep.mubr.f32.mxu0 0.0
  %133 = vmatmul.mubr.f32.gmra.mxu0 %v50
  %v134 = vpop.f32.mrf.mxu0
  %v135 = vadd.f32 0.0, %v134
  %v136 = vpop.f32.mrf.mxu0
  %137 = vmatprep.mubr.f32.mxu0 0.0
  %138 = vmatmul.mubr.f32.gmra.mxu0 %v53
  %v139 = vpop.f32.mrf.mxu0
  %v140 = vadd.f32 0.0, %v139
  %v141 = vpop.f32.mrf.mxu0
  %142 = vmatprep.mubr.f32.mxu0 0.0
  %143 = vmatmul.mubr.f32.gmra.mxu0 %v56
  %v144 = vpop.f32.mrf.mxu0
  %v145 = vadd.f32 0.0, %v144
  %v146 = vpop.f32.mrf.mxu0
  %147 = vdwg.mxu0
  %v148 = vadd.f32 %v28, %v125
  %v149 = vadd.f32 %v29, %v130
  %v150 = vadd.f32 %v30, %v135
  %v151 = vadd.f32 %v31, %v140
  %v152 = vadd.f32 %v32, %v145
  %153 = vst.msk [vmem:[#allocation2] sm:$0xff] %vm42, %v148
  %154 = vst.msk [vmem:[#allocation2 + $0x8] sm:$0xff] %vm42, %v149
  %155 = vst.msk [vmem:[#allocation2 + $0x10] sm:$0xff] %vm42, %v150
  %156 = vst.msk [vmem:[#allocation2 + $0x18] sm:$0xff] %vm42, %v151
  %vm157 = vcmask 254976
  %158 = vst.msk [vmem:[#allocation2 + $0x20] sm:$0x3] %vm157, %v152
  // Predicated region
  $region22: #{_lambda_.31} parent=0 // pred_check
    %p159 = pneg %p17
  $region23: #{_lambda_.31} parent=0 // pred_check_branch
    %161 = sbr.rel (%p159) target = $region25
  $region24: #{_lambda_.31} parent=0 // pred_region
    %v162 = vld [vmem:[#allocation2] sm:$0xff]
    %v163 = vld [vmem:[#allocation2 + $0x8] sm:$0xff]
    %v164 = vld [vmem:[#allocation2 + $0x10] sm:$0xff]
    %v165 = vld [vmem:[#allocation2 + $0x18] sm:$0xff]
    %v166 = vld [vmem:[#allocation2 + $0x20] sm:$0x3]
    %v167 = vld [vmem:[%s2] sm:$0x1]
    %v169 = vlaneseq
    %v170 = vshrl.u32 %v169, 7
    %v171 = vsub.s32 0, %v170
    %v172 = vrot.slane %v167, %v171
    %v174 = vadd.f32 %v162, %v172
    %v175 = vadd.f32 %v163, %v172
    %v176 = vadd.f32 %v164, %v172
    %v177 = vadd.f32 %v165, %v172
    %v178 = vadd.f32 %v166, %v172
    %v179 = vld [vmem:[%s3] sm:$0xff]
    %v180 = vld [vmem:[%s3 + $0x8] sm:$0xff]
    %v181 = vld [vmem:[%s3 + $0x10] sm:$0xff]
    %v182 = vld [vmem:[%s3 + $0x18] sm:$0xff]
    %v183 = vld [vmem:[%s3 + $0x20] sm:$0x3]
    %v184 = vadd.f32 %v174, %v179
    %v185 = vadd.f32 %v175, %v180
    %v186 = vadd.f32 %v176, %v181
    %v187 = vadd.f32 %v177, %v182
    %v188 = vadd.f32 %v178, %v183
    %189 = vst.msk [vmem:[%s4] sm:$0xff] %vm42, %v184
    %190 = vst.msk [vmem:[%s4 + $0x8] sm:$0xff] %vm42, %v185
    %191 = vst.msk [vmem:[%s4 + $0x10] sm:$0xff] %vm42, %v186
    %192 = vst.msk [vmem:[%s4 + $0x18] sm:$0xff] %vm42, %v187
    %193 = vst.msk [vmem:[%s4 + $0x20] sm:$0x3] %vm157, %v188
  $region25: #{_lambda_.31} parent=0 // pred_fallthru
    _
  // Predicated region
  $region26: #{_lambda_.31} parent=0 // pred_check
    _
  $region27: #{_lambda_.31} parent=0 // pred_check_branch
    %195 = sbr.rel (0) target = $region29
  $region28: #{_lambda_.31} parent=0 // pred_region
    _
  $region29: #{_lambda_.31} parent=0 // pred_fallthru
    _
  // Predicated region
  $region30: #{_lambda_.31} parent=0 // pred_check
    _
  $region31: #{_lambda_.31} parent=0 // pred_check_branch
    %197 = sbr.rel (0) target = $region33
  $region32: #{_lambda_.31} parent=0 // pred_region
    _
  $region33: #{_lambda_.31} parent=0 // pred_fallthru
    _

// kernel: _lambda_.30
$region0: #{_lambda_.30}
  #allocation0 [shape = 'u32[]', space=smem, size = 0x4, offset = 0x4, fixed_abs, tag = 'smem constant byte address 0x4 - core index']
  #allocation1 [shape = 'u32[144,128]{1,0:T(1,128)}', space=vmem, size = 0x12000, scoped, tag = 'internal scratch']
  %s0 = inlined_call_operand.vmem [shape: f32[8,17,8], index: 0, kind: input, shape index: {}]
  %s1 = inlined_call_operand.vmem [shape: f32[8,17,8], index: 1, kind: input, shape index: {}]
  %s2 = inlined_call_operand.vmem [shape: f32[8,17,8], index: 2, kind: input, shape index: {}]
  %s3 = inlined_call_operand.vmem [shape: f32[8,17,8], index: 3, kind: output, shape index: {}]
  %s4 = sld [smem:[#allocation0]]
  $region45: #{_lambda_.30} parent=0
    _
  %s6 = ssub.s32 1, %s4
  %s7 = scalar_select 0, %s6, %s4
  loop: start=0, step=1, limit=10
  $region2: #{_lambda_.30} parent=0 // loop_pre_header
    _
  $region3: #{_lambda_.30} parent=0 // loop_header
    %s9 = sphi 0, %s13
    %p10 = scmp.ge.s32.totalorder %s9, 10
    %s19 = sphi 0, %s21
    %s22 = sphi 0, %s19
    %s23 = sphi 0, %s22
    %s39 = sphi 0, %s23
    %s45 = sphi 0, %s47
    %s48 = sphi 0, %s45
    %s49 = sphi 0, %s48
    %s65 = sphi 0, %s49
    %s71 = sphi 0, %s73
    %s74 = sphi 0, %s71
    %s75 = sphi 0, %s74
    %s91 = sphi 0, %s75
    %s97 = sphi 0, %s99
    %s100 = sphi 0, %s97
    %s101 = sphi 0, %s100
    %s117 = sphi 0, %s101
  $region4: #{_lambda_.30} parent=0 // loop_header_branch
    %12 = sbr.rel (%p10) target = $region8
  $region5: #{_lambda_.30} parent=0 // loop_body
    %s14 = ssub.s32 %s9, 1
    %s15 = ssub.s32 %s9, 2
    %s16 = sadd.s32 %s9, 1
    %s17 = ssub.s32 %s9, %s16
    %p18 = scmp.eq.s32.totalorder %s17, 0
    %s20 = sadd.s32 %s19, 1
    %s21 = scalar_select %p18, %s19, %s20
    %p24 = pneg %p18
    %p25 = scmp.eq.s32.totalorder %s9, 7
    %p26 = por %p24, %p25
    %p27 = scmp.ne.s32.totalorder %s19, %s22
    %p28 = scmp.eq.s32.totalorder %s9, 0
    %p29 = por %p27, %p28
    %p30 = scmp.ne.s32.totalorder %s19, %s22
    %p31 = scmp.eq.s32.totalorder %s14, 7
    %p32 = por %p30, %p31
    %p33 = scmp.ne.s32.totalorder %s22, %s23
    %p34 = scmp.eq.s32.totalorder %s14, 0
    %p35 = por %p33, %p34
    %p36 = scmp.ne.s32.totalorder %s22, %s23
    %p37 = scmp.eq.s32.totalorder %s15, 7
    %p38 = por %p36, %p37
    %p40 = scmp.ne.s32.totalorder %s23, %s39
    %p41 = scmp.eq.s32.totalorder %s15, 0
    %p42 = por %p40, %p41
    %s43 = ssub.s32 %s9, %s16
    %p44 = scmp.eq.s32.totalorder %s43, 0
    %s46 = sadd.s32 %s45, 1
    %s47 = scalar_select %p44, %s45, %s46
    %p50 = pneg %p44
    %p51 = scmp.eq.s32.totalorder %s9, 7
    %p52 = por %p50, %p51
    %p53 = scmp.ne.s32.totalorder %s45, %s48
    %p54 = scmp.eq.s32.totalorder %s9, 0
    %p55 = por %p53, %p54
    %p56 = scmp.ne.s32.totalorder %s45, %s48
    %p57 = scmp.eq.s32.totalorder %s14, 7
    %p58 = por %p56, %p57
    %p59 = scmp.ne.s32.totalorder %s48, %s49
    %p60 = scmp.eq.s32.totalorder %s14, 0
    %p61 = por %p59, %p60
    %p62 = scmp.ne.s32.totalorder %s48, %s49
    %p63 = scmp.eq.s32.totalorder %s15, 7
    %p64 = por %p62, %p63
    %p66 = scmp.ne.s32.totalorder %s49, %s65
    %p67 = scmp.eq.s32.totalorder %s15, 0
    %p68 = por %p66, %p67
    %s69 = ssub.s32 %s9, %s16
    %p70 = scmp.eq.s32.totalorder %s69, 0
    %s72 = sadd.s32 %s71, 1
    %s73 = scalar_select %p70, %s71, %s72
    %p76 = pneg %p70
    %p77 = scmp.eq.s32.totalorder %s9, 7
    %p78 = por %p76, %p77
    %p79 = scmp.ne.s32.totalorder %s71, %s74
    %p80 = scmp.eq.s32.totalorder %s9, 0
    %p81 = por %p79, %p80
    %p82 = scmp.ne.s32.totalorder %s71, %s74
    %p83 = scmp.eq.s32.totalorder %s14, 7
    %p84 = por %p82, %p83
    %p85 = scmp.ne.s32.totalorder %s74, %s75
    %p86 = scmp.eq.s32.totalorder %s14, 0
    %p87 = por %p85, %p86
    %p88 = scmp.ne.s32.totalorder %s74, %s75
    %p89 = scmp.eq.s32.totalorder %s15, 7
    %p90 = por %p88, %p89
    %p92 = scmp.ne.s32.totalorder %s75, %s91
    %p93 = scmp.eq.s32.totalorder %s15, 0
    %p94 = por %p92, %p93
    %s95 = ssub.s32 %s9, %s16
    %p96 = scmp.eq.s32.totalorder %s95, 0
    %s98 = sadd.s32 %s97, 1
    %s99 = scalar_select %p96, %s97, %s98
    %p102 = pneg %p96
    %p103 = scmp.eq.s32.totalorder %s9, 7
    %p104 = por %p102, %p103
    %p105 = scmp.ne.s32.totalorder %s97, %s100
    %p106 = scmp.eq.s32.totalorder %s9, 0
    %p107 = por %p105, %p106
    %p108 = scmp.ne.s32.totalorder %s97, %s100
    %p109 = scmp.eq.s32.totalorder %s14, 7
    %p110 = por %p108, %p109
    %p111 = scmp.ne.s32.totalorder %s100, %s101
    %p112 = scmp.eq.s32.totalorder %s14, 0
    %p113 = por %p111, %p112
    %p114 = scmp.ne.s32.totalorder %s100, %s101
    %p115 = scmp.eq.s32.totalorder %s15, 7
    %p116 = por %p114, %p115
    %p118 = scmp.ne.s32.totalorder %s101, %s117
    %p119 = scmp.eq.s32.totalorder %s15, 0
    %p120 = por %p118, %p119
    %p121 = scmp.le.s32.totalorder 1, %s9
    %p122 = scmp.lt.s32.totalorder %s9, 9
    %p123 = pnand %p121, %p122
    %p124 = pneg %p123
    // Predicated region
    $region9: #{_lambda_.30} parent=5 // pred_check
      _
    $region10: #{_lambda_.30} parent=5 // pred_check_branch
      %126 = sbr.rel (%p123) target = $region12
    $region11: #{_lambda_.30} parent=5 // pred_region
      %s127 = ssub.s32 %s9, 1
    $region12: #{_lambda_.30} parent=5 // pred_fallthru
      _
    %p128 = scmp.lt.s32.totalorder %s9, 8
    // Predicated region
    $region13: #{_lambda_.30} parent=5 // pred_check
      %p129 = pneg %p128
    $region14: #{_lambda_.30} parent=5 // pred_check_branch
      %131 = sbr.rel (%p129) target = $region16
    $region15: #{_lambda_.30} parent=5 // pred_region
      // Predicated region
      $region17: #{_lambda_.30} parent=15 // pred_check
        %p132 = pneg %p29
      $region18: #{_lambda_.30} parent=15 // pred_check_branch
        %134 = sbr.rel (%p132) target = $region20
      $region19: #{_lambda_.30} parent=15 // pred_region
        %p135 = scmp.lt.s32.totalorder %s9, 7
        %s136 = scalar_select %p135, %s9, 7
        %s137 = smul.addr %s136, 3
        %s138 = smul.addr %s137, 8
        %s139 = scalar_lea.vmem %s0, %s138
      $region20: #{_lambda_.30} parent=15 // pred_fallthru
        _
      // Predicated region
      $region21: #{_lambda_.30} parent=15 // pred_check
        %p140 = pneg %p55
      $region22: #{_lambda_.30} parent=15 // pred_check_branch
        %142 = sbr.rel (%p140) target = $region24
      $region23: #{_lambda_.30} parent=15 // pred_region
        %p143 = scmp.lt.s32.totalorder %s9, 7
        %s144 = scalar_select %p143, %s9, 7
        %s145 = smul.addr %s144, 3
        %s146 = smul.addr %s145, 8
        %s147 = scalar_lea.vmem %s1, %s146
      $region24: #{_lambda_.30} parent=15 // pred_fallthru
        _
      // Predicated region
      $region25: #{_lambda_.30} parent=15 // pred_check
        %p148 = pneg %p81
      $region26: #{_lambda_.30} parent=15 // pred_check_branch
        %150 = sbr.rel (%p148) target = $region28
      $region27: #{_lambda_.30} parent=15 // pred_region
        %p151 = scmp.lt.s32.totalorder %s9, 7
        %s152 = scalar_select %p151, %s9, 7
        %s153 = smul.addr %s152, 3
        %s154 = smul.addr %s153, 8
        %s155 = scalar_lea.vmem %s2, %s154
      $region28: #{_lambda_.30} parent=15 // pred_fallthru
        _
    $region16: #{_lambda_.30} parent=5 // pred_fallthru
      _
    %p156 = scmp.le.s32.totalorder 1, %s9
    %p157 = scmp.lt.s32.totalorder %s9, 9
    %p158 = pnand %p156, %p157
    %p159 = pneg %p158
    // Predicated region
    $region29: #{_lambda_.30} parent=5 // pred_check
      _
    $region30: #{_lambda_.30} parent=5 // pred_check_branch
      %161 = sbr.rel (%p158) target = $region32
    $region31: #{_lambda_.30} parent=5 // pred_region
      %s162 = ssub.s32 %s9, 1
      %p163 = scmp.lt.s32.totalorder %s14, 7
      %s164 = scalar_select %p163, %s14, 7
      %s165 = smul.addr %s164, 3
      %s166 = smul.addr %s165, 8
      %s167 = scalar_lea.vmem %s0, %s166
      %p168 = pneg %p35
      %p169 = pneg %p32
      %p170 = scmp.lt.s32.totalorder %s14, 7
      %s171 = scalar_select %p170, %s14, 7
      %s172 = smul.addr %s171, 3
      %s173 = smul.addr %s172, 8
      %s174 = scalar_lea.vmem %s1, %s173
      %p175 = pneg %p61
      %p176 = pneg %p58
      %p177 = scmp.lt.s32.totalorder %s14, 7
      %s178 = scalar_select %p177, %s14, 7
      %s179 = smul.addr %s178, 3
      %s180 = smul.addr %s179, 8
      %s181 = scalar_lea.vmem %s2, %s180
      %p182 = pneg %p87
      %p183 = pneg %p84
      %p184 = pneg %p113
      %p185 = pneg %p110
      %p186 = scmp.lt.s32.totalorder %s14, 7
      %s187 = scalar_select %p186, %s14, 7
      %s188 = smul.addr %s187, 3
      %s189 = smul.addr %s188, 8
      %s190 = scalar_lea.vmem %s3, %s189
      %p191 = scmp.lt.s32.totalorder %s14, 7
      %s192 = scalar_select %p191, %s14, 7
      %s193 = smul.addr %s192, 3
      %s194 = smul.addr %s193, 8
      %s195 = scalar_lea.vmem %s0, %s194
      %p196 = scmp.lt.s32.totalorder %s14, 7
      %s197 = scalar_select %p196, %s14, 7
      %s198 = smul.addr %s197, 3
      %s199 = smul.addr %s198, 8
      %s200 = scalar_lea.vmem %s1, %s199
      %p201 = scmp.lt.s32.totalorder %s14, 7
      %s202 = scalar_select %p201, %s14, 7
      %s203 = smul.addr %s202, 3
      %s204 = smul.addr %s203, 8
      %s205 = scalar_lea.vmem %s2, %s204
      %p206 = scmp.lt.s32.totalorder %s14, 7
      %s207 = scalar_select %p206, %s14, 7
      %s208 = smul.addr %s207, 3
      %s209 = smul.addr %s208, 8
      %s210 = scalar_lea.vmem %s3, %s209
      %v211 = vld [vmem:[%s195] sm:$0xff]
      %v212 = vld [vmem:[%s195 + $0x8] sm:$0xff]
      %v213 = vld [vmem:[%s195 + $0x10] sm:$0x1]
      %v214 = vld [vmem:[%s200] sm:$0xff]
      %v215 = vld [vmem:[%s200 + $0x8] sm:$0xff]
      %v216 = vld [vmem:[%s200 + $0x10] sm:$0x1]
      %v217 = vld [vmem:[%s205] sm:$0xff]
      %v218 = vld [vmem:[%s205 + $0x8] sm:$0xff]
      %v219 = vld [vmem:[%s205 + $0x10] sm:$0x1]
      %vm220 = vcmask 64512
      %v222 = vsel %vm220, %v211, 0
      %v225 = vsel %vm220, %v212, 0
      %v228 = vsel %vm220, %v213, 0
      %v231 = vsel %vm220, %v214, 0
      %v234 = vsel %vm220, %v215, 0
      %v237 = vsel %vm220, %v216, 0
      %239 = vmatprep.subr.mxu0 0.0
      %240 = vmatpush1.xpose.msra.mxu0 0.0
      %241 = vmatprep.subr.mxu0 0.0
      %242 = vmatpush1.xpose.msra.mxu0 0.0
      %243 = vmatprep.subr.mxu0 0.0
      %244 = vmatpush1.xpose.msra.mxu0 0.0
      %245 = vmatprep.subr.mxu0 0.0
      %246 = vmatpush1.xpose.msra.mxu0 0.0
      %247 = vmatprep.subr.mxu0 0.0
      %248 = vmatpush1.xpose.msra.mxu0 0.0
      %249 = vmatprep.subr.mxu0 0.0
      %250 = vmatpush1.xpose.msra.mxu0 0.0
      %251 = vmatprep.subr.mxu0 0.0
      %252 = vmatpush1.xpose.msra.mxu0 0.0
      %253 = vmatprep.subr.mxu0 0.0
      %254 = vmatpush1.xpose.msra.mxu0 0.0
      %255 = vmatprep.subr.mxu0 0.0
      %256 = vmatpush1.xpose.msra.mxu0 0.0
      %257 = vmatprep.subr.mxu0 0.0
      %258 = vmatpush1.xpose.msra.mxu0 0.0
      %259 = vmatprep.subr.mxu0 0.0
      %260 = vmatpush1.xpose.msra.mxu0 0.0
      %261 = vmatprep.subr.mxu0 0.0
      %262 = vmatpush1.xpose.msra.mxu0 0.0
      %263 = vmatprep.subr.mxu0 0.0
      %264 = vmatpush1.xpose.msra.mxu0 0.0
      %265 = vmatprep.subr.mxu0 0.0
      %266 = vmatpush1.xpose.msra.mxu0 %v237
      %267 = vmatprep.subr.mxu0 0.0
      %268 = vmatpush1.xpose.msra.mxu0 %v234
      %269 = vmatprep.subr.mxu0 0.0
      %270 = vmatpush1.xpose.msra.mxu0 %v231
      %271 = vmatprep.subr.mxu0 0.0
      %272 = vmatpush2.xpose.msra.mxu0 0.0
      %273 = vmatprep.subr.mxu0 0.0
      %274 = vmatpush2.xpose.msra.mxu0 0.0
      %275 = vmatprep.subr.mxu0 0.0
      %276 = vmatpush2.xpose.msra.mxu0 0.0
      %277 = vmatprep.subr.mxu0 0.0
      %278 = vmatpush2.xpose.msra.mxu0 0.0
      %279 = vmatprep.subr.mxu0 0.0
      %280 = vmatpush2.xpose.msra.mxu0 0.0
      %281 = vmatprep.subr.mxu0 0.0
      %282 = vmatpush2.xpose.msra.mxu0 0.0
      %283 = vmatprep.subr.mxu0 0.0
      %284 = vmatpush2.xpose.msra.mxu0 0.0
      %285 = vmatprep.subr.mxu0 0.0
      %286 = vmatpush2.xpose.msra.mxu0 0.0
      %287 = vmatprep.subr.mxu0 0.0
      %288 = vmatpush2.xpose.msra.mxu0 0.0
      %289 = vmatprep.subr.mxu0 0.0
      %290 = vmatpush2.xpose.msra.mxu0 0.0
      %291 = vmatprep.subr.mxu0 0.0
      %292 = vmatpush2.xpose.msra.mxu0 0.0
      %293 = vmatprep.subr.mxu0 0.0
      %294 = vmatpush2.xpose.msra.mxu0 0.0
      %295 = vmatprep.subr.mxu0 0.0
      %296 = vmatpush2.xpose.msra.mxu0 0.0
      %297 = vmatprep.subr.mxu0 0.0
      %298 = vmatpush2.xpose.msra.mxu0 0.0
      %299 = vmatprep.subr.mxu0 0.0
      %300 = vmatpush2.xpose.msra.mxu0 0.0
      %301 = vmatprep.subr.mxu0 0.0
      %302 = vmatpush2.xpose.msra.mxu0 0.0
      %303 = vmatprep.mubr.f32.mxu0 0.0
      %304 = vmatmul.mubr.f32.gmra.mxu0 %v222
      %v305 = vpop.f32.mrf.mxu0
      %v306 = vadd.f32 0.0, %v305
      %v307 = vpop.f32.mrf.mxu0
      %308 = vmatprep.mubr.f32.mxu0 0.0
      %309 = vmatmul.mubr.f32.gmra.mxu0 %v225
      %v310 = vpop.f32.mrf.mxu0
      %v311 = vadd.f32 0.0, %v310
      %v312 = vpop.f32.mrf.mxu0
      %313 = vmatprep.mubr.f32.mxu0 0.0
      %314 = vmatmul.mubr.f32.gmra.mxu0 %v228
      %v315 = vpop.f32.mrf.mxu0
      %v316 = vadd.f32 0.0, %v315
      %v317 = vpop.f32.mrf.mxu0
      %318 = vdwg.mxu0
      %v319 = vmul.f32 %v306, 0.35355338
      %v320 = vmul.f32 %v311, 0.35355338
      %v321 = vmul.f32 %v316, 0.35355338
      %vm322 = vcmask 138240
      %v323 = vsel %vm322, %v319, -inf
      %324 = vmax.xlane.f32.xlu0 %v323
      %v325 = vpop.xlane.xlu0 %324
      %v326 = vsel %vm322, %v320, -inf
      %327 = vmax.xlane.f32.xlu0 %v326
      %v328 = vpop.xlane.xlu0 %327
      %vm329 = vcmask 131072
      %v330 = vsel %vm329, %v321, -inf
      %331 = vmax.xlane.f32.xlu0 %v330
      %v332 = vpop.xlane.xlu0 %331
      %v333 = vsub.f32 %v319, %v325
      %v334 = vsub.f32 %v320, %v328
      %v335 = vsub.f32 %v321, %v332
      %v336 = vmul.f32 %v333, 1.442695
      %v337 = vpow.pop %v336
      %v338 = vmul.f32 %v334, 1.442695
      %v339 = vpow.pop %v338
      %v340 = vmul.f32 %v335, 1.442695
      %v341 = vpow.pop %v340
      %v342 = vsel %vm322, %v337, 0.0
      %343 = vadd.xlane.f32.xlu0 %v342
      %v344 = vpop.xlane.xlu0 %343
      %v345 = vsel %vm322, %v339, 0.0
      %346 = vadd.xlane.f32.xlu0 %v345
      %v347 = vpop.xlane.xlu0 %346
      %v348 = vsel %vm329, %v341, 0.0
      %349 = vadd.xlane.f32.xlu0 %v348
      %v350 = vpop.xlane.xlu0 %349
      %v351 = vrcp.pop %v344
      %v352 = vrcp.pop %v347
      %v353 = vrcp.pop %v350
      %v354 = vmul.f32 %v337, %v351
      %v355 = vmul.f32 %v339, %v352
      %v356 = vmul.f32 %v341, %v353
      %v358 = vsel %vm322, %v354, 0
      %v361 = vsel %vm322, %v355, 0
      %v364 = vsel %vm322, %v356, 0
      %vm366 = vcmask 1040384
      %v368 = vsel %vm366, %v219, 0
      %370 = vmatprep.subr.mxu0 0.0
      %371 = vmatpush1.msra.mxu0 0.0
      %372 = vmatprep.subr.mxu0 0.0
      %373 = vmatpush1.msra.mxu0 0.0
      %374 = vmatprep.subr.mxu0 0.0
      %375 = vmatpush1.msra.mxu0 0.0
      %376 = vmatprep.subr.mxu0 0.0
      %377 = vmatpush1.msra.mxu0 0.0
      %378 = vmatprep.subr.mxu0 0.0
      %379 = vmatpush1.msra.mxu0 0.0
      %380 = vmatprep.subr.mxu0 0.0
      %381 = vmatpush1.msra.mxu0 0.0
      %382 = vmatprep.subr.mxu0 0.0
      %383 = vmatpush1.msra.mxu0 0.0
      %384 = vmatprep.subr.mxu0 0.0
      %385 = vmatpush1.msra.mxu0 0.0
      %386 = vmatprep.subr.mxu0 0.0
      %387 = vmatpush1.msra.mxu0 0.0
      %388 = vmatprep.subr.mxu0 0.0
      %389 = vmatpush1.msra.mxu0 0.0
      %390 = vmatprep.subr.mxu0 0.0
      %391 = vmatpush1.msra.mxu0 0.0
      %392 = vmatprep.subr.mxu0 0.0
      %393 = vmatpush1.msra.mxu0 0.0
      %394 = vmatprep.subr.mxu0 0.0
      %395 = vmatpush1.msra.mxu0 0.0
      %396 = vmatprep.subr.mxu0 0.0
      %397 = vmatpush1.msra.mxu0 %v368
      %398 = vmatprep.subr.mxu0 0.0
      %399 = vmatpush1.msra.mxu0 %v218
      %400 = vmatprep.subr.mxu0 0.0
      %401 = vmatpush1.msra.mxu0 %v217
      %402 = vmatprep.subr.mxu0 0.0
      %403 = vmatpush2.msra.mxu0 0.0
      %404 = vmatprep.subr.mxu0 0.0
      %405 = vmatpush2.msra.mxu0 0.0
      %406 = vmatprep.subr.mxu0 0.0
      %407 = vmatpush2.msra.mxu0 0.0
      %408 = vmatprep.subr.mxu0 0.0
      %409 = vmatpush2.msra.mxu0 0.0
      %410 = vmatprep.subr.mxu0 0.0
      %411 = vmatpush2.msra.mxu0 0.0
      %412 = vmatprep.subr.mxu0 0.0
      %413 = vmatpush2.msra.mxu0 0.0
      %414 = vmatprep.subr.mxu0 0.0
      %415 = vmatpush2.msra.mxu0 0.0
      %416 = vmatprep.subr.mxu0 0.0
      %417 = vmatpush2.msra.mxu0 0.0
      %418 = vmatprep.subr.mxu0 0.0
      %419 = vmatpush2.msra.mxu0 0.0
      %420 = vmatprep.subr.mxu0 0.0
      %421 = vmatpush2.msra.mxu0 0.0
      %422 = vmatprep.subr.mxu0 0.0
      %423 = vmatpush2.msra.mxu0 0.0
      %424 = vmatprep.subr.mxu0 0.0
      %425 = vmatpush2.msra.mxu0 0.0
      %426 = vmatprep.subr.mxu0 0.0
      %427 = vmatpush2.msra.mxu0 0.0
      %428 = vmatprep.subr.mxu0 0.0
      %429 = vmatpush2.msra.mxu0 0.0
      %430 = vmatprep.subr.mxu0 0.0
      %431 = vmatpush2.msra.mxu0 0.0
      %432 = vmatprep.subr.mxu0 0.0
      %433 = vmatpush2.msra.mxu0 0.0
      %434 = vmatprep.mubr.f32.mxu0 0.0
      %435 = vmatmul.mubr.f32.gmra.mxu0 %v358
      %v436 = vpop.f32.mrf.mxu0
      %v437 = vadd.f32 0.0, %v436
      %v438 = vpop.f32.mrf.mxu0
      %439 = vmatprep.mubr.f32.mxu0 0.0
      %440 = vmatmul.mubr.f32.gmra.mxu0 %v361
      %v441 = vpop.f32.mrf.mxu0
      %v442 = vadd.f32 0.0, %v441
      %v443 = vpop.f32.mrf.mxu0
      %444 = vmatprep.mubr.f32.mxu0 0.0
      %445 = vmatmul.mubr.f32.gmra.mxu0 %v364
      %v446 = vpop.f32.mrf.mxu0
      %v447 = vadd.f32 0.0, %v446
      %v448 = vpop.f32.mrf.mxu0
      %449 = vdwg.mxu0
      %450 = vst.msk [vmem:[%s210] sm:$0xff] %vm220, %v437
      %451 = vst.msk [vmem:[%s210 + $0x8] sm:$0xff] %vm220, %v442
      %vm452 = vcmask 57344
      %453 = vst.msk [vmem:[%s210 + $0x10] sm:$0x1] %vm452, %v447
      %p454 = scmp.lt.s32.totalorder %s14, 7
      %s455 = scalar_select %p454, %s14, 7
      %s456 = smul.addr %s455, 3
      %s457 = smul.addr %s456, 8
      %s458 = scalar_lea.vmem %s3, %s457
      // Predicated region
      $region33: #{_lambda_.30} parent=31 // pred_check
        %p459 = pneg %p110
      $region34: #{_lambda_.30} parent=31 // pred_check_branch
        %461 = sbr.rel (%p459) target = $region36
      $region35: #{_lambda_.30} parent=31 // pred_region
        _
      $region36: #{_lambda_.30} parent=31 // pred_fallthru
        _
    $region32: #{_lambda_.30} parent=5 // pred_fallthru
      _
    %p462 = scmp.le.s32.totalorder 2, %s9
    // Predicated region
    $region37: #{_lambda_.30} parent=5 // pred_check
      %p463 = pneg %p462
    $region38: #{_lambda_.30} parent=5 // pred_check_branch
      %465 = sbr.rel (%p463) target = $region40
    $region39: #{_lambda_.30} parent=5 // pred_region
      %s466 = ssub.s32 %s9, 2
      // Predicated region
      $region41: #{_lambda_.30} parent=39 // pred_check
        %p467 = pneg %p116
      $region42: #{_lambda_.30} parent=39 // pred_check_branch
        %469 = sbr.rel (%p467) target = $region44
      $region43: #{_lambda_.30} parent=39 // pred_region
        %p470 = scmp.lt.s32.totalorder %s15, 7
        %s471 = scalar_select %p470, %s15, 7
        %s472 = smul.addr %s471, 3
        %s473 = smul.addr %s472, 8
        %s474 = scalar_lea.vmem %s3, %s473
      $region44: #{_lambda_.30} parent=39 // pred_fallthru
        _
    $region40: #{_lambda_.30} parent=5 // pred_fallthru
      _
  $region6: #{_lambda_.30} parent=0 // loop_footer
    %s13 = sadd.s32 1, %s9
  $region7: #{_lambda_.30} parent=0 // loop_footer_branch
    %8 = sbr.rel target = $region3
  $region8: #{_lambda_.30} parent=0 // loop_exit
    _

// kernel: _lambda_.32
$region0: #{_lambda_.32}
  #allocation0 [shape = 'u32[]', space=smem, size = 0x4, offset = 0x4, fixed_abs, tag = 'smem constant byte address 0x4 - core index']
  #allocation1 [shape = 'u32[144,128]{1,0:T(1,128)}', space=vmem, size = 0x12000, scoped, tag = 'internal scratch']
  #allocation2 [shape = 'f32[34,32]{1,0:T(8,128)}', space=vmem, size = 0x5000, scoped, tag = 'scratch operand']
  #allocation3 [shape = 'f32[34,32]{1,0:T(8,128)}', space=vmem, size = 0x5000, scoped, tag = 'scratch operand']
  %s0 = inlined_call_operand.vmem [shape: f32[34,32], index: 0, kind: input, shape index: {}]
  %s1 = inlined_call_operand.vmem [shape: f32[1,32], index: 1, kind: input, shape index: {}]
  %s2 = inlined_call_operand.vmem [shape: f32[1,32], index: 2, kind: input, shape index: {}]
  %s3 = inlined_call_operand.vmem [shape: f32[32,128], index: 3, kind: input, shape index: {}]
  %s4 = inlined_call_operand.vmem [shape: f32[1,128], index: 4, kind: input, shape index: {}]
  %s5 = inlined_call_operand.vmem [shape: f32[128,32], index: 5, kind: input, shape index: {}]
  %s6 = inlined_call_operand.vmem [shape: f32[1,32], index: 6, kind: input, shape index: {}]
  %s7 = inlined_call_operand.vmem [shape: f32[34,32], index: 7, kind: output, shape index: {}]
  %s8 = sld [smem:[#allocation0]]
  $region46: #{_lambda_.32} parent=0
    _
  %s10 = ssub.s32 1, %s8
  %s11 = scalar_select 0, %s10, %s8
  // Predicated region
  $region2: #{_lambda_.32} parent=0 // pred_check
    _
  $region3: #{_lambda_.32} parent=0 // pred_check_branch
    %13 = sbr.rel (0) target = $region5
  $region4: #{_lambda_.32} parent=0 // pred_region
    _
  $region5: #{_lambda_.32} parent=0 // pred_fallthru
    _
  // Predicated region
  $region6: #{_lambda_.32} parent=0 // pred_check
    _
  $region7: #{_lambda_.32} parent=0 // pred_check_branch
    %15 = sbr.rel (0) target = $region9
  $region8: #{_lambda_.32} parent=0 // pred_region
    _
  $region9: #{_lambda_.32} parent=0 // pred_fallthru
    _
  // Predicated region
  $region10: #{_lambda_.32} parent=0 // pred_check
    _
  $region11: #{_lambda_.32} parent=0 // pred_check_branch
    %17 = sbr.rel (0) target = $region13
  $region12: #{_lambda_.32} parent=0 // pred_region
    _
  $region13: #{_lambda_.32} parent=0 // pred_fallthru
    _
  // Predicated region
  $region14: #{_lambda_.32} parent=0 // pred_check
    _
  $region15: #{_lambda_.32} parent=0 // pred_check_branch
    %19 = sbr.rel (0) target = $region17
  $region16: #{_lambda_.32} parent=0 // pred_region
    _
  $region17: #{_lambda_.32} parent=0 // pred_fallthru
    _
  // Predicated region
  $region18: #{_lambda_.32} parent=0 // pred_check
    _
  $region19: #{_lambda_.32} parent=0 // pred_check_branch
    %21 = sbr.rel (0) target = $region21
  $region20: #{_lambda_.32} parent=0 // pred_region
    _
  $region21: #{_lambda_.32} parent=0 // pred_fallthru
    _
  // Predicated region
  $region22: #{_lambda_.32} parent=0 // pred_check
    _
  $region23: #{_lambda_.32} parent=0 // pred_check_branch
    %23 = sbr.rel (0) target = $region25
  $region24: #{_lambda_.32} parent=0 // pred_region
    _
  $region25: #{_lambda_.32} parent=0 // pred_fallthru
    _
  // Predicated region
  $region26: #{_lambda_.32} parent=0 // pred_check
    _
  $region27: #{_lambda_.32} parent=0 // pred_check_branch
    %25 = sbr.rel (0) target = $region29
  $region28: #{_lambda_.32} parent=0 // pred_region
    _
  $region29: #{_lambda_.32} parent=0 // pred_fallthru
    _
  %p26 = scmp.eq.s32.totalorder 0, 0
  // Predicated region
  $region30: #{_lambda_.32} parent=0 // pred_check
    %p27 = pneg %p26
  $region31: #{_lambda_.32} parent=0 // pred_check_branch
    %29 = sbr.rel (%p27) target = $region33
  $region32: #{_lambda_.32} parent=0 // pred_region
    %v30 = vld [vmem:[%s0] sm:$0xff]
    %v31 = vld [vmem:[%s0 + $0x8] sm:$0xff]
    %v32 = vld [vmem:[%s0 + $0x10] sm:$0xff]
    %v33 = vld [vmem:[%s0 + $0x18] sm:$0xff]
    %v34 = vld [vmem:[%s0 + $0x20] sm:$0x3]
    %v35 = vld [vmem:[%s1] sm:$0x1]
    %v36 = vld [vmem:[%s2] sm:$0x1]
    %vm37 = vcmask 261120
    %v38 = vsel %vm37, %v30, 0.0
    %39 = vadd.xlane.f32.xlu0 %v38
    %v40 = vpop.xlane.xlu0 %39
    %v41 = vsel %vm37, %v31, 0.0
    %42 = vadd.xlane.f32.xlu0 %v41
    %v43 = vpop.xlane.xlu0 %42
    %v44 = vsel %vm37, %v32, 0.0
    %45 = vadd.xlane.f32.xlu0 %v44
    %v46 = vpop.xlane.xlu0 %45
    %v47 = vsel %vm37, %v33, 0.0
    %48 = vadd.xlane.f32.xlu0 %v47
    %v49 = vpop.xlane.xlu0 %48
    %vm50 = vcmask 254976
    %v51 = vsel %vm50, %v34, 0.0
    %52 = vadd.xlane.f32.xlu0 %v51
    %v53 = vpop.xlane.xlu0 %52
    %v54 = vrcp.pop 32.0
    %v55 = vmul.f32 %v40, %v54
    %v56 = vmul.f32 %v43, %v54
    %v57 = vmul.f32 %v46, %v54
    %v58 = vmul.f32 %v49, %v54
    %v59 = vmul.f32 %v53, %v54
    %v60 = vsub.f32 %v30, %v55
    %v61 = vsub.f32 %v31, %v56
    %v62 = vsub.f32 %v32, %v57
    %v63 = vsub.f32 %v33, %v58
    %v64 = vsub.f32 %v34, %v59
    %v65 = vmul.f32 %v60, %v60
    %v66 = vmul.f32 %v61, %v61
    %v67 = vmul.f32 %v62, %v62
    %v68 = vmul.f32 %v63, %v63
    %v69 = vmul.f32 %v64, %v64
    %v70 = vsel %vm37, %v65, 0.0
    %71 = vadd.xlane.f32.xlu0 %v70
    %v72 = vpop.xlane.xlu0 %71
    %v73 = vsel %vm37, %v66, 0.0
    %74 = vadd.xlane.f32.xlu0 %v73
    %v75 = vpop.xlane.xlu0 %74
    %v76 = vsel %vm37, %v67, 0.0
    %77 = vadd.xlane.f32.xlu0 %v76
    %v78 = vpop.xlane.xlu0 %77
    %v79 = vsel %vm37, %v68, 0.0
    %80 = vadd.xlane.f32.xlu0 %v79
    %v81 = vpop.xlane.xlu0 %80
    %v82 = vsel %vm50, %v69, 0.0
    %83 = vadd.xlane.f32.xlu0 %v82
    %v84 = vpop.xlane.xlu0 %83
    %v85 = vmul.f32 %v72, %v54
    %v86 = vmul.f32 %v75, %v54
    %v87 = vmul.f32 %v78, %v54
    %v88 = vmul.f32 %v81, %v54
    %v89 = vmul.f32 %v84, %v54
    %v90 = vadd.f32 %v85, 1e-05
    %v91 = vadd.f32 %v86, 1e-05
    %v92 = vadd.f32 %v87, 1e-05
    %v93 = vadd.f32 %v88, 1e-05
    %v94 = vadd.f32 %v89, 1e-05
    %v95 = vrsqrt.pop %v90
    %v96 = vrsqrt.pop %v91
    %v97 = vrsqrt.pop %v92
    %v98 = vrsqrt.pop %v93
    %v99 = vrsqrt.pop %v94
    %v100 = vmul.f32 %v60, %v95
    %v101 = vmul.f32 %v61, %v96
    %v102 = vmul.f32 %v62, %v97
    %v103 = vmul.f32 %v63, %v98
    %v104 = vmul.f32 %v64, %v99
    %v106 = vlaneseq
    %v107 = vshrl.u32 %v106, 7
    %v108 = vsub.s32 0, %v107
    %v109 = vrot.slane %v35, %v108
    %v111 = vmul.f32 %v100, %v109
    %v112 = vmul.f32 %v101, %v109
    %v113 = vmul.f32 %v102, %v109
    %v114 = vmul.f32 %v103, %v109
    %v115 = vmul.f32 %v104, %v109
    %v117 = vlaneseq
    %v118 = vshrl.u32 %v117, 7
    %v119 = vsub.s32 0, %v118
    %v120 = vrot.slane %v36, %v119
    %v122 = vadd.f32 %v111, %v120
    %v123 = vadd.f32 %v112, %v120
    %v124 = vadd.f32 %v113, %v120
    %v125 = vadd.f32 %v114, %v120
    %v126 = vadd.f32 %v115, %v120
    %127 = vst.msk [vmem:[#allocation2] sm:$0xff] %vm37, %v122
    %128 = vst.msk [vmem:[#allocation2 + $0x8] sm:$0xff] %vm37, %v123
    %129 = vst.msk [vmem:[#allocation2 + $0x10] sm:$0xff] %vm37, %v124
    %130 = vst.msk [vmem:[#allocation2 + $0x18] sm:$0xff] %vm37, %v125
    %131 = vst.msk [vmem:[#allocation2 + $0x20] sm:$0x3] %vm50, %v126
    %132 = vst.msk [vmem:[#allocation3] sm:$0xff] %vm37, 0.0
    %133 = vst.msk [vmem:[#allocation3 + $0x8] sm:$0xff] %vm37, 0.0
    %134 = vst.msk [vmem:[#allocation3 + $0x10] sm:$0xff] %vm37, 0.0
    %135 = vst.msk [vmem:[#allocation3 + $0x18] sm:$0xff] %vm37, 0.0
    %136 = vst.msk [vmem:[#allocation3 + $0x20] sm:$0x3] %vm50, 0.0
  $region33: #{_lambda_.32} parent=0 // pred_fallthru
    _
  %v137 = vld [vmem:[#allocation2] sm:$0xff]
  %v138 = vld [vmem:[#allocation2 + $0x8] sm:$0xff]
  %v139 = vld [vmem:[#allocation2 + $0x10] sm:$0xff]
  %v140 = vld [vmem:[#allocation2 + $0x18] sm:$0xff]
  %v141 = vld [vmem:[#allocation2 + $0x20] sm:$0x3]
  %v142 = vld [vmem:[%s3] sm:$0xff]
  %v143 = vld [vmem:[%s3 + $0x8] sm:$0xff]
  %v144 = vld [vmem:[%s3 + $0x10] sm:$0xff]
  %v145 = vld [vmem:[%s3 + $0x18] sm:$0xff]
  %v146 = vld [vmem:[%s4] sm:$0x1]
  %v148 = vlaneseq
  %v149 = vshrl.u32 %v148, 7
  %v150 = vsub.s32 0, %v149
  %v151 = vrot.slane %v146, %v150
  %vm153 = vcmask 261120
  %v155 = vsel %vm153, %v137, 0
  %v158 = vsel %vm153, %v138, 0
  %v161 = vsel %vm153, %v139, 0
  %v164 = vsel %vm153, %v140, 0
  %v167 = vsel %vm153, %v141, 0
  %169 = vmatprep.subr.mxu0 0.0
  %170 = vmatpush1.msra.mxu0 0.0
  %171 = vmatprep.subr.mxu0 0.0
  %172 = vmatpush1.msra.mxu0 0.0
  %173 = vmatprep.subr.mxu0 0.0
  %174 = vmatpush1.msra.mxu0 0.0
  %175 = vmatprep.subr.mxu0 0.0
  %176 = vmatpush1.msra.mxu0 0.0
  %177 = vmatprep.subr.mxu0 0.0
  %178 = vmatpush1.msra.mxu0 0.0
  %179 = vmatprep.subr.mxu0 0.0
  %180 = vmatpush1.msra.mxu0 0.0
  %181 = vmatprep.subr.mxu0 0.0
  %182 = vmatpush1.msra.mxu0 0.0
  %183 = vmatprep.subr.mxu0 0.0
  %184 = vmatpush1.msra.mxu0 0.0
  %185 = vmatprep.subr.mxu0 0.0
  %186 = vmatpush1.msra.mxu0 0.0
  %187 = vmatprep.subr.mxu0 0.0
  %188 = vmatpush1.msra.mxu0 0.0
  %189 = vmatprep.subr.mxu0 0.0
  %190 = vmatpush1.msra.mxu0 0.0
  %191 = vmatprep.subr.mxu0 0.0
  %192 = vmatpush1.msra.mxu0 0.0
  %193 = vmatprep.subr.mxu0 0.0
  %194 = vmatpush1.msra.mxu0 %v145
  %195 = vmatprep.subr.mxu0 0.0
  %196 = vmatpush1.msra.mxu0 %v144
  %197 = vmatprep.subr.mxu0 0.0
  %198 = vmatpush1.msra.mxu0 %v143
  %199 = vmatprep.subr.mxu0 0.0
  %200 = vmatpush1.msra.mxu0 %v142
  %201 = vmatprep.subr.mxu0 0.0
  %202 = vmatpush2.msra.mxu0 0.0
  %203 = vmatprep.subr.mxu0 0.0
  %204 = vmatpush2.msra.mxu0 0.0
  %205 = vmatprep.subr.mxu0 0.0
  %206 = vmatpush2.msra.mxu0 0.0
  %207 = vmatprep.subr.mxu0 0.0
  %208 = vmatpush2.msra.mxu0 0.0
  %209 = vmatprep.subr.mxu0 0.0
  %210 = vmatpush2.msra.mxu0 0.0
  %211 = vmatprep.subr.mxu0 0.0
  %212 = vmatpush2.msra.mxu0 0.0
  %213 = vmatprep.subr.mxu0 0.0
  %214 = vmatpush2.msra.mxu0 0.0
  %215 = vmatprep.subr.mxu0 0.0
  %216 = vmatpush2.msra.mxu0 0.0
  %217 = vmatprep.subr.mxu0 0.0
  %218 = vmatpush2.msra.mxu0 0.0
  %219 = vmatprep.subr.mxu0 0.0
  %220 = vmatpush2.msra.mxu0 0.0
  %221 = vmatprep.subr.mxu0 0.0
  %222 = vmatpush2.msra.mxu0 0.0
  %223 = vmatprep.subr.mxu0 0.0
  %224 = vmatpush2.msra.mxu0 0.0
  %225 = vmatprep.subr.mxu0 0.0
  %226 = vmatpush2.msra.mxu0 0.0
  %227 = vmatprep.subr.mxu0 0.0
  %228 = vmatpush2.msra.mxu0 0.0
  %229 = vmatprep.subr.mxu0 0.0
  %230 = vmatpush2.msra.mxu0 0.0
  %231 = vmatprep.subr.mxu0 0.0
  %232 = vmatpush2.msra.mxu0 0.0
  %233 = vmatprep.mubr.f32.mxu0 0.0
  %234 = vmatmul.mubr.f32.gmra.mxu0 %v155
  %v235 = vpop.f32.mrf.mxu0
  %v236 = vadd.f32 %v151, %v235
  %v237 = vpop.f32.mrf.mxu0
  %238 = vmatprep.mubr.f32.mxu0 0.0
  %239 = vmatmul.mubr.f32.gmra.mxu0 %v158
  %v240 = vpop.f32.mrf.mxu0
  %v241 = vadd.f32 %v151, %v240
  %v242 = vpop.f32.mrf.mxu0
  %243 = vmatprep.mubr.f32.mxu0 0.0
  %244 = vmatmul.mubr.f32.gmra.mxu0 %v161
  %v245 = vpop.f32.mrf.mxu0
  %v246 = vadd.f32 %v151, %v245
  %v247 = vpop.f32.mrf.mxu0
  %248 = vmatprep.mubr.f32.mxu0 0.0
  %249 = vmatmul.mubr.f32.gmra.mxu0 %v164
  %v250 = vpop.f32.mrf.mxu0
  %v251 = vadd.f32 %v151, %v250
  %v252 = vpop.f32.mrf.mxu0
  %253 = vmatprep.mubr.f32.mxu0 0.0
  %254 = vmatmul.mubr.f32.gmra.mxu0 %v167
  %v255 = vpop.f32.mrf.mxu0
  %v256 = vadd.f32 %v151, %v255
  %v257 = vpop.f32.mrf.mxu0
  %258 = vdwg.mxu0
  %v259 = vmul.f32 %v236, 1.702
  %v260 = vmul.f32 %v241, 1.702
  %v261 = vmul.f32 %v246, 1.702
  %v262 = vmul.f32 %v251, 1.702
  %v263 = vmul.f32 %v256, 1.702
  %v264 = vsub.f32 0.0, %v259
  %v265 = vsub.f32 0.0, %v260
  %v266 = vsub.f32 0.0, %v261
  %v267 = vsub.f32 0.0, %v262
  %v268 = vsub.f32 0.0, %v263
  %v269 = vmul.f32 %v264, 1.442695
  %v270 = vpow.pop %v269
  %v271 = vmul.f32 %v265, 1.442695
  %v272 = vpow.pop %v271
  %v273 = vmul.f32 %v266, 1.442695
  %v274 = vpow.pop %v273
  %v275 = vmul.f32 %v267, 1.442695
  %v276 = vpow.pop %v275
  %v277 = vmul.f32 %v268, 1.442695
  %v278 = vpow.pop %v277
  %v279 = vadd.f32 %v270, 1.0
  %v280 = vadd.f32 %v272, 1.0
  %v281 = vadd.f32 %v274, 1.0
  %v282 = vadd.f32 %v276, 1.0
  %v283 = vadd.f32 %v278, 1.0
  %v284 = vrcp.pop %v279
  %v285 = vrcp.pop %v280
  %v286 = vrcp.pop %v281
  %v287 = vrcp.pop %v282
  %v288 = vrcp.pop %v283
  %v289 = vmul.f32 %v236, %v284
  %v290 = vmul.f32 %v241, %v285
  %v291 = vmul.f32 %v246, %v286
  %v292 = vmul.f32 %v251, %v287
  %v293 = vmul.f32 %v256, %v288
  %v294 = vld [vmem:[#allocation3] sm:$0xff]
  %v295 = vld [vmem:[#allocation3 + $0x8] sm:$0xff]
  %v296 = vld [vmem:[#allocation3 + $0x10] sm:$0xff]
  %v297 = vld [vmem:[#allocation3 + $0x18] sm:$0xff]
  %v298 = vld [vmem:[#allocation3 + $0x20] sm:$0x3]
  %v299 = vld [vmem:[%s5] sm:$0xff]
  %v300 = vld [vmem:[%s5 + $0x8] sm:$0xff]
  %v301 = vld [vmem:[%s5 + $0x10] sm:$0xff]
  %v302 = vld [vmem:[%s5 + $0x18] sm:$0xff]
  %v303 = vld [vmem:[%s5 + $0x20] sm:$0xff]
  %v304 = vld [vmem:[%s5 + $0x28] sm:$0xff]
  %v305 = vld [vmem:[%s5 + $0x30] sm:$0xff]
  %v306 = vld [vmem:[%s5 + $0x38] sm:$0xff]
  %v307 = vld [vmem:[%s5 + $0x40] sm:$0xff]
  %v308 = vld [vmem:[%s5 + $0x48] sm:$0xff]
  %v309 = vld [vmem:[%s5 + $0x50] sm:$0xff]
  %v310 = vld [vmem:[%s5 + $0x58] sm:$0xff]
  %v311 = vld [vmem:[%s5 + $0x60] sm:$0xff]
  %v312 = vld [vmem:[%s5 + $0x68] sm:$0xff]
  %v313 = vld [vmem:[%s5 + $0x70] sm:$0xff]
  %v314 = vld [vmem:[%s5 + $0x78] sm:$0xff]
  %315 = vmatprep.subr.mxu0 0.0
  %316 = vmatpush1.msra.mxu0 %v314
  %317 = vmatprep.subr.mxu0 0.0
  %318 = vmatpush1.msra.mxu0 %v313
  %319 = vmatprep.subr.mxu0 0.0
  %320 = vmatpush1.msra.mxu0 %v312
  %321 = vmatprep.subr.mxu0 0.0
  %322 = vmatpush1.msra.mxu0 %v311
  %323 = vmatprep.subr.mxu0 0.0
  %324 = vmatpush1.msra.mxu0 %v310
  %325 = vmatprep.subr.mxu0 0.0
  %326 = vmatpush1.msra.mxu0 %v309
  %327 = vmatprep.subr.mxu0 0.0
  %328 = vmatpush1.msra.mxu0 %v308
  %329 = vmatprep.subr.mxu0 0.0
  %330 = vmatpush1.msra.mxu0 %v307
  %331 = vmatprep.subr.mxu0 0.0
  %332 = vmatpush1.msra.mxu0 %v306
  %333 = vmatprep.subr.mxu0 0.0
  %334 = vmatpush1.msra.mxu0 %v305
  %335 = vmatprep.subr.mxu0 0.0
  %336 = vmatpush1.msra.mxu0 %v304
  %337 = vmatprep.subr.mxu0 0.0
  %338 = vmatpush1.msra.mxu0 %v303
  %339 = vmatprep.subr.mxu0 0.0
  %340 = vmatpush1.msra.mxu0 %v302
  %341 = vmatprep.subr.mxu0 0.0
  %342 = vmatpush1.msra.mxu0 %v301
  %343 = vmatprep.subr.mxu0 0.0
  %344 = vmatpush1.msra.mxu0 %v300
  %345 = vmatprep.subr.mxu0 0.0
  %346 = vmatpush1.msra.mxu0 %v299
  %347 = vmatprep.subr.mxu0 0.0
  %348 = vmatpush2.msra.mxu0 0.0
  %349 = vmatprep.subr.mxu0 0.0
  %350 = vmatpush2.msra.mxu0 0.0
  %351 = vmatprep.subr.mxu0 0.0
  %352 = vmatpush2.msra.mxu0 0.0
  %353 = vmatprep.subr.mxu0 0.0
  %354 = vmatpush2.msra.mxu0 0.0
  %355 = vmatprep.subr.mxu0 0.0
  %356 = vmatpush2.msra.mxu0 0.0
  %357 = vmatprep.subr.mxu0 0.0
  %358 = vmatpush2.msra.mxu0 0.0
  %359 = vmatprep.subr.mxu0 0.0
  %360 = vmatpush2.msra.mxu0 0.0
  %361 = vmatprep.subr.mxu0 0.0
  %362 = vmatpush2.msra.mxu0 0.0
  %363 = vmatprep.subr.mxu0 0.0
  %364 = vmatpush2.msra.mxu0 0.0
  %365 = vmatprep.subr.mxu0 0.0
  %366 = vmatpush2.msra.mxu0 0.0
  %367 = vmatprep.subr.mxu0 0.0
  %368 = vmatpush2.msra.mxu0 0.0
  %369 = vmatprep.subr.mxu0 0.0
  %370 = vmatpush2.msra.mxu0 0.0
  %371 = vmatprep.subr.mxu0 0.0
  %372 = vmatpush2.msra.mxu0 0.0
  %373 = vmatprep.subr.mxu0 0.0
  %374 = vmatpush2.msra.mxu0 0.0
  %375 = vmatprep.subr.mxu0 0.0
  %376 = vmatpush2.msra.mxu0 0.0
  %377 = vmatprep.subr.mxu0 0.0
  %378 = vmatpush2.msra.mxu0 0.0
  %379 = vmatprep.mubr.f32.mxu0 0.0
  %380 = vmatmul.mubr.f32.gmra.mxu0 %v289
  %v381 = vpop.f32.mrf.mxu0
  %v382 = vadd.f32 0.0, %v381
  %v383 = vpop.f32.mrf.mxu0
  %384 = vmatprep.mubr.f32.mxu0 0.0
  %385 = vmatmul.mubr.f32.gmra.mxu0 %v290
  %v386 = vpop.f32.mrf.mxu0
  %v387 = vadd.f32 0.0, %v386
  %v388 = vpop.f32.mrf.mxu0
  %389 = vmatprep.mubr.f32.mxu0 0.0
  %390 = vmatmul.mubr.f32.gmra.mxu0 %v291
  %v391 = vpop.f32.mrf.mxu0
  %v392 = vadd.f32 0.0, %v391
  %v393 = vpop.f32.mrf.mxu0
  %394 = vmatprep.mubr.f32.mxu0 0.0
  %395 = vmatmul.mubr.f32.gmra.mxu0 %v292
  %v396 = vpop.f32.mrf.mxu0
  %v397 = vadd.f32 0.0, %v396
  %v398 = vpop.f32.mrf.mxu0
  %399 = vmatprep.mubr.f32.mxu0 0.0
  %400 = vmatmul.mubr.f32.gmra.mxu0 %v293
  %v401 = vpop.f32.mrf.mxu0
  %v402 = vadd.f32 0.0, %v401
  %v403 = vpop.f32.mrf.mxu0
  %404 = vdwg.mxu0
  %v405 = vadd.f32 %v294, %v382
  %v406 = vadd.f32 %v295, %v387
  %v407 = vadd.f32 %v296, %v392
  %v408 = vadd.f32 %v297, %v397
  %v409 = vadd.f32 %v298, %v402
  %410 = vst.msk [vmem:[#allocation3] sm:$0xff] %vm153, %v405
  %411 = vst.msk [vmem:[#allocation3 + $0x8] sm:$0xff] %vm153, %v406
  %412 = vst.msk [vmem:[#allocation3 + $0x10] sm:$0xff] %vm153, %v407
  %413 = vst.msk [vmem:[#allocation3 + $0x18] sm:$0xff] %vm153, %v408
  %vm414 = vcmask 254976
  %415 = vst.msk [vmem:[#allocation3 + $0x20] sm:$0x3] %vm414, %v409
  // Predicated region
  $region34: #{_lambda_.32} parent=0 // pred_check
    %p416 = pneg %p26
  $region35: #{_lambda_.32} parent=0 // pred_check_branch
    %418 = sbr.rel (%p416) target = $region37
  $region36: #{_lambda_.32} parent=0 // pred_region
    %v419 = vld [vmem:[#allocation3] sm:$0xff]
    %v420 = vld [vmem:[#allocation3 + $0x8] sm:$0xff]
    %v421 = vld [vmem:[#allocation3 + $0x10] sm:$0xff]
    %v422 = vld [vmem:[#allocation3 + $0x18] sm:$0xff]
    %v423 = vld [vmem:[#allocation3 + $0x20] sm:$0x3]
    %v424 = vld [vmem:[%s6] sm:$0x1]
    %v426 = vlaneseq
    %v427 = vshrl.u32 %v426, 7
    %v428 = vsub.s32 0, %v427
    %v429 = vrot.slane %v424, %v428
    %v431 = vadd.f32 %v419, %v429
    %v432 = vadd.f32 %v420, %v429
    %v433 = vadd.f32 %v421, %v429
    %v434 = vadd.f32 %v422, %v429
    %v435 = vadd.f32 %v423, %v429
    %v436 = vld [vmem:[%s0] sm:$0xff]
    %v437 = vld [vmem:[%s0 + $0x8] sm:$0xff]
    %v438 = vld [vmem:[%s0 + $0x10] sm:$0xff]
    %v439 = vld [vmem:[%s0 + $0x18] sm:$0xff]
    %v440 = vld [vmem:[%s0 + $0x20] sm:$0x3]
    %v441 = vadd.f32 %v431, %v436
    %v442 = vadd.f32 %v432, %v437
    %v443 = vadd.f32 %v433, %v438
    %v444 = vadd.f32 %v434, %v439
    %v445 = vadd.f32 %v435, %v440
    %446 = vst.msk [vmem:[%s7] sm:$0xff] %vm153, %v441
    %447 = vst.msk [vmem:[%s7 + $0x8] sm:$0xff] %vm153, %v442
    %448 = vst.msk [vmem:[%s7 + $0x10] sm:$0xff] %vm153, %v443
    %449 = vst.msk [vmem:[%s7 + $0x18] sm:$0xff] %vm153, %v444
    %450 = vst.msk [vmem:[%s7 + $0x20] sm:$0x3] %vm414, %v445
  $region37: #{_lambda_.32} parent=0 // pred_fallthru
    _
  // Predicated region
  $region38: #{_lambda_.32} parent=0 // pred_check
    _
  $region39: #{_lambda_.32} parent=0 // pred_check_branch
    %452 = sbr.rel (0) target = $region41
  $region40: #{_lambda_.32} parent=0 // pred_region
    _
  $region41: #{_lambda_.32} parent=0 // pred_fallthru
    _
  // Predicated region
  $region42: #{_lambda_.32} parent=0 // pred_check
    _
  $region43: #{_lambda_.32} parent=0 // pred_check_branch
    %454 = sbr.rel (0) target = $region45
  $region44: #{_lambda_.32} parent=0 // pred_region
    _
  $region45: #{_lambda_.32} parent=0 // pred_fallthru
    _

// kernel: _lambda_.42
$region0: #{_lambda_.42}
  #allocation0 [shape = 'u32[]', space=smem, size = 0x4, offset = 0x4, fixed_abs, tag = 'smem constant byte address 0x4 - core index']
  #allocation1 [shape = 'u32[144,128]{1,0:T(1,128)}', space=vmem, size = 0x12000, scoped, tag = 'internal scratch']
  %s0 = inlined_call_operand.vmem [shape: f32[8,32], index: 0, kind: input, shape index: {}]
  %s1 = inlined_call_operand.vmem [shape: f32[32,32], index: 1, kind: input, shape index: {}]
  %s2 = inlined_call_operand.vmem [shape: f32[1,32], index: 2, kind: input, shape index: {}]
  %s3 = inlined_call_operand.vmem [shape: f32[8,32], index: 3, kind: output, shape index: {}]
  %s4 = sld [smem:[#allocation0]]
  $region22: #{_lambda_.42} parent=0
    _
  %s6 = ssub.s32 1, %s4
  %s7 = scalar_select 0, %s6, %s4
  // Predicated region
  $region2: #{_lambda_.42} parent=0 // pred_check
    _
  $region3: #{_lambda_.42} parent=0 // pred_check_branch
    %9 = sbr.rel (0) target = $region5
  $region4: #{_lambda_.42} parent=0 // pred_region
    _
  $region5: #{_lambda_.42} parent=0 // pred_fallthru
    _
  // Predicated region
  $region6: #{_lambda_.42} parent=0 // pred_check
    _
  $region7: #{_lambda_.42} parent=0 // pred_check_branch
    %11 = sbr.rel (0) target = $region9
  $region8: #{_lambda_.42} parent=0 // pred_region
    _
  $region9: #{_lambda_.42} parent=0 // pred_fallthru
    _
  // Predicated region
  $region10: #{_lambda_.42} parent=0 // pred_check
    _
  $region11: #{_lambda_.42} parent=0 // pred_check_branch
    %13 = sbr.rel (0) target = $region13
  $region12: #{_lambda_.42} parent=0 // pred_region
    _
  $region13: #{_lambda_.42} parent=0 // pred_fallthru
    _
  %v14 = vld [vmem:[%s0] sm:$0xff]
  %vm15 = vcmask 261120
  %v16 = vsel %vm15, %v14, 0.0
  %17 = vadd.xlane.f32.xlu0 %v16
  %v18 = vpop.xlane.xlu0 %17
  %v19 = vrcp.pop 32.0
  %v20 = vmul.f32 %v18, %v19
  %v21 = vsub.f32 0.0, %v20
  %v22 = vmul.f32 %v21, 1.442695
  %v23 = vpow.pop %v22
  %v24 = vadd.f32 %v23, 1.0
  %v25 = vrcp.pop %v24
  %v26 = vmul.f32 %v14, %v25
  %v27 = vld [vmem:[%s1] sm:$0xff]
  %v28 = vld [vmem:[%s1 + $0x8] sm:$0xff]
  %v29 = vld [vmem:[%s1 + $0x10] sm:$0xff]
  %v30 = vld [vmem:[%s1 + $0x18] sm:$0xff]
  %v31 = vld [vmem:[%s2] sm:$0x1]
  %v33 = vlaneseq
  %v34 = vshrl.u32 %v33, 7
  %v35 = vsub.s32 0, %v34
  %v36 = vrot.slane %v31, %v35
  %v39 = vsel %vm15, %v26, 0
  %41 = vmatprep.subr.mxu0 0.0
  %42 = vmatpush1.msra.mxu0 0.0
  %43 = vmatprep.subr.mxu0 0.0
  %44 = vmatpush1.msra.mxu0 0.0
  %45 = vmatprep.subr.mxu0 0.0
  %46 = vmatpush1.msra.mxu0 0.0
  %47 = vmatprep.subr.mxu0 0.0
  %48 = vmatpush1.msra.mxu0 0.0
  %49 = vmatprep.subr.mxu0 0.0
  %50 = vmatpush1.msra.mxu0 0.0
  %51 = vmatprep.subr.mxu0 0.0
  %52 = vmatpush1.msra.mxu0 0.0
  %53 = vmatprep.subr.mxu0 0.0
  %54 = vmatpush1.msra.mxu0 0.0
  %55 = vmatprep.subr.mxu0 0.0
  %56 = vmatpush1.msra.mxu0 0.0
  %57 = vmatprep.subr.mxu0 0.0
  %58 = vmatpush1.msra.mxu0 0.0
  %59 = vmatprep.subr.mxu0 0.0
  %60 = vmatpush1.msra.mxu0 0.0
  %61 = vmatprep.subr.mxu0 0.0
  %62 = vmatpush1.msra.mxu0 0.0
  %63 = vmatprep.subr.mxu0 0.0
  %64 = vmatpush1.msra.mxu0 0.0
  %65 = vmatprep.subr.mxu0 0.0
  %66 = vmatpush1.msra.mxu0 %v30
  %67 = vmatprep.subr.mxu0 0.0
  %68 = vmatpush1.msra.mxu0 %v29
  %69 = vmatprep.subr.mxu0 0.0
  %70 = vmatpush1.msra.mxu0 %v28
  %71 = vmatprep.subr.mxu0 0.0
  %72 = vmatpush1.msra.mxu0 %v27
  %73 = vmatprep.subr.mxu0 0.0
  %74 = vmatpush2.msra.mxu0 0.0
  %75 = vmatprep.subr.mxu0 0.0
  %76 = vmatpush2.msra.mxu0 0.0
  %77 = vmatprep.subr.mxu0 0.0
  %78 = vmatpush2.msra.mxu0 0.0
  %79 = vmatprep.subr.mxu0 0.0
  %80 = vmatpush2.msra.mxu0 0.0
  %81 = vmatprep.subr.mxu0 0.0
  %82 = vmatpush2.msra.mxu0 0.0
  %83 = vmatprep.subr.mxu0 0.0
  %84 = vmatpush2.msra.mxu0 0.0
  %85 = vmatprep.subr.mxu0 0.0
  %86 = vmatpush2.msra.mxu0 0.0
  %87 = vmatprep.subr.mxu0 0.0
  %88 = vmatpush2.msra.mxu0 0.0
  %89 = vmatprep.subr.mxu0 0.0
  %90 = vmatpush2.msra.mxu0 0.0
  %91 = vmatprep.subr.mxu0 0.0
  %92 = vmatpush2.msra.mxu0 0.0
  %93 = vmatprep.subr.mxu0 0.0
  %94 = vmatpush2.msra.mxu0 0.0
  %95 = vmatprep.subr.mxu0 0.0
  %96 = vmatpush2.msra.mxu0 0.0
  %97 = vmatprep.subr.mxu0 0.0
  %98 = vmatpush2.msra.mxu0 0.0
  %99 = vmatprep.subr.mxu0 0.0
  %100 = vmatpush2.msra.mxu0 0.0
  %101 = vmatprep.subr.mxu0 0.0
  %102 = vmatpush2.msra.mxu0 0.0
  %103 = vmatprep.subr.mxu0 0.0
  %104 = vmatpush2.msra.mxu0 0.0
  %105 = vmatprep.mubr.f32.mxu0 0.0
  %106 = vmatmul.mubr.f32.gmra.mxu0 %v39
  %v107 = vpop.f32.mrf.mxu0
  %v108 = vadd.f32 %v36, %v107
  %v109 = vpop.f32.mrf.mxu0
  %110 = vdwg.mxu0
  %v111 = vmul.f32 %v108, 1.702
  %v112 = vsub.f32 0.0, %v111
  %v113 = vmul.f32 %v112, 1.442695
  %v114 = vpow.pop %v113
  %v115 = vadd.f32 %v114, 1.0
  %v116 = vrcp.pop %v115
  %v117 = vmul.f32 %v108, %v116
  %118 = vst.msk [vmem:[%s3] sm:$0xff] %vm15, %v117
  // Predicated region
  $region14: #{_lambda_.42} parent=0 // pred_check
    _
  $region15: #{_lambda_.42} parent=0 // pred_check_branch
    %120 = sbr.rel (0) target = $region17
  $region16: #{_lambda_.42} parent=0 // pred_region
    _
  $region17: #{_lambda_.42} parent=0 // pred_fallthru
    _
  // Predicated region
  $region18: #{_lambda_.42} parent=0 // pred_check
    _
  $region19: #{_lambda_.42} parent=0 // pred_check_branch
    %122 = sbr.rel (0) target = $region21
  $region20: #{_lambda_.42} parent=0 // pred_region
    _
  $region21: #{_lambda_.42} parent=0 // pred_fallthru
    _

// kernel: _lambda_.41
$region0: #{_lambda_.41}
  #allocation0 [shape = 'u32[]', space=smem, size = 0x4, offset = 0x4, fixed_abs, tag = 'smem constant byte address 0x4 - core index']
  #allocation1 [shape = 'u32[144,128]{1,0:T(1,128)}', space=vmem, size = 0x12000, scoped, tag = 'internal scratch']
  %s0 = inlined_call_operand.vmem [shape: f32[9,8,32], index: 0, kind: input, shape index: {}]
  %s1 = inlined_call_operand.vmem [shape: f32[9,1,32], index: 1, kind: input, shape index: {}]
  %s2 = inlined_call_operand.vmem [shape: f32[1,32], index: 2, kind: input, shape index: {}]
  %s3 = inlined_call_operand.vmem [shape: f32[1,32], index: 3, kind: input, shape index: {}]
  %s4 = inlined_call_operand.vmem [shape: f32[1,32], index: 4, kind: input, shape index: {}]
  %s5 = inlined_call_operand.vmem [shape: f32[8,32], index: 5, kind: output, shape index: {}]
  %s6 = sld [smem:[#allocation0]]
  $region30: #{_lambda_.41} parent=0
    _
  %s8 = ssub.s32 1, %s6
  %s9 = scalar_select 0, %s8, %s6
  // Predicated region
  $region2: #{_lambda_.41} parent=0 // pred_check
    _
  $region3: #{_lambda_.41} parent=0 // pred_check_branch
    %11 = sbr.rel (0) target = $region5
  $region4: #{_lambda_.41} parent=0 // pred_region
    _
  $region5: #{_lambda_.41} parent=0 // pred_fallthru
    _
  // Predicated region
  $region6: #{_lambda_.41} parent=0 // pred_check
    _
  $region7: #{_lambda_.41} parent=0 // pred_check_branch
    %13 = sbr.rel (0) target = $region9
  $region8: #{_lambda_.41} parent=0 // pred_region
    _
  $region9: #{_lambda_.41} parent=0 // pred_fallthru
    _
  // Predicated region
  $region10: #{_lambda_.41} parent=0 // pred_check
    _
  $region11: #{_lambda_.41} parent=0 // pred_check_branch
    %15 = sbr.rel (0) target = $region13
  $region12: #{_lambda_.41} parent=0 // pred_region
    _
  $region13: #{_lambda_.41} parent=0 // pred_fallthru
    _
  // Predicated region
  $region14: #{_lambda_.41} parent=0 // pred_check
    _
  $region15: #{_lambda_.41} parent=0 // pred_check_branch
    %17 = sbr.rel (0) target = $region17
  $region16: #{_lambda_.41} parent=0 // pred_region
    _
  $region17: #{_lambda_.41} parent=0 // pred_fallthru
    _
  // Predicated region
  $region18: #{_lambda_.41} parent=0 // pred_check
    _
  $region19: #{_lambda_.41} parent=0 // pred_check_branch
    %19 = sbr.rel (0) target = $region21
  $region20: #{_lambda_.41} parent=0 // pred_region
    _
  $region21: #{_lambda_.41} parent=0 // pred_fallthru
    _
  %v20 = vld [vmem:[%s0] sm:$0xff]
  %v21 = vld [vmem:[%s1] sm:$0x1]
  %v23 = vlaneseq
  %v24 = vshrl.u32 %v23, 7
  %v25 = vsub.s32 0, %v24
  %v26 = vrot.slane %v21, %v25
  %v28 = vmul.f32 %v20, %v26
  %s29 = scalar_lea.vmem %s0, 8
  %v30 = vld [vmem:[%s29] sm:$0xff]
  %s31 = scalar_lea.vmem %s1, 1
  %v32 = vld [vmem:[%s31] sm:$0x1]
  %v34 = vlaneseq
  %v35 = vshrl.u32 %v34, 7
  %v36 = vsub.s32 0, %v35
  %v37 = vrot.slane %v32, %v36
  %v39 = vmul.f32 %v30, %v37
  %v40 = vadd.f32 %v28, %v39
  %s41 = scalar_lea.vmem %s0, 16
  %v42 = vld [vmem:[%s41] sm:$0xff]
  %s43 = scalar_lea.vmem %s1, 2
  %v44 = vld [vmem:[%s43] sm:$0x1]
  %v46 = vlaneseq
  %v47 = vshrl.u32 %v46, 7
  %v48 = vsub.s32 0, %v47
  %v49 = vrot.slane %v44, %v48
  %v51 = vmul.f32 %v42, %v49
  %v52 = vadd.f32 %v40, %v51
  %s53 = scalar_lea.vmem %s0, 24
  %v54 = vld [vmem:[%s53] sm:$0xff]
  %s55 = scalar_lea.vmem %s1, 3
  %v56 = vld [vmem:[%s55] sm:$0x1]
  %v58 = vlaneseq
  %v59 = vshrl.u32 %v58, 7
  %v60 = vsub.s32 0, %v59
  %v61 = vrot.slane %v56, %v60
  %v63 = vmul.f32 %v54, %v61
  %v64 = vadd.f32 %v52, %v63
  %s65 = scalar_lea.vmem %s0, 32
  %v66 = vld [vmem:[%s65] sm:$0xff]
  %s67 = scalar_lea.vmem %s1, 4
  %v68 = vld [vmem:[%s67] sm:$0x1]
  %v70 = vlaneseq
  %v71 = vshrl.u32 %v70, 7
  %v72 = vsub.s32 0, %v71
  %v73 = vrot.slane %v68, %v72
  %v75 = vmul.f32 %v66, %v73
  %v76 = vadd.f32 %v64, %v75
  %s77 = scalar_lea.vmem %s0, 40
  %v78 = vld [vmem:[%s77] sm:$0xff]
  %s79 = scalar_lea.vmem %s1, 5
  %v80 = vld [vmem:[%s79] sm:$0x1]
  %v82 = vlaneseq
  %v83 = vshrl.u32 %v82, 7
  %v84 = vsub.s32 0, %v83
  %v85 = vrot.slane %v80, %v84
  %v87 = vmul.f32 %v78, %v85
  %v88 = vadd.f32 %v76, %v87
  %s89 = scalar_lea.vmem %s0, 48
  %v90 = vld [vmem:[%s89] sm:$0xff]
  %s91 = scalar_lea.vmem %s1, 6
  %v92 = vld [vmem:[%s91] sm:$0x1]
  %v94 = vlaneseq
  %v95 = vshrl.u32 %v94, 7
  %v96 = vsub.s32 0, %v95
  %v97 = vrot.slane %v92, %v96
  %v99 = vmul.f32 %v90, %v97
  %v100 = vadd.f32 %v88, %v99
  %s101 = scalar_lea.vmem %s0, 56
  %v102 = vld [vmem:[%s101] sm:$0xff]
  %s103 = scalar_lea.vmem %s1, 7
  %v104 = vld [vmem:[%s103] sm:$0x1]
  %v106 = vlaneseq
  %v107 = vshrl.u32 %v106, 7
  %v108 = vsub.s32 0, %v107
  %v109 = vrot.slane %v104, %v108
  %v111 = vmul.f32 %v102, %v109
  %v112 = vadd.f32 %v100, %v111
  %s113 = scalar_lea.vmem %s0, 64
  %v114 = vld [vmem:[%s113] sm:$0xff]
  %s115 = scalar_lea.vmem %s1, 8
  %v116 = vld [vmem:[%s115] sm:$0x1]
  %v118 = vlaneseq
  %v119 = vshrl.u32 %v118, 7
  %v120 = vsub.s32 0, %v119
  %v121 = vrot.slane %v116, %v120
  %v123 = vmul.f32 %v114, %v121
  %v124 = vadd.f32 %v112, %v123
  %v125 = vld [vmem:[%s2] sm:$0x1]
  %v127 = vlaneseq
  %v128 = vshrl.u32 %v127, 7
  %v129 = vsub.s32 0, %v128
  %v130 = vrot.slane %v125, %v129
  %v132 = vadd.f32 %v124, %v130
  %v133 = vld [vmem:[%s3] sm:$0x1]
  %v134 = vld [vmem:[%s4] sm:$0x1]
  %vm135 = vcmask 261120
  %v136 = vsel %vm135, %v132, 0.0
  %137 = vadd.xlane.f32.xlu0 %v136
  %v138 = vpop.xlane.xlu0 %137
  %v139 = vrcp.pop 32.0
  %v140 = vmul.f32 %v138, %v139
  %v141 = vsub.f32 %v132, %v140
  %v142 = vmul.f32 %v141, %v141
  %v143 = vsel %vm135, %v142, 0.0
  %144 = vadd.xlane.f32.xlu0 %v143
  %v145 = vpop.xlane.xlu0 %144
  %v146 = vmul.f32 %v145, %v139
  %v147 = vadd.f32 %v146, 1e-05
  %v148 = vrsqrt.pop %v147
  %v149 = vmul.f32 %v141, %v148
  %v151 = vlaneseq
  %v152 = vshrl.u32 %v151, 7
  %v153 = vsub.s32 0, %v152
  %v154 = vrot.slane %v133, %v153
  %v156 = vmul.f32 %v149, %v154
  %v158 = vlaneseq
  %v159 = vshrl.u32 %v158, 7
  %v160 = vsub.s32 0, %v159
  %v161 = vrot.slane %v134, %v160
  %v163 = vadd.f32 %v156, %v161
  %164 = vst.msk [vmem:[%s5] sm:$0xff] %vm135, %v163
  // Predicated region
  $region22: #{_lambda_.41} parent=0 // pred_check
    _
  $region23: #{_lambda_.41} parent=0 // pred_check_branch
    %166 = sbr.rel (0) target = $region25
  $region24: #{_lambda_.41} parent=0 // pred_region
    _
  $region25: #{_lambda_.41} parent=0 // pred_fallthru
    _
  // Predicated region
  $region26: #{_lambda_.41} parent=0 // pred_check
    _
  $region27: #{_lambda_.41} parent=0 // pred_check_branch
    %168 = sbr.rel (0) target = $region29
  $region28: #{_lambda_.41} parent=0 // pred_region
    _
  $region29: #{_lambda_.41} parent=0 // pred_fallthru
    _

// kernel: _lambda_.43
$region0: #{_lambda_.43}
  #allocation0 [shape = 'u32[]', space=smem, size = 0x4, offset = 0x4, fixed_abs, tag = 'smem constant byte address 0x4 - core index']
  #allocation1 [shape = 'u32[144,128]{1,0:T(1,128)}', space=vmem, size = 0x12000, scoped, tag = 'internal scratch']
  %s0 = inlined_call_operand.vmem [shape: f32[8,32], index: 0, kind: input, shape index: {}]
  %s1 = inlined_call_operand.vmem [shape: f32[1,32], index: 1, kind: input, shape index: {}]
  %s2 = inlined_call_operand.vmem [shape: f32[1,32], index: 2, kind: input, shape index: {}]
  %s3 = inlined_call_operand.vmem [shape: f32[8,32], index: 3, kind: input, shape index: {}]
  %s4 = inlined_call_operand.vmem [shape: f32[8,32], index: 4, kind: output, shape index: {}]
  %s5 = sld [smem:[#allocation0]]
  $region26: #{_lambda_.43} parent=0
    _
  %s7 = ssub.s32 1, %s5
  %s8 = scalar_select 0, %s7, %s5
  // Predicated region
  $region2: #{_lambda_.43} parent=0 // pred_check
    _
  $region3: #{_lambda_.43} parent=0 // pred_check_branch
    %10 = sbr.rel (0) target = $region5
  $region4: #{_lambda_.43} parent=0 // pred_region
    _
  $region5: #{_lambda_.43} parent=0 // pred_fallthru
    _
  // Predicated region
  $region6: #{_lambda_.43} parent=0 // pred_check
    _
  $region7: #{_lambda_.43} parent=0 // pred_check_branch
    %12 = sbr.rel (0) target = $region9
  $region8: #{_lambda_.43} parent=0 // pred_region
    _
  $region9: #{_lambda_.43} parent=0 // pred_fallthru
    _
  // Predicated region
  $region10: #{_lambda_.43} parent=0 // pred_check
    _
  $region11: #{_lambda_.43} parent=0 // pred_check_branch
    %14 = sbr.rel (0) target = $region13
  $region12: #{_lambda_.43} parent=0 // pred_region
    _
  $region13: #{_lambda_.43} parent=0 // pred_fallthru
    _
  // Predicated region
  $region14: #{_lambda_.43} parent=0 // pred_check
    _
  $region15: #{_lambda_.43} parent=0 // pred_check_branch
    %16 = sbr.rel (0) target = $region17
  $region16: #{_lambda_.43} parent=0 // pred_region
    _
  $region17: #{_lambda_.43} parent=0 // pred_fallthru
    _
  %v17 = vld [vmem:[%s0] sm:$0xff]
  %v18 = vld [vmem:[%s1] sm:$0x1]
  %v19 = vld [vmem:[%s2] sm:$0x1]
  %vm20 = vcmask 261120
  %v21 = vsel %vm20, %v17, 0.0
  %22 = vadd.xlane.f32.xlu0 %v21
  %v23 = vpop.xlane.xlu0 %22
  %v24 = vrcp.pop 32.0
  %v25 = vmul.f32 %v23, %v24
  %v26 = vsub.f32 %v17, %v25
  %v27 = vmul.f32 %v26, %v26
  %v28 = vsel %vm20, %v27, 0.0
  %29 = vadd.xlane.f32.xlu0 %v28
  %v30 = vpop.xlane.xlu0 %29
  %v31 = vmul.f32 %v30, %v24
  %v32 = vadd.f32 %v31, 1e-05
  %v33 = vrsqrt.pop %v32
  %v34 = vmul.f32 %v26, %v33
  %v36 = vlaneseq
  %v37 = vshrl.u32 %v36, 7
  %v38 = vsub.s32 0, %v37
  %v39 = vrot.slane %v18, %v38
  %v41 = vmul.f32 %v34, %v39
  %v43 = vlaneseq
  %v44 = vshrl.u32 %v43, 7
  %v45 = vsub.s32 0, %v44
  %v46 = vrot.slane %v19, %v45
  %v48 = vadd.f32 %v41, %v46
  %v49 = vld [vmem:[%s3] sm:$0xff]
  %v50 = vadd.f32 %v48, %v49
  %51 = vst.msk [vmem:[%s4] sm:$0xff] %vm20, %v50
  // Predicated region
  $region18: #{_lambda_.43} parent=0 // pred_check
    _
  $region19: #{_lambda_.43} parent=0 // pred_check_branch
    %53 = sbr.rel (0) target = $region21
  $region20: #{_lambda_.43} parent=0 // pred_region
    _
  $region21: #{_lambda_.43} parent=0 // pred_fallthru
    _
  // Predicated region
  $region22: #{_lambda_.43} parent=0 // pred_check
    _
  $region23: #{_lambda_.43} parent=0 // pred_check_branch
    %55 = sbr.rel (0) target = $region25
  $region24: #{_lambda_.43} parent=0 // pred_region
    _
  $region25: #{_lambda_.43} parent=0 // pred_fallthru
    _

// kernel: _lambda_.44
$region0: #{_lambda_.44}
  #allocation0 [shape = 'u32[]', space=smem, size = 0x4, offset = 0x4, fixed_abs, tag = 'smem constant byte address 0x4 - core index']
  #allocation1 [shape = 'u32[144,128]{1,0:T(1,128)}', space=vmem, size = 0x12000, scoped, tag = 'internal scratch']
  %s0 = inlined_call_operand.vmem [shape: f32[10,32], index: 0, kind: input, shape index: {}]
  %s1 = inlined_call_operand.vmem [shape: f32[1,32], index: 1, kind: input, shape index: {}]
  %s2 = inlined_call_operand.vmem [shape: f32[1,32], index: 2, kind: input, shape index: {}]
  %s3 = inlined_call_operand.vmem [shape: f32[32,96], index: 3, kind: input, shape index: {}]
  %s4 = inlined_call_operand.vmem [shape: f32[1,96], index: 4, kind: input, shape index: {}]
  %s5 = inlined_call_operand.vmem [shape: f32[10,96], index: 5, kind: output, shape index: {}]
  %s6 = sld [smem:[#allocation0]]
  $region30: #{_lambda_.44} parent=0
    _
  %s8 = ssub.s32 1, %s6
  %s9 = scalar_select 0, %s8, %s6
  // Predicated region
  $region2: #{_lambda_.44} parent=0 // pred_check
    _
  $region3: #{_lambda_.44} parent=0 // pred_check_branch
    %11 = sbr.rel (0) target = $region5
  $region4: #{_lambda_.44} parent=0 // pred_region
    _
  $region5: #{_lambda_.44} parent=0 // pred_fallthru
    _
  // Predicated region
  $region6: #{_lambda_.44} parent=0 // pred_check
    _
  $region7: #{_lambda_.44} parent=0 // pred_check_branch
    %13 = sbr.rel (0) target = $region9
  $region8: #{_lambda_.44} parent=0 // pred_region
    _
  $region9: #{_lambda_.44} parent=0 // pred_fallthru
    _
  // Predicated region
  $region10: #{_lambda_.44} parent=0 // pred_check
    _
  $region11: #{_lambda_.44} parent=0 // pred_check_branch
    %15 = sbr.rel (0) target = $region13
  $region12: #{_lambda_.44} parent=0 // pred_region
    _
  $region13: #{_lambda_.44} parent=0 // pred_fallthru
    _
  // Predicated region
  $region14: #{_lambda_.44} parent=0 // pred_check
    _
  $region15: #{_lambda_.44} parent=0 // pred_check_branch
    %17 = sbr.rel (0) target = $region17
  $region16: #{_lambda_.44} parent=0 // pred_region
    _
  $region17: #{_lambda_.44} parent=0 // pred_fallthru
    _
  // Predicated region
  $region18: #{_lambda_.44} parent=0 // pred_check
    _
  $region19: #{_lambda_.44} parent=0 // pred_check_branch
    %19 = sbr.rel (0) target = $region21
  $region20: #{_lambda_.44} parent=0 // pred_region
    _
  $region21: #{_lambda_.44} parent=0 // pred_fallthru
    _
  %v20 = vld [vmem:[%s0] sm:$0xff]
  %v21 = vld [vmem:[%s0 + $0x8] sm:$0x3]
  %v22 = vld [vmem:[%s1] sm:$0x1]
  %v23 = vld [vmem:[%s2] sm:$0x1]
  %vm24 = vcmask 261120
  %v25 = vsel %vm24, %v20, 0.0
  %26 = vadd.xlane.f32.xlu0 %v25
  %v27 = vpop.xlane.xlu0 %26
  %vm28 = vcmask 254976
  %v29 = vsel %vm28, %v21, 0.0
  %30 = vadd.xlane.f32.xlu0 %v29
  %v31 = vpop.xlane.xlu0 %30
  %v32 = vrcp.pop 32.0
  %v33 = vmul.f32 %v27, %v32
  %v34 = vmul.f32 %v31, %v32
  %v35 = vsub.f32 %v20, %v33
  %v36 = vsub.f32 %v21, %v34
  %v37 = vmul.f32 %v35, %v35
  %v38 = vmul.f32 %v36, %v36
  %v39 = vsel %vm24, %v37, 0.0
  %40 = vadd.xlane.f32.xlu0 %v39
  %v41 = vpop.xlane.xlu0 %40
  %v42 = vsel %vm28, %v38, 0.0
  %43 = vadd.xlane.f32.xlu0 %v42
  %v44 = vpop.xlane.xlu0 %43
  %v45 = vmul.f32 %v41, %v32
  %v46 = vmul.f32 %v44, %v32
  %v47 = vadd.f32 %v45, 1e-05
  %v48 = vadd.f32 %v46, 1e-05
  %v49 = vrsqrt.pop %v47
  %v50 = vrsqrt.pop %v48
  %v51 = vmul.f32 %v35, %v49
  %v52 = vmul.f32 %v36, %v50
  %v54 = vlaneseq
  %v55 = vshrl.u32 %v54, 7
  %v56 = vsub.s32 0, %v55
  %v57 = vrot.slane %v22, %v56
  %v59 = vmul.f32 %v51, %v57
  %v60 = vmul.f32 %v52, %v57
  %v62 = vlaneseq
  %v63 = vshrl.u32 %v62, 7
  %v64 = vsub.s32 0, %v63
  %v65 = vrot.slane %v23, %v64
  %v67 = vadd.f32 %v59, %v65
  %v68 = vadd.f32 %v60, %v65
  %v69 = vld [vmem:[%s3] sm:$0xff]
  %v70 = vld [vmem:[%s3 + $0x8] sm:$0xff]
  %v71 = vld [vmem:[%s3 + $0x10] sm:$0xff]
  %v72 = vld [vmem:[%s3 + $0x18] sm:$0xff]
  %v73 = vld [vmem:[%s4] sm:$0x1]
  %v75 = vlaneseq
  %v76 = vshrl.u32 %v75, 7
  %v77 = vsub.s32 0, %v76
  %v78 = vrot.slane %v73, %v77
  %v81 = vsel %vm24, %v67, 0
  %v84 = vsel %vm24, %v68, 0
  %86 = vmatprep.subr.mxu0 0.0
  %87 = vmatpush1.msra.mxu0 0.0
  %88 = vmatprep.subr.mxu0 0.0
  %89 = vmatpush1.msra.mxu0 0.0
  %90 = vmatprep.subr.mxu0 0.0
  %91 = vmatpush1.msra.mxu0 0.0
  %92 = vmatprep.subr.mxu0 0.0
  %93 = vmatpush1.msra.mxu0 0.0
  %94 = vmatprep.subr.mxu0 0.0
  %95 = vmatpush1.msra.mxu0 0.0
  %96 = vmatprep.subr.mxu0 0.0
  %97 = vmatpush1.msra.mxu0 0.0
  %98 = vmatprep.subr.mxu0 0.0
  %99 = vmatpush1.msra.mxu0 0.0
  %100 = vmatprep.subr.mxu0 0.0
  %101 = vmatpush1.msra.mxu0 0.0
  %102 = vmatprep.subr.mxu0 0.0
  %103 = vmatpush1.msra.mxu0 0.0
  %104 = vmatprep.subr.mxu0 0.0
  %105 = vmatpush1.msra.mxu0 0.0
  %106 = vmatprep.subr.mxu0 0.0
  %107 = vmatpush1.msra.mxu0 0.0
  %108 = vmatprep.subr.mxu0 0.0
  %109 = vmatpush1.msra.mxu0 0.0
  %110 = vmatprep.subr.mxu0 0.0
  %111 = vmatpush1.msra.mxu0 %v72
  %112 = vmatprep.subr.mxu0 0.0
  %113 = vmatpush1.msra.mxu0 %v71
  %114 = vmatprep.subr.mxu0 0.0
  %115 = vmatpush1.msra.mxu0 %v70
  %116 = vmatprep.subr.mxu0 0.0
  %117 = vmatpush1.msra.mxu0 %v69
  %118 = vmatprep.subr.mxu0 0.0
  %119 = vmatpush2.msra.mxu0 0.0
  %120 = vmatprep.subr.mxu0 0.0
  %121 = vmatpush2.msra.mxu0 0.0
  %122 = vmatprep.subr.mxu0 0.0
  %123 = vmatpush2.msra.mxu0 0.0
  %124 = vmatprep.subr.mxu0 0.0
  %125 = vmatpush2.msra.mxu0 0.0
  %126 = vmatprep.subr.mxu0 0.0
  %127 = vmatpush2.msra.mxu0 0.0
  %128 = vmatprep.subr.mxu0 0.0
  %129 = vmatpush2.msra.mxu0 0.0
  %130 = vmatprep.subr.mxu0 0.0
  %131 = vmatpush2.msra.mxu0 0.0
  %132 = vmatprep.subr.mxu0 0.0
  %133 = vmatpush2.msra.mxu0 0.0
  %134 = vmatprep.subr.mxu0 0.0
  %135 = vmatpush2.msra.mxu0 0.0
  %136 = vmatprep.subr.mxu0 0.0
  %137 = vmatpush2.msra.mxu0 0.0
  %138 = vmatprep.subr.mxu0 0.0
  %139 = vmatpush2.msra.mxu0 0.0
  %140 = vmatprep.subr.mxu0 0.0
  %141 = vmatpush2.msra.mxu0 0.0
  %142 = vmatprep.subr.mxu0 0.0
  %143 = vmatpush2.msra.mxu0 0.0
  %144 = vmatprep.subr.mxu0 0.0
  %145 = vmatpush2.msra.mxu0 0.0
  %146 = vmatprep.subr.mxu0 0.0
  %147 = vmatpush2.msra.mxu0 0.0
  %148 = vmatprep.subr.mxu0 0.0
  %149 = vmatpush2.msra.mxu0 0.0
  %150 = vmatprep.mubr.f32.mxu0 0.0
  %151 = vmatmul.mubr.f32.gmra.mxu0 %v81
  %v152 = vpop.f32.mrf.mxu0
  %v153 = vadd.f32 %v78, %v152
  %v154 = vpop.f32.mrf.mxu0
  %155 = vmatprep.mubr.f32.mxu0 0.0
  %156 = vmatmul.mubr.f32.gmra.mxu0 %v84
  %v157 = vpop.f32.mrf.mxu0
  %v158 = vadd.f32 %v78, %v157
  %v159 = vpop.f32.mrf.mxu0
  %160 = vdwg.mxu0
  %vm161 = vcmask 785408
  %162 = vst.msk [vmem:[%s5] sm:$0xff] %vm161, %v153
  %vm163 = vcmask 779264
  %164 = vst.msk [vmem:[%s5 + $0x8] sm:$0x3] %vm163, %v158
  // Predicated region
  $region22: #{_lambda_.44} parent=0 // pred_check
    _
  $region23: #{_lambda_.44} parent=0 // pred_check_branch
    %166 = sbr.rel (0) target = $region25
  $region24: #{_lambda_.44} parent=0 // pred_region
    _
  $region25: #{_lambda_.44} parent=0 // pred_fallthru
    _
  // Predicated region
  $region26: #{_lambda_.44} parent=0 // pred_check
    _
  $region27: #{_lambda_.44} parent=0 // pred_check_branch
    %168 = sbr.rel (0) target = $region29
  $region28: #{_lambda_.44} parent=0 // pred_region
    _
  $region29: #{_lambda_.44} parent=0 // pred_fallthru
    _

// kernel: _lambda_.45
$region0: #{_lambda_.45}
  #allocation0 [shape = 'u32[]', space=smem, size = 0x4, offset = 0x4, fixed_abs, tag = 'smem constant byte address 0x4 - core index']
  #allocation1 [shape = 'u32[144,128]{1,0:T(1,128)}', space=vmem, size = 0x12000, scoped, tag = 'internal scratch']
  %s0 = inlined_call_operand.vmem [shape: f32[8,5,8], index: 0, kind: input, shape index: {}]
  %s1 = inlined_call_operand.vmem [shape: f32[8,5,8], index: 1, kind: input, shape index: {}]
  %s2 = inlined_call_operand.vmem [shape: f32[8,5,8], index: 2, kind: input, shape index: {}]
  %s3 = inlined_call_operand.vmem [shape: f32[8,5,8], index: 3, kind: output, shape index: {}]
  %s4 = sld [smem:[#allocation0]]
  $region45: #{_lambda_.45} parent=0
    _
  %s6 = ssub.s32 1, %s4
  %s7 = scalar_select 0, %s6, %s4
  loop: start=0, step=1, limit=10
  $region2: #{_lambda_.45} parent=0 // loop_pre_header
    _
  $region3: #{_lambda_.45} parent=0 // loop_header
    %s9 = sphi 0, %s13
    %p10 = scmp.ge.s32.totalorder %s9, 10
    %s19 = sphi 0, %s21
    %s22 = sphi 0, %s19
    %s23 = sphi 0, %s22
    %s39 = sphi 0, %s23
    %s45 = sphi 0, %s47
    %s48 = sphi 0, %s45
    %s49 = sphi 0, %s48
    %s65 = sphi 0, %s49
    %s71 = sphi 0, %s73
    %s74 = sphi 0, %s71
    %s75 = sphi 0, %s74
    %s91 = sphi 0, %s75
    %s97 = sphi 0, %s99
    %s100 = sphi 0, %s97
    %s101 = sphi 0, %s100
    %s117 = sphi 0, %s101
  $region4: #{_lambda_.45} parent=0 // loop_header_branch
    %12 = sbr.rel (%p10) target = $region8
  $region5: #{_lambda_.45} parent=0 // loop_body
    %s14 = ssub.s32 %s9, 1
    %s15 = ssub.s32 %s9, 2
    %s16 = sadd.s32 %s9, 1
    %s17 = ssub.s32 %s9, %s16
    %p18 = scmp.eq.s32.totalorder %s17, 0
    %s20 = sadd.s32 %s19, 1
    %s21 = scalar_select %p18, %s19, %s20
    %p24 = pneg %p18
    %p25 = scmp.eq.s32.totalorder %s9, 7
    %p26 = por %p24, %p25
    %p27 = scmp.ne.s32.totalorder %s19, %s22
    %p28 = scmp.eq.s32.totalorder %s9, 0
    %p29 = por %p27, %p28
    %p30 = scmp.ne.s32.totalorder %s19, %s22
    %p31 = scmp.eq.s32.totalorder %s14, 7
    %p32 = por %p30, %p31
    %p33 = scmp.ne.s32.totalorder %s22, %s23
    %p34 = scmp.eq.s32.totalorder %s14, 0
    %p35 = por %p33, %p34
    %p36 = scmp.ne.s32.totalorder %s22, %s23
    %p37 = scmp.eq.s32.totalorder %s15, 7
    %p38 = por %p36, %p37
    %p40 = scmp.ne.s32.totalorder %s23, %s39
    %p41 = scmp.eq.s32.totalorder %s15, 0
    %p42 = por %p40, %p41
    %s43 = ssub.s32 %s9, %s16
    %p44 = scmp.eq.s32.totalorder %s43, 0
    %s46 = sadd.s32 %s45, 1
    %s47 = scalar_select %p44, %s45, %s46
    %p50 = pneg %p44
    %p51 = scmp.eq.s32.totalorder %s9, 7
    %p52 = por %p50, %p51
    %p53 = scmp.ne.s32.totalorder %s45, %s48
    %p54 = scmp.eq.s32.totalorder %s9, 0
    %p55 = por %p53, %p54
    %p56 = scmp.ne.s32.totalorder %s45, %s48
    %p57 = scmp.eq.s32.totalorder %s14, 7
    %p58 = por %p56, %p57
    %p59 = scmp.ne.s32.totalorder %s48, %s49
    %p60 = scmp.eq.s32.totalorder %s14, 0
    %p61 = por %p59, %p60
    %p62 = scmp.ne.s32.totalorder %s48, %s49
    %p63 = scmp.eq.s32.totalorder %s15, 7
    %p64 = por %p62, %p63
    %p66 = scmp.ne.s32.totalorder %s49, %s65
    %p67 = scmp.eq.s32.totalorder %s15, 0
    %p68 = por %p66, %p67
    %s69 = ssub.s32 %s9, %s16
    %p70 = scmp.eq.s32.totalorder %s69, 0
    %s72 = sadd.s32 %s71, 1
    %s73 = scalar_select %p70, %s71, %s72
    %p76 = pneg %p70
    %p77 = scmp.eq.s32.totalorder %s9, 7
    %p78 = por %p76, %p77
    %p79 = scmp.ne.s32.totalorder %s71, %s74
    %p80 = scmp.eq.s32.totalorder %s9, 0
    %p81 = por %p79, %p80
    %p82 = scmp.ne.s32.totalorder %s71, %s74
    %p83 = scmp.eq.s32.totalorder %s14, 7
    %p84 = por %p82, %p83
    %p85 = scmp.ne.s32.totalorder %s74, %s75
    %p86 = scmp.eq.s32.totalorder %s14, 0
    %p87 = por %p85, %p86
    %p88 = scmp.ne.s32.totalorder %s74, %s75
    %p89 = scmp.eq.s32.totalorder %s15, 7
    %p90 = por %p88, %p89
    %p92 = scmp.ne.s32.totalorder %s75, %s91
    %p93 = scmp.eq.s32.totalorder %s15, 0
    %p94 = por %p92, %p93
    %s95 = ssub.s32 %s9, %s16
    %p96 = scmp.eq.s32.totalorder %s95, 0
    %s98 = sadd.s32 %s97, 1
    %s99 = scalar_select %p96, %s97, %s98
    %p102 = pneg %p96
    %p103 = scmp.eq.s32.totalorder %s9, 7
    %p104 = por %p102, %p103
    %p105 = scmp.ne.s32.totalorder %s97, %s100
    %p106 = scmp.eq.s32.totalorder %s9, 0
    %p107 = por %p105, %p106
    %p108 = scmp.ne.s32.totalorder %s97, %s100
    %p109 = scmp.eq.s32.totalorder %s14, 7
    %p110 = por %p108, %p109
    %p111 = scmp.ne.s32.totalorder %s100, %s101
    %p112 = scmp.eq.s32.totalorder %s14, 0
    %p113 = por %p111, %p112
    %p114 = scmp.ne.s32.totalorder %s100, %s101
    %p115 = scmp.eq.s32.totalorder %s15, 7
    %p116 = por %p114, %p115
    %p118 = scmp.ne.s32.totalorder %s101, %s117
    %p119 = scmp.eq.s32.totalorder %s15, 0
    %p120 = por %p118, %p119
    %p121 = scmp.le.s32.totalorder 1, %s9
    %p122 = scmp.lt.s32.totalorder %s9, 9
    %p123 = pnand %p121, %p122
    %p124 = pneg %p123
    // Predicated region
    $region9: #{_lambda_.45} parent=5 // pred_check
      _
    $region10: #{_lambda_.45} parent=5 // pred_check_branch
      %126 = sbr.rel (%p123) target = $region12
    $region11: #{_lambda_.45} parent=5 // pred_region
      %s127 = ssub.s32 %s9, 1
    $region12: #{_lambda_.45} parent=5 // pred_fallthru
      _
    %p128 = scmp.lt.s32.totalorder %s9, 8
    // Predicated region
    $region13: #{_lambda_.45} parent=5 // pred_check
      %p129 = pneg %p128
    $region14: #{_lambda_.45} parent=5 // pred_check_branch
      %131 = sbr.rel (%p129) target = $region16
    $region15: #{_lambda_.45} parent=5 // pred_region
      // Predicated region
      $region17: #{_lambda_.45} parent=15 // pred_check
        %p132 = pneg %p29
      $region18: #{_lambda_.45} parent=15 // pred_check_branch
        %134 = sbr.rel (%p132) target = $region20
      $region19: #{_lambda_.45} parent=15 // pred_region
        %p135 = scmp.lt.s32.totalorder %s9, 7
        %s136 = scalar_select %p135, %s9, 7
        %s137 = smul.addr %s136, 8
        %s138 = scalar_lea.vmem %s0, %s137
      $region20: #{_lambda_.45} parent=15 // pred_fallthru
        _
      // Predicated region
      $region21: #{_lambda_.45} parent=15 // pred_check
        %p139 = pneg %p55
      $region22: #{_lambda_.45} parent=15 // pred_check_branch
        %141 = sbr.rel (%p139) target = $region24
      $region23: #{_lambda_.45} parent=15 // pred_region
        %p142 = scmp.lt.s32.totalorder %s9, 7
        %s143 = scalar_select %p142, %s9, 7
        %s144 = smul.addr %s143, 8
        %s145 = scalar_lea.vmem %s1, %s144
      $region24: #{_lambda_.45} parent=15 // pred_fallthru
        _
      // Predicated region
      $region25: #{_lambda_.45} parent=15 // pred_check
        %p146 = pneg %p81
      $region26: #{_lambda_.45} parent=15 // pred_check_branch
        %148 = sbr.rel (%p146) target = $region28
      $region27: #{_lambda_.45} parent=15 // pred_region
        %p149 = scmp.lt.s32.totalorder %s9, 7
        %s150 = scalar_select %p149, %s9, 7
        %s151 = smul.addr %s150, 8
        %s152 = scalar_lea.vmem %s2, %s151
      $region28: #{_lambda_.45} parent=15 // pred_fallthru
        _
    $region16: #{_lambda_.45} parent=5 // pred_fallthru
      _
    %p153 = scmp.le.s32.totalorder 1, %s9
    %p154 = scmp.lt.s32.totalorder %s9, 9
    %p155 = pnand %p153, %p154
    %p156 = pneg %p155
    // Predicated region
    $region29: #{_lambda_.45} parent=5 // pred_check
      _
    $region30: #{_lambda_.45} parent=5 // pred_check_branch
      %158 = sbr.rel (%p155) target = $region32
    $region31: #{_lambda_.45} parent=5 // pred_region
      %s159 = ssub.s32 %s9, 1
      %p160 = scmp.lt.s32.totalorder %s14, 7
      %s161 = scalar_select %p160, %s14, 7
      %s162 = smul.addr %s161, 8
      %s163 = scalar_lea.vmem %s0, %s162
      %p164 = pneg %p35
      %p165 = pneg %p32
      %p166 = scmp.lt.s32.totalorder %s14, 7
      %s167 = scalar_select %p166, %s14, 7
      %s168 = smul.addr %s167, 8
      %s169 = scalar_lea.vmem %s1, %s168
      %p170 = pneg %p61
      %p171 = pneg %p58
      %p172 = scmp.lt.s32.totalorder %s14, 7
      %s173 = scalar_select %p172, %s14, 7
      %s174 = smul.addr %s173, 8
      %s175 = scalar_lea.vmem %s2, %s174
      %p176 = pneg %p87
      %p177 = pneg %p84
      %p178 = pneg %p113
      %p179 = pneg %p110
      %p180 = scmp.lt.s32.totalorder %s14, 7
      %s181 = scalar_select %p180, %s14, 7
      %s182 = smul.addr %s181, 8
      %s183 = scalar_lea.vmem %s3, %s182
      %p184 = scmp.lt.s32.totalorder %s14, 7
      %s185 = scalar_select %p184, %s14, 7
      %s186 = smul.addr %s185, 8
      %s187 = scalar_lea.vmem %s0, %s186
      %p188 = scmp.lt.s32.totalorder %s14, 7
      %s189 = scalar_select %p188, %s14, 7
      %s190 = smul.addr %s189, 8
      %s191 = scalar_lea.vmem %s1, %s190
      %p192 = scmp.lt.s32.totalorder %s14, 7
      %s193 = scalar_select %p192, %s14, 7
      %s194 = smul.addr %s193, 8
      %s195 = scalar_lea.vmem %s2, %s194
      %p196 = scmp.lt.s32.totalorder %s14, 7
      %s197 = scalar_select %p196, %s14, 7
      %s198 = smul.addr %s197, 8
      %s199 = scalar_lea.vmem %s3, %s198
      %v200 = vld [vmem:[%s187] sm:$0x1f]
      %v201 = vld [vmem:[%s191] sm:$0x1f]
      %v202 = vld [vmem:[%s195] sm:$0x1f]
      %vm203 = vcmask 64512
      %v205 = vsel %vm203, %v200, 0
      %v208 = vsel %vm203, %v201, 0
      %210 = vmatprep.subr.mxu0 0.0
      %211 = vmatpush1.xpose.msra.mxu0 0.0
      %212 = vmatprep.subr.mxu0 0.0
      %213 = vmatpush1.xpose.msra.mxu0 0.0
      %214 = vmatprep.subr.mxu0 0.0
      %215 = vmatpush1.xpose.msra.mxu0 0.0
      %216 = vmatprep.subr.mxu0 0.0
      %217 = vmatpush1.xpose.msra.mxu0 0.0
      %218 = vmatprep.subr.mxu0 0.0
      %219 = vmatpush1.xpose.msra.mxu0 0.0
      %220 = vmatprep.subr.mxu0 0.0
      %221 = vmatpush1.xpose.msra.mxu0 0.0
      %222 = vmatprep.subr.mxu0 0.0
      %223 = vmatpush1.xpose.msra.mxu0 0.0
      %224 = vmatprep.subr.mxu0 0.0
      %225 = vmatpush1.xpose.msra.mxu0 0.0
      %226 = vmatprep.subr.mxu0 0.0
      %227 = vmatpush1.xpose.msra.mxu0 0.0
      %228 = vmatprep.subr.mxu0 0.0
      %229 = vmatpush1.xpose.msra.mxu0 0.0
      %230 = vmatprep.subr.mxu0 0.0
      %231 = vmatpush1.xpose.msra.mxu0 0.0
      %232 = vmatprep.subr.mxu0 0.0
      %233 = vmatpush1.xpose.msra.mxu0 0.0
      %234 = vmatprep.subr.mxu0 0.0
      %235 = vmatpush1.xpose.msra.mxu0 0.0
      %236 = vmatprep.subr.mxu0 0.0
      %237 = vmatpush1.xpose.msra.mxu0 0.0
      %238 = vmatprep.subr.mxu0 0.0
      %239 = vmatpush1.xpose.msra.mxu0 0.0
      %240 = vmatprep.subr.mxu0 0.0
      %241 = vmatpush1.xpose.msra.mxu0 %v208
      %242 = vmatprep.subr.mxu0 0.0
      %243 = vmatpush2.xpose.msra.mxu0 0.0
      %244 = vmatprep.subr.mxu0 0.0
      %245 = vmatpush2.xpose.msra.mxu0 0.0
      %246 = vmatprep.subr.mxu0 0.0
      %247 = vmatpush2.xpose.msra.mxu0 0.0
      %248 = vmatprep.subr.mxu0 0.0
      %249 = vmatpush2.xpose.msra.mxu0 0.0
      %250 = vmatprep.subr.mxu0 0.0
      %251 = vmatpush2.xpose.msra.mxu0 0.0
      %252 = vmatprep.subr.mxu0 0.0
      %253 = vmatpush2.xpose.msra.mxu0 0.0
      %254 = vmatprep.subr.mxu0 0.0
      %255 = vmatpush2.xpose.msra.mxu0 0.0
      %256 = vmatprep.subr.mxu0 0.0
      %257 = vmatpush2.xpose.msra.mxu0 0.0
      %258 = vmatprep.subr.mxu0 0.0
      %259 = vmatpush2.xpose.msra.mxu0 0.0
      %260 = vmatprep.subr.mxu0 0.0
      %261 = vmatpush2.xpose.msra.mxu0 0.0
      %262 = vmatprep.subr.mxu0 0.0
      %263 = vmatpush2.xpose.msra.mxu0 0.0
      %264 = vmatprep.subr.mxu0 0.0
      %265 = vmatpush2.xpose.msra.mxu0 0.0
      %266 = vmatprep.subr.mxu0 0.0
      %267 = vmatpush2.xpose.msra.mxu0 0.0
      %268 = vmatprep.subr.mxu0 0.0
      %269 = vmatpush2.xpose.msra.mxu0 0.0
      %270 = vmatprep.subr.mxu0 0.0
      %271 = vmatpush2.xpose.msra.mxu0 0.0
      %272 = vmatprep.subr.mxu0 0.0
      %273 = vmatpush2.xpose.msra.mxu0 0.0
      %274 = vmatprep.mubr.f32.mxu0 0.0
      %275 = vmatmul.mubr.f32.gmra.mxu0 %v205
      %v276 = vpop.f32.mrf.mxu0
      %v277 = vadd.f32 0.0, %v276
      %v278 = vpop.f32.mrf.mxu0
      %279 = vdwg.mxu0
      %v280 = vmul.f32 %v277, 0.35355338
      %vm281 = vcmask 36864
      %v282 = vsel %vm281, %v280, -inf
      %283 = vmax.xlane.f32.xlu0 %v282
      %v284 = vpop.xlane.xlu0 %283
      %v285 = vsub.f32 %v280, %v284
      %v286 = vmul.f32 %v285, 1.442695
      %v287 = vpow.pop %v286
      %v288 = vsel %vm281, %v287, 0.0
      %289 = vadd.xlane.f32.xlu0 %v288
      %v290 = vpop.xlane.xlu0 %289
      %v291 = vrcp.pop %v290
      %v292 = vmul.f32 %v287, %v291
      %vm293 = vcmask 39936
      %v295 = vsel %vm293, %v292, 0
      %vm297 = vcmask 1044480
      %v299 = vsel %vm297, %v202, 0
      %301 = vmatprep.subr.mxu0 0.0
      %302 = vmatpush1.msra.mxu0 0.0
      %303 = vmatprep.subr.mxu0 0.0
      %304 = vmatpush1.msra.mxu0 0.0
      %305 = vmatprep.subr.mxu0 0.0
      %306 = vmatpush1.msra.mxu0 0.0
      %307 = vmatprep.subr.mxu0 0.0
      %308 = vmatpush1.msra.mxu0 0.0
      %309 = vmatprep.subr.mxu0 0.0
      %310 = vmatpush1.msra.mxu0 0.0
      %311 = vmatprep.subr.mxu0 0.0
      %312 = vmatpush1.msra.mxu0 0.0
      %313 = vmatprep.subr.mxu0 0.0
      %314 = vmatpush1.msra.mxu0 0.0
      %315 = vmatprep.subr.mxu0 0.0
      %316 = vmatpush1.msra.mxu0 0.0
      %317 = vmatprep.subr.mxu0 0.0
      %318 = vmatpush1.msra.mxu0 0.0
      %319 = vmatprep.subr.mxu0 0.0
      %320 = vmatpush1.msra.mxu0 0.0
      %321 = vmatprep.subr.mxu0 0.0
      %322 = vmatpush1.msra.mxu0 0.0
      %323 = vmatprep.subr.mxu0 0.0
      %324 = vmatpush1.msra.mxu0 0.0
      %325 = vmatprep.subr.mxu0 0.0
      %326 = vmatpush1.msra.mxu0 0.0
      %327 = vmatprep.subr.mxu0 0.0
      %328 = vmatpush1.msra.mxu0 0.0
      %329 = vmatprep.subr.mxu0 0.0
      %330 = vmatpush1.msra.mxu0 0.0
      %331 = vmatprep.subr.mxu0 0.0
      %332 = vmatpush1.msra.mxu0 %v299
      %333 = vmatprep.subr.mxu0 0.0
      %334 = vmatpush2.msra.mxu0 0.0
      %335 = vmatprep.subr.mxu0 0.0
      %336 = vmatpush2.msra.mxu0 0.0
      %337 = vmatprep.subr.mxu0 0.0
      %338 = vmatpush2.msra.mxu0 0.0
      %339 = vmatprep.subr.mxu0 0.0
      %340 = vmatpush2.msra.mxu0 0.0
      %341 = vmatprep.subr.mxu0 0.0
      %342 = vmatpush2.msra.mxu0 0.0
      %343 = vmatprep.subr.mxu0 0.0
      %344 = vmatpush2.msra.mxu0 0.0
      %345 = vmatprep.subr.mxu0 0.0
      %346 = vmatpush2.msra.mxu0 0.0
      %347 = vmatprep.subr.mxu0 0.0
      %348 = vmatpush2.msra.mxu0 0.0
      %349 = vmatprep.subr.mxu0 0.0
      %350 = vmatpush2.msra.mxu0 0.0
      %351 = vmatprep.subr.mxu0 0.0
      %352 = vmatpush2.msra.mxu0 0.0
      %353 = vmatprep.subr.mxu0 0.0
      %354 = vmatpush2.msra.mxu0 0.0
      %355 = vmatprep.subr.mxu0 0.0
      %356 = vmatpush2.msra.mxu0 0.0
      %357 = vmatprep.subr.mxu0 0.0
      %358 = vmatpush2.msra.mxu0 0.0
      %359 = vmatprep.subr.mxu0 0.0
      %360 = vmatpush2.msra.mxu0 0.0
      %361 = vmatprep.subr.mxu0 0.0
      %362 = vmatpush2.msra.mxu0 0.0
      %363 = vmatprep.subr.mxu0 0.0
      %364 = vmatpush2.msra.mxu0 0.0
      %365 = vmatprep.mubr.f32.mxu0 0.0
      %366 = vmatmul.mubr.f32.gmra.mxu0 %v295
      %v367 = vpop.f32.mrf.mxu0
      %v368 = vadd.f32 0.0, %v367
      %v369 = vpop.f32.mrf.mxu0
      %370 = vdwg.mxu0
      %vm371 = vcmask 61440
      %372 = vst.msk [vmem:[%s199] sm:$0x1f] %vm371, %v368
      %p373 = scmp.lt.s32.totalorder %s14, 7
      %s374 = scalar_select %p373, %s14, 7
      %s375 = smul.addr %s374, 8
      %s376 = scalar_lea.vmem %s3, %s375
      // Predicated region
      $region33: #{_lambda_.45} parent=31 // pred_check
        %p377 = pneg %p110
      $region34: #{_lambda_.45} parent=31 // pred_check_branch
        %379 = sbr.rel (%p377) target = $region36
      $region35: #{_lambda_.45} parent=31 // pred_region
        _
      $region36: #{_lambda_.45} parent=31 // pred_fallthru
        _
    $region32: #{_lambda_.45} parent=5 // pred_fallthru
      _
    %p380 = scmp.le.s32.totalorder 2, %s9
    // Predicated region
    $region37: #{_lambda_.45} parent=5 // pred_check
      %p381 = pneg %p380
    $region38: #{_lambda_.45} parent=5 // pred_check_branch
      %383 = sbr.rel (%p381) target = $region40
    $region39: #{_lambda_.45} parent=5 // pred_region
      %s384 = ssub.s32 %s9, 2
      // Predicated region
      $region41: #{_lambda_.45} parent=39 // pred_check
        %p385 = pneg %p116
      $region42: #{_lambda_.45} parent=39 // pred_check_branch
        %387 = sbr.rel (%p385) target = $region44
      $region43: #{_lambda_.45} parent=39 // pred_region
        %p388 = scmp.lt.s32.totalorder %s15, 7
        %s389 = scalar_select %p388, %s15, 7
        %s390 = smul.addr %s389, 8
        %s391 = scalar_lea.vmem %s3, %s390
      $region44: #{_lambda_.45} parent=39 // pred_fallthru
        _
    $region40: #{_lambda_.45} parent=5 // pred_fallthru
      _
  $region6: #{_lambda_.45} parent=0 // loop_footer
    %s13 = sadd.s32 1, %s9
  $region7: #{_lambda_.45} parent=0 // loop_footer_branch
    %8 = sbr.rel target = $region3
  $region8: #{_lambda_.45} parent=0 // loop_exit
    _

// kernel: _lambda_.46
$region0: #{_lambda_.46}
  #allocation0 [shape = 'u32[]', space=smem, size = 0x4, offset = 0x4, fixed_abs, tag = 'smem constant byte address 0x4 - core index']
  #allocation1 [shape = 'u32[144,128]{1,0:T(1,128)}', space=vmem, size = 0x12000, scoped, tag = 'internal scratch']
  #allocation2 [shape = 'f32[10,32]{1,0:T(8,128)}', space=vmem, size = 0x2000, scoped, tag = 'scratch operand']
  %s0 = inlined_call_operand.vmem [shape: f32[10,32], index: 0, kind: input, shape index: {}]
  %s1 = inlined_call_operand.vmem [shape: f32[32,32], index: 1, kind: input, shape index: {}]
  %s2 = inlined_call_operand.vmem [shape: f32[1,32], index: 2, kind: input, shape index: {}]
  %s3 = inlined_call_operand.vmem [shape: f32[10,32], index: 3, kind: input, shape index: {}]
  %s4 = inlined_call_operand.vmem [shape: f32[10,32], index: 4, kind: output, shape index: {}]
  %s5 = sld [smem:[#allocation0]]
  $region34: #{_lambda_.46} parent=0
    _
  %s7 = ssub.s32 1, %s5
  %s8 = scalar_select 0, %s7, %s5
  // Predicated region
  $region2: #{_lambda_.46} parent=0 // pred_check
    _
  $region3: #{_lambda_.46} parent=0 // pred_check_branch
    %10 = sbr.rel (0) target = $region5
  $region4: #{_lambda_.46} parent=0 // pred_region
    _
  $region5: #{_lambda_.46} parent=0 // pred_fallthru
    _
  // Predicated region
  $region6: #{_lambda_.46} parent=0 // pred_check
    _
  $region7: #{_lambda_.46} parent=0 // pred_check_branch
    %12 = sbr.rel (0) target = $region9
  $region8: #{_lambda_.46} parent=0 // pred_region
    _
  $region9: #{_lambda_.46} parent=0 // pred_fallthru
    _
  // Predicated region
  $region10: #{_lambda_.46} parent=0 // pred_check
    _
  $region11: #{_lambda_.46} parent=0 // pred_check_branch
    %14 = sbr.rel (0) target = $region13
  $region12: #{_lambda_.46} parent=0 // pred_region
    _
  $region13: #{_lambda_.46} parent=0 // pred_fallthru
    _
  // Predicated region
  $region14: #{_lambda_.46} parent=0 // pred_check
    _
  $region15: #{_lambda_.46} parent=0 // pred_check_branch
    %16 = sbr.rel (0) target = $region17
  $region16: #{_lambda_.46} parent=0 // pred_region
    _
  $region17: #{_lambda_.46} parent=0 // pred_fallthru
    _
  %p17 = scmp.eq.s32.totalorder 0, 0
  // Predicated region
  $region18: #{_lambda_.46} parent=0 // pred_check
    %p18 = pneg %p17
  $region19: #{_lambda_.46} parent=0 // pred_check_branch
    %20 = sbr.rel (%p18) target = $region21
  $region20: #{_lambda_.46} parent=0 // pred_region
    %vm21 = vcmask 261120
    %22 = vst.msk [vmem:[#allocation2] sm:$0xff] %vm21, 0.0
    %vm23 = vcmask 254976
    %24 = vst.msk [vmem:[#allocation2 + $0x8] sm:$0x3] %vm23, 0.0
  $region21: #{_lambda_.46} parent=0 // pred_fallthru
    _
  %v25 = vld [vmem:[#allocation2] sm:$0xff]
  %v26 = vld [vmem:[#allocation2 + $0x8] sm:$0x3]
  %v27 = vld [vmem:[%s0] sm:$0xff]
  %v28 = vld [vmem:[%s0 + $0x8] sm:$0x3]
  %v29 = vld [vmem:[%s1] sm:$0xff]
  %v30 = vld [vmem:[%s1 + $0x8] sm:$0xff]
  %v31 = vld [vmem:[%s1 + $0x10] sm:$0xff]
  %v32 = vld [vmem:[%s1 + $0x18] sm:$0xff]
  %vm33 = vcmask 261120
  %v35 = vsel %vm33, %v27, 0
  %v38 = vsel %vm33, %v28, 0
  %40 = vmatprep.subr.mxu0 0.0
  %41 = vmatpush1.msra.mxu0 0.0
  %42 = vmatprep.subr.mxu0 0.0
  %43 = vmatpush1.msra.mxu0 0.0
  %44 = vmatprep.subr.mxu0 0.0
  %45 = vmatpush1.msra.mxu0 0.0
  %46 = vmatprep.subr.mxu0 0.0
  %47 = vmatpush1.msra.mxu0 0.0
  %48 = vmatprep.subr.mxu0 0.0
  %49 = vmatpush1.msra.mxu0 0.0
  %50 = vmatprep.subr.mxu0 0.0
  %51 = vmatpush1.msra.mxu0 0.0
  %52 = vmatprep.subr.mxu0 0.0
  %53 = vmatpush1.msra.mxu0 0.0
  %54 = vmatprep.subr.mxu0 0.0
  %55 = vmatpush1.msra.mxu0 0.0
  %56 = vmatprep.subr.mxu0 0.0
  %57 = vmatpush1.msra.mxu0 0.0
  %58 = vmatprep.subr.mxu0 0.0
  %59 = vmatpush1.msra.mxu0 0.0
  %60 = vmatprep.subr.mxu0 0.0
  %61 = vmatpush1.msra.mxu0 0.0
  %62 = vmatprep.subr.mxu0 0.0
  %63 = vmatpush1.msra.mxu0 0.0
  %64 = vmatprep.subr.mxu0 0.0
  %65 = vmatpush1.msra.mxu0 %v32
  %66 = vmatprep.subr.mxu0 0.0
  %67 = vmatpush1.msra.mxu0 %v31
  %68 = vmatprep.subr.mxu0 0.0
  %69 = vmatpush1.msra.mxu0 %v30
  %70 = vmatprep.subr.mxu0 0.0
  %71 = vmatpush1.msra.mxu0 %v29
  %72 = vmatprep.subr.mxu0 0.0
  %73 = vmatpush2.msra.mxu0 0.0
  %74 = vmatprep.subr.mxu0 0.0
  %75 = vmatpush2.msra.mxu0 0.0
  %76 = vmatprep.subr.mxu0 0.0
  %77 = vmatpush2.msra.mxu0 0.0
  %78 = vmatprep.subr.mxu0 0.0
  %79 = vmatpush2.msra.mxu0 0.0
  %80 = vmatprep.subr.mxu0 0.0
  %81 = vmatpush2.msra.mxu0 0.0
  %82 = vmatprep.subr.mxu0 0.0
  %83 = vmatpush2.msra.mxu0 0.0
  %84 = vmatprep.subr.mxu0 0.0
  %85 = vmatpush2.msra.mxu0 0.0
  %86 = vmatprep.subr.mxu0 0.0
  %87 = vmatpush2.msra.mxu0 0.0
  %88 = vmatprep.subr.mxu0 0.0
  %89 = vmatpush2.msra.mxu0 0.0
  %90 = vmatprep.subr.mxu0 0.0
  %91 = vmatpush2.msra.mxu0 0.0
  %92 = vmatprep.subr.mxu0 0.0
  %93 = vmatpush2.msra.mxu0 0.0
  %94 = vmatprep.subr.mxu0 0.0
  %95 = vmatpush2.msra.mxu0 0.0
  %96 = vmatprep.subr.mxu0 0.0
  %97 = vmatpush2.msra.mxu0 0.0
  %98 = vmatprep.subr.mxu0 0.0
  %99 = vmatpush2.msra.mxu0 0.0
  %100 = vmatprep.subr.mxu0 0.0
  %101 = vmatpush2.msra.mxu0 0.0
  %102 = vmatprep.subr.mxu0 0.0
  %103 = vmatpush2.msra.mxu0 0.0
  %104 = vmatprep.mubr.f32.mxu0 0.0
  %105 = vmatmul.mubr.f32.gmra.mxu0 %v35
  %v106 = vpop.f32.mrf.mxu0
  %v107 = vadd.f32 0.0, %v106
  %v108 = vpop.f32.mrf.mxu0
  %109 = vmatprep.mubr.f32.mxu0 0.0
  %110 = vmatmul.mubr.f32.gmra.mxu0 %v38
  %v111 = vpop.f32.mrf.mxu0
  %v112 = vadd.f32 0.0, %v111
  %v113 = vpop.f32.mrf.mxu0
  %114 = vdwg.mxu0
  %v115 = vadd.f32 %v25, %v107
  %v116 = vadd.f32 %v26, %v112
  %117 = vst.msk [vmem:[#allocation2] sm:$0xff] %vm33, %v115
  %vm118 = vcmask 254976
  %119 = vst.msk [vmem:[#allocation2 + $0x8] sm:$0x3] %vm118, %v116
  // Predicated region
  $region22: #{_lambda_.46} parent=0 // pred_check
    %p120 = pneg %p17
  $region23: #{_lambda_.46} parent=0 // pred_check_branch
    %122 = sbr.rel (%p120) target = $region25
  $region24: #{_lambda_.46} parent=0 // pred_region
    %v123 = vld [vmem:[#allocation2] sm:$0xff]
    %v124 = vld [vmem:[#allocation2 + $0x8] sm:$0x3]
    %v125 = vld [vmem:[%s2] sm:$0x1]
    %v127 = vlaneseq
    %v128 = vshrl.u32 %v127, 7
    %v129 = vsub.s32 0, %v128
    %v130 = vrot.slane %v125, %v129
    %v132 = vadd.f32 %v123, %v130
    %v133 = vadd.f32 %v124, %v130
    %v134 = vld [vmem:[%s3] sm:$0xff]
    %v135 = vld [vmem:[%s3 + $0x8] sm:$0x3]
    %v136 = vadd.f32 %v132, %v134
    %v137 = vadd.f32 %v133, %v135
    %138 = vst.msk [vmem:[%s4] sm:$0xff] %vm33, %v136
    %139 = vst.msk [vmem:[%s4 + $0x8] sm:$0x3] %vm118, %v137
  $region25: #{_lambda_.46} parent=0 // pred_fallthru
    _
  // Predicated region
  $region26: #{_lambda_.46} parent=0 // pred_check
    _
  $region27: #{_lambda_.46} parent=0 // pred_check_branch
    %141 = sbr.rel (0) target = $region29
  $region28: #{_lambda_.46} parent=0 // pred_region
    _
  $region29: #{_lambda_.46} parent=0 // pred_fallthru
    _
  // Predicated region
  $region30: #{_lambda_.46} parent=0 // pred_check
    _
  $region31: #{_lambda_.46} parent=0 // pred_check_branch
    %143 = sbr.rel (0) target = $region33
  $region32: #{_lambda_.46} parent=0 // pred_region
    _
  $region33: #{_lambda_.46} parent=0 // pred_fallthru
    _

// kernel: _lambda_.47
$region0: #{_lambda_.47}
  #allocation0 [shape = 'u32[]', space=smem, size = 0x4, offset = 0x4, fixed_abs, tag = 'smem constant byte address 0x4 - core index']
  #allocation1 [shape = 'u32[144,128]{1,0:T(1,128)}', space=vmem, size = 0x12000, scoped, tag = 'internal scratch']
  #allocation2 [shape = 'f32[10,32]{1,0:T(8,128)}', space=vmem, size = 0x2000, scoped, tag = 'scratch operand']
  #allocation3 [shape = 'f32[10,32]{1,0:T(8,128)}', space=vmem, size = 0x2000, scoped, tag = 'scratch operand']
  %s0 = inlined_call_operand.vmem [shape: f32[10,32], index: 0, kind: input, shape index: {}]
  %s1 = inlined_call_operand.vmem [shape: f32[1,32], index: 1, kind: input, shape index: {}]
  %s2 = inlined_call_operand.vmem [shape: f32[1,32], index: 2, kind: input, shape index: {}]
  %s3 = inlined_call_operand.vmem [shape: f32[32,128], index: 3, kind: input, shape index: {}]
  %s4 = inlined_call_operand.vmem [shape: f32[1,128], index: 4, kind: input, shape index: {}]
  %s5 = inlined_call_operand.vmem [shape: f32[128,32], index: 5, kind: input, shape index: {}]
  %s6 = inlined_call_operand.vmem [shape: f32[1,32], index: 6, kind: input, shape index: {}]
  %s7 = inlined_call_operand.vmem [shape: f32[10,32], index: 7, kind: output, shape index: {}]
  %s8 = sld [smem:[#allocation0]]
  $region46: #{_lambda_.47} parent=0
    _
  %s10 = ssub.s32 1, %s8
  %s11 = scalar_select 0, %s10, %s8
  // Predicated region
  $region2: #{_lambda_.47} parent=0 // pred_check
    _
  $region3: #{_lambda_.47} parent=0 // pred_check_branch
    %13 = sbr.rel (0) target = $region5
  $region4: #{_lambda_.47} parent=0 // pred_region
    _
  $region5: #{_lambda_.47} parent=0 // pred_fallthru
    _
  // Predicated region
  $region6: #{_lambda_.47} parent=0 // pred_check
    _
  $region7: #{_lambda_.47} parent=0 // pred_check_branch
    %15 = sbr.rel (0) target = $region9
  $region8: #{_lambda_.47} parent=0 // pred_region
    _
  $region9: #{_lambda_.47} parent=0 // pred_fallthru
    _
  // Predicated region
  $region10: #{_lambda_.47} parent=0 // pred_check
    _
  $region11: #{_lambda_.47} parent=0 // pred_check_branch
    %17 = sbr.rel (0) target = $region13
  $region12: #{_lambda_.47} parent=0 // pred_region
    _
  $region13: #{_lambda_.47} parent=0 // pred_fallthru
    _
  // Predicated region
  $region14: #{_lambda_.47} parent=0 // pred_check
    _
  $region15: #{_lambda_.47} parent=0 // pred_check_branch
    %19 = sbr.rel (0) target = $region17
  $region16: #{_lambda_.47} parent=0 // pred_region
    _
  $region17: #{_lambda_.47} parent=0 // pred_fallthru
    _
  // Predicated region
  $region18: #{_lambda_.47} parent=0 // pred_check
    _
  $region19: #{_lambda_.47} parent=0 // pred_check_branch
    %21 = sbr.rel (0) target = $region21
  $region20: #{_lambda_.47} parent=0 // pred_region
    _
  $region21: #{_lambda_.47} parent=0 // pred_fallthru
    _
  // Predicated region
  $region22: #{_lambda_.47} parent=0 // pred_check
    _
  $region23: #{_lambda_.47} parent=0 // pred_check_branch
    %23 = sbr.rel (0) target = $region25
  $region24: #{_lambda_.47} parent=0 // pred_region
    _
  $region25: #{_lambda_.47} parent=0 // pred_fallthru
    _
  // Predicated region
  $region26: #{_lambda_.47} parent=0 // pred_check
    _
  $region27: #{_lambda_.47} parent=0 // pred_check_branch
    %25 = sbr.rel (0) target = $region29
  $region28: #{_lambda_.47} parent=0 // pred_region
    _
  $region29: #{_lambda_.47} parent=0 // pred_fallthru
    _
  %p26 = scmp.eq.s32.totalorder 0, 0
  // Predicated region
  $region30: #{_lambda_.47} parent=0 // pred_check
    %p27 = pneg %p26
  $region31: #{_lambda_.47} parent=0 // pred_check_branch
    %29 = sbr.rel (%p27) target = $region33
  $region32: #{_lambda_.47} parent=0 // pred_region
    %v30 = vld [vmem:[%s0] sm:$0xff]
    %v31 = vld [vmem:[%s0 + $0x8] sm:$0x3]
    %v32 = vld [vmem:[%s1] sm:$0x1]
    %v33 = vld [vmem:[%s2] sm:$0x1]
    %vm34 = vcmask 261120
    %v35 = vsel %vm34, %v30, 0.0
    %36 = vadd.xlane.f32.xlu0 %v35
    %v37 = vpop.xlane.xlu0 %36
    %vm38 = vcmask 254976
    %v39 = vsel %vm38, %v31, 0.0
    %40 = vadd.xlane.f32.xlu0 %v39
    %v41 = vpop.xlane.xlu0 %40
    %v42 = vrcp.pop 32.0
    %v43 = vmul.f32 %v37, %v42
    %v44 = vmul.f32 %v41, %v42
    %v45 = vsub.f32 %v30, %v43
    %v46 = vsub.f32 %v31, %v44
    %v47 = vmul.f32 %v45, %v45
    %v48 = vmul.f32 %v46, %v46
    %v49 = vsel %vm34, %v47, 0.0
    %50 = vadd.xlane.f32.xlu0 %v49
    %v51 = vpop.xlane.xlu0 %50
    %v52 = vsel %vm38, %v48, 0.0
    %53 = vadd.xlane.f32.xlu0 %v52
    %v54 = vpop.xlane.xlu0 %53
    %v55 = vmul.f32 %v51, %v42
    %v56 = vmul.f32 %v54, %v42
    %v57 = vadd.f32 %v55, 1e-05
    %v58 = vadd.f32 %v56, 1e-05
    %v59 = vrsqrt.pop %v57
    %v60 = vrsqrt.pop %v58
    %v61 = vmul.f32 %v45, %v59
    %v62 = vmul.f32 %v46, %v60
    %v64 = vlaneseq
    %v65 = vshrl.u32 %v64, 7
    %v66 = vsub.s32 0, %v65
    %v67 = vrot.slane %v32, %v66
    %v69 = vmul.f32 %v61, %v67
    %v70 = vmul.f32 %v62, %v67
    %v72 = vlaneseq
    %v73 = vshrl.u32 %v72, 7
    %v74 = vsub.s32 0, %v73
    %v75 = vrot.slane %v33, %v74
    %v77 = vadd.f32 %v69, %v75
    %v78 = vadd.f32 %v70, %v75
    %79 = vst.msk [vmem:[#allocation2] sm:$0xff] %vm34, %v77
    %80 = vst.msk [vmem:[#allocation2 + $0x8] sm:$0x3] %vm38, %v78
    %81 = vst.msk [vmem:[#allocation3] sm:$0xff] %vm34, 0.0
    %82 = vst.msk [vmem:[#allocation3 + $0x8] sm:$0x3] %vm38, 0.0
  $region33: #{_lambda_.47} parent=0 // pred_fallthru
    _
  %v83 = vld [vmem:[#allocation2] sm:$0xff]
  %v84 = vld [vmem:[#allocation2 + $0x8] sm:$0x3]
  %v85 = vld [vmem:[%s3] sm:$0xff]
  %v86 = vld [vmem:[%s3 + $0x8] sm:$0xff]
  %v87 = vld [vmem:[%s3 + $0x10] sm:$0xff]
  %v88 = vld [vmem:[%s3 + $0x18] sm:$0xff]
  %v89 = vld [vmem:[%s4] sm:$0x1]
  %v91 = vlaneseq
  %v92 = vshrl.u32 %v91, 7
  %v93 = vsub.s32 0, %v92
  %v94 = vrot.slane %v89, %v93
  %vm96 = vcmask 261120
  %v98 = vsel %vm96, %v83, 0
  %v101 = vsel %vm96, %v84, 0
  %103 = vmatprep.subr.mxu0 0.0
  %104 = vmatpush1.msra.mxu0 0.0
  %105 = vmatprep.subr.mxu0 0.0
  %106 = vmatpush1.msra.mxu0 0.0
  %107 = vmatprep.subr.mxu0 0.0
  %108 = vmatpush1.msra.mxu0 0.0
  %109 = vmatprep.subr.mxu0 0.0
  %110 = vmatpush1.msra.mxu0 0.0
  %111 = vmatprep.subr.mxu0 0.0
  %112 = vmatpush1.msra.mxu0 0.0
  %113 = vmatprep.subr.mxu0 0.0
  %114 = vmatpush1.msra.mxu0 0.0
  %115 = vmatprep.subr.mxu0 0.0
  %116 = vmatpush1.msra.mxu0 0.0
  %117 = vmatprep.subr.mxu0 0.0
  %118 = vmatpush1.msra.mxu0 0.0
  %119 = vmatprep.subr.mxu0 0.0
  %120 = vmatpush1.msra.mxu0 0.0
  %121 = vmatprep.subr.mxu0 0.0
  %122 = vmatpush1.msra.mxu0 0.0
  %123 = vmatprep.subr.mxu0 0.0
  %124 = vmatpush1.msra.mxu0 0.0
  %125 = vmatprep.subr.mxu0 0.0
  %126 = vmatpush1.msra.mxu0 0.0
  %127 = vmatprep.subr.mxu0 0.0
  %128 = vmatpush1.msra.mxu0 %v88
  %129 = vmatprep.subr.mxu0 0.0
  %130 = vmatpush1.msra.mxu0 %v87
  %131 = vmatprep.subr.mxu0 0.0
  %132 = vmatpush1.msra.mxu0 %v86
  %133 = vmatprep.subr.mxu0 0.0
  %134 = vmatpush1.msra.mxu0 %v85
  %135 = vmatprep.subr.mxu0 0.0
  %136 = vmatpush2.msra.mxu0 0.0
  %137 = vmatprep.subr.mxu0 0.0
  %138 = vmatpush2.msra.mxu0 0.0
  %139 = vmatprep.subr.mxu0 0.0
  %140 = vmatpush2.msra.mxu0 0.0
  %141 = vmatprep.subr.mxu0 0.0
  %142 = vmatpush2.msra.mxu0 0.0
  %143 = vmatprep.subr.mxu0 0.0
  %144 = vmatpush2.msra.mxu0 0.0
  %145 = vmatprep.subr.mxu0 0.0
  %146 = vmatpush2.msra.mxu0 0.0
  %147 = vmatprep.subr.mxu0 0.0
  %148 = vmatpush2.msra.mxu0 0.0
  %149 = vmatprep.subr.mxu0 0.0
  %150 = vmatpush2.msra.mxu0 0.0
  %151 = vmatprep.subr.mxu0 0.0
  %152 = vmatpush2.msra.mxu0 0.0
  %153 = vmatprep.subr.mxu0 0.0
  %154 = vmatpush2.msra.mxu0 0.0
  %155 = vmatprep.subr.mxu0 0.0
  %156 = vmatpush2.msra.mxu0 0.0
  %157 = vmatprep.subr.mxu0 0.0
  %158 = vmatpush2.msra.mxu0 0.0
  %159 = vmatprep.subr.mxu0 0.0
  %160 = vmatpush2.msra.mxu0 0.0
  %161 = vmatprep.subr.mxu0 0.0
  %162 = vmatpush2.msra.mxu0 0.0
  %163 = vmatprep.subr.mxu0 0.0
  %164 = vmatpush2.msra.mxu0 0.0
  %165 = vmatprep.subr.mxu0 0.0
  %166 = vmatpush2.msra.mxu0 0.0
  %167 = vmatprep.mubr.f32.mxu0 0.0
  %168 = vmatmul.mubr.f32.gmra.mxu0 %v98
  %v169 = vpop.f32.mrf.mxu0
  %v170 = vadd.f32 %v94, %v169
  %v171 = vpop.f32.mrf.mxu0
  %172 = vmatprep.mubr.f32.mxu0 0.0
  %173 = vmatmul.mubr.f32.gmra.mxu0 %v101
  %v174 = vpop.f32.mrf.mxu0
  %v175 = vadd.f32 %v94, %v174
  %v176 = vpop.f32.mrf.mxu0
  %177 = vdwg.mxu0
  %v178 = vmul.f32 %v170, 1.702
  %v179 = vmul.f32 %v175, 1.702
  %v180 = vsub.f32 0.0, %v178
  %v181 = vsub.f32 0.0, %v179
  %v182 = vmul.f32 %v180, 1.442695
  %v183 = vpow.pop %v182
  %v184 = vmul.f32 %v181, 1.442695
  %v185 = vpow.pop %v184
  %v186 = vadd.f32 %v183, 1.0
  %v187 = vadd.f32 %v185, 1.0
  %v188 = vrcp.pop %v186
  %v189 = vrcp.pop %v187
  %v190 = vmul.f32 %v170, %v188
  %v191 = vmul.f32 %v175, %v189
  %v192 = vld [vmem:[#allocation3] sm:$0xff]
  %v193 = vld [vmem:[#allocation3 + $0x8] sm:$0x3]
  %v194 = vld [vmem:[%s5] sm:$0xff]
  %v195 = vld [vmem:[%s5 + $0x8] sm:$0xff]
  %v196 = vld [vmem:[%s5 + $0x10] sm:$0xff]
  %v197 = vld [vmem:[%s5 + $0x18] sm:$0xff]
  %v198 = vld [vmem:[%s5 + $0x20] sm:$0xff]
  %v199 = vld [vmem:[%s5 + $0x28] sm:$0xff]
  %v200 = vld [vmem:[%s5 + $0x30] sm:$0xff]
  %v201 = vld [vmem:[%s5 + $0x38] sm:$0xff]
  %v202 = vld [vmem:[%s5 + $0x40] sm:$0xff]
  %v203 = vld [vmem:[%s5 + $0x48] sm:$0xff]
  %v204 = vld [vmem:[%s5 + $0x50] sm:$0xff]
  %v205 = vld [vmem:[%s5 + $0x58] sm:$0xff]
  %v206 = vld [vmem:[%s5 + $0x60] sm:$0xff]
  %v207 = vld [vmem:[%s5 + $0x68] sm:$0xff]
  %v208 = vld [vmem:[%s5 + $0x70] sm:$0xff]
  %v209 = vld [vmem:[%s5 + $0x78] sm:$0xff]
  %210 = vmatprep.subr.mxu0 0.0
  %211 = vmatpush1.msra.mxu0 %v209
  %212 = vmatprep.subr.mxu0 0.0
  %213 = vmatpush1.msra.mxu0 %v208
  %214 = vmatprep.subr.mxu0 0.0
  %215 = vmatpush1.msra.mxu0 %v207
  %216 = vmatprep.subr.mxu0 0.0
  %217 = vmatpush1.msra.mxu0 %v206
  %218 = vmatprep.subr.mxu0 0.0
  %219 = vmatpush1.msra.mxu0 %v205
  %220 = vmatprep.subr.mxu0 0.0
  %221 = vmatpush1.msra.mxu0 %v204
  %222 = vmatprep.subr.mxu0 0.0
  %223 = vmatpush1.msra.mxu0 %v203
  %224 = vmatprep.subr.mxu0 0.0
  %225 = vmatpush1.msra.mxu0 %v202
  %226 = vmatprep.subr.mxu0 0.0
  %227 = vmatpush1.msra.mxu0 %v201
  %228 = vmatprep.subr.mxu0 0.0
  %229 = vmatpush1.msra.mxu0 %v200
  %230 = vmatprep.subr.mxu0 0.0
  %231 = vmatpush1.msra.mxu0 %v199
  %232 = vmatprep.subr.mxu0 0.0
  %233 = vmatpush1.msra.mxu0 %v198
  %234 = vmatprep.subr.mxu0 0.0
  %235 = vmatpush1.msra.mxu0 %v197
  %236 = vmatprep.subr.mxu0 0.0
  %237 = vmatpush1.msra.mxu0 %v196
  %238 = vmatprep.subr.mxu0 0.0
  %239 = vmatpush1.msra.mxu0 %v195
  %240 = vmatprep.subr.mxu0 0.0
  %241 = vmatpush1.msra.mxu0 %v194
  %242 = vmatprep.subr.mxu0 0.0
  %243 = vmatpush2.msra.mxu0 0.0
  %244 = vmatprep.subr.mxu0 0.0
  %245 = vmatpush2.msra.mxu0 0.0
  %246 = vmatprep.subr.mxu0 0.0
  %247 = vmatpush2.msra.mxu0 0.0
  %248 = vmatprep.subr.mxu0 0.0
  %249 = vmatpush2.msra.mxu0 0.0
  %250 = vmatprep.subr.mxu0 0.0
  %251 = vmatpush2.msra.mxu0 0.0
  %252 = vmatprep.subr.mxu0 0.0
  %253 = vmatpush2.msra.mxu0 0.0
  %254 = vmatprep.subr.mxu0 0.0
  %255 = vmatpush2.msra.mxu0 0.0
  %256 = vmatprep.subr.mxu0 0.0
  %257 = vmatpush2.msra.mxu0 0.0
  %258 = vmatprep.subr.mxu0 0.0
  %259 = vmatpush2.msra.mxu0 0.0
  %260 = vmatprep.subr.mxu0 0.0
  %261 = vmatpush2.msra.mxu0 0.0
  %262 = vmatprep.subr.mxu0 0.0
  %263 = vmatpush2.msra.mxu0 0.0
  %264 = vmatprep.subr.mxu0 0.0
  %265 = vmatpush2.msra.mxu0 0.0
  %266 = vmatprep.subr.mxu0 0.0
  %267 = vmatpush2.msra.mxu0 0.0
  %268 = vmatprep.subr.mxu0 0.0
  %269 = vmatpush2.msra.mxu0 0.0
  %270 = vmatprep.subr.mxu0 0.0
  %271 = vmatpush2.msra.mxu0 0.0
  %272 = vmatprep.subr.mxu0 0.0
  %273 = vmatpush2.msra.mxu0 0.0
  %274 = vmatprep.mubr.f32.mxu0 0.0
  %275 = vmatmul.mubr.f32.gmra.mxu0 %v190
  %v276 = vpop.f32.mrf.mxu0
  %v277 = vadd.f32 0.0, %v276
  %v278 = vpop.f32.mrf.mxu0
  %279 = vmatprep.mubr.f32.mxu0 0.0
  %280 = vmatmul.mubr.f32.gmra.mxu0 %v191
  %v281 = vpop.f32.mrf.mxu0
  %v282 = vadd.f32 0.0, %v281
  %v283 = vpop.f32.mrf.mxu0
  %284 = vdwg.mxu0
  %v285 = vadd.f32 %v192, %v277
  %v286 = vadd.f32 %v193, %v282
  %287 = vst.msk [vmem:[#allocation3] sm:$0xff] %vm96, %v285
  %vm288 = vcmask 254976
  %289 = vst.msk [vmem:[#allocation3 + $0x8] sm:$0x3] %vm288, %v286
  // Predicated region
  $region34: #{_lambda_.47} parent=0 // pred_check
    %p290 = pneg %p26
  $region35: #{_lambda_.47} parent=0 // pred_check_branch
    %292 = sbr.rel (%p290) target = $region37
  $region36: #{_lambda_.47} parent=0 // pred_region
    %v293 = vld [vmem:[#allocation3] sm:$0xff]
    %v294 = vld [vmem:[#allocation3 + $0x8] sm:$0x3]
    %v295 = vld [vmem:[%s6] sm:$0x1]
    %v297 = vlaneseq
    %v298 = vshrl.u32 %v297, 7
    %v299 = vsub.s32 0, %v298
    %v300 = vrot.slane %v295, %v299
    %v302 = vadd.f32 %v293, %v300
    %v303 = vadd.f32 %v294, %v300
    %v304 = vld [vmem:[%s0] sm:$0xff]
    %v305 = vld [vmem:[%s0 + $0x8] sm:$0x3]
    %v306 = vadd.f32 %v302, %v304
    %v307 = vadd.f32 %v303, %v305
    %308 = vst.msk [vmem:[%s7] sm:$0xff] %vm96, %v306
    %309 = vst.msk [vmem:[%s7 + $0x8] sm:$0x3] %vm288, %v307
  $region37: #{_lambda_.47} parent=0 // pred_fallthru
    _
  // Predicated region
  $region38: #{_lambda_.47} parent=0 // pred_check
    _
  $region39: #{_lambda_.47} parent=0 // pred_check_branch
    %311 = sbr.rel (0) target = $region41
  $region40: #{_lambda_.47} parent=0 // pred_region
    _
  $region41: #{_lambda_.47} parent=0 // pred_fallthru
    _
  // Predicated region
  $region42: #{_lambda_.47} parent=0 // pred_check
    _
  $region43: #{_lambda_.47} parent=0 // pred_check_branch
    %313 = sbr.rel (0) target = $region45
  $region44: #{_lambda_.47} parent=0 // pred_region
    _
  $region45: #{_lambda_.47} parent=0 // pred_fallthru
    _

// kernel: _lambda_.52
$region0: #{_lambda_.52}
  #allocation0 [shape = 'u32[]', space=smem, size = 0x4, offset = 0x4, fixed_abs, tag = 'smem constant byte address 0x4 - core index']
  #allocation1 [shape = 'u32[144,128]{1,0:T(1,128)}', space=vmem, size = 0x12000, scoped, tag = 'internal scratch']
  %s0 = inlined_call_operand.vmem [shape: f32[2,32], index: 0, kind: input, shape index: {}]
  %s1 = inlined_call_operand.vmem [shape: f32[1,32], index: 1, kind: input, shape index: {}]
  %s2 = inlined_call_operand.vmem [shape: f32[1,32], index: 2, kind: input, shape index: {}]
  %s3 = inlined_call_operand.vmem [shape: f32[2,32], index: 3, kind: output, shape index: {}]
  %s4 = sld [smem:[#allocation0]]
  $region22: #{_lambda_.52} parent=0
    _
  %s6 = ssub.s32 1, %s4
  %s7 = scalar_select 0, %s6, %s4
  // Predicated region
  $region2: #{_lambda_.52} parent=0 // pred_check
    _
  $region3: #{_lambda_.52} parent=0 // pred_check_branch
    %9 = sbr.rel (0) target = $region5
  $region4: #{_lambda_.52} parent=0 // pred_region
    _
  $region5: #{_lambda_.52} parent=0 // pred_fallthru
    _
  // Predicated region
  $region6: #{_lambda_.52} parent=0 // pred_check
    _
  $region7: #{_lambda_.52} parent=0 // pred_check_branch
    %11 = sbr.rel (0) target = $region9
  $region8: #{_lambda_.52} parent=0 // pred_region
    _
  $region9: #{_lambda_.52} parent=0 // pred_fallthru
    _
  // Predicated region
  $region10: #{_lambda_.52} parent=0 // pred_check
    _
  $region11: #{_lambda_.52} parent=0 // pred_check_branch
    %13 = sbr.rel (0) target = $region13
  $region12: #{_lambda_.52} parent=0 // pred_region
    _
  $region13: #{_lambda_.52} parent=0 // pred_fallthru
    _
  %v14 = vld [vmem:[%s0] sm:$0x3]
  %v15 = vld [vmem:[%s1] sm:$0x1]
  %v16 = vld [vmem:[%s2] sm:$0x1]
  %vm17 = vcmask 254976
  %v18 = vsel %vm17, %v14, 0.0
  %19 = vadd.xlane.f32.xlu0 %v18
  %v20 = vpop.xlane.xlu0 %19
  %v21 = vrcp.pop 32.0
  %v22 = vmul.f32 %v20, %v21
  %v23 = vsub.f32 %v14, %v22
  %v24 = vmul.f32 %v23, %v23
  %v25 = vsel %vm17, %v24, 0.0
  %26 = vadd.xlane.f32.xlu0 %v25
  %v27 = vpop.xlane.xlu0 %26
  %v28 = vmul.f32 %v27, %v21
  %v29 = vadd.f32 %v28, 1e-05
  %v30 = vrsqrt.pop %v29
  %v31 = vmul.f32 %v23, %v30
  %v33 = vlaneseq
  %v34 = vshrl.u32 %v33, 7
  %v35 = vsub.s32 0, %v34
  %v36 = vrot.slane %v15, %v35
  %v38 = vmul.f32 %v31, %v36
  %v40 = vlaneseq
  %v41 = vshrl.u32 %v40, 7
  %v42 = vsub.s32 0, %v41
  %v43 = vrot.slane %v16, %v42
  %v45 = vadd.f32 %v38, %v43
  %46 = vst.msk [vmem:[%s3] sm:$0x3] %vm17, %v45
  // Predicated region
  $region14: #{_lambda_.52} parent=0 // pred_check
    _
  $region15: #{_lambda_.52} parent=0 // pred_check_branch
    %48 = sbr.rel (0) target = $region17
  $region16: #{_lambda_.52} parent=0 // pred_region
    _
  $region17: #{_lambda_.52} parent=0 // pred_fallthru
    _
  // Predicated region
  $region18: #{_lambda_.52} parent=0 // pred_check
    _
  $region19: #{_lambda_.52} parent=0 // pred_check_branch
    %50 = sbr.rel (0) target = $region21
  $region20: #{_lambda_.52} parent=0 // pred_region
    _
  $region21: #{_lambda_.52} parent=0 // pred_fallthru
    _

// kernel: _lambda_.53
$region0: #{_lambda_.53}
  #allocation0 [shape = 'u32[]', space=smem, size = 0x4, offset = 0x4, fixed_abs, tag = 'smem constant byte address 0x4 - core index']
  #allocation1 [shape = 'u32[144,128]{1,0:T(1,128)}', space=vmem, size = 0x12000, scoped, tag = 'internal scratch']
  #allocation2 [shape = 'f32[2,16]{1,0:T(2,128)}', space=vmem, size = 0x400, scoped, tag = 'scratch operand']
  %s0 = inlined_call_operand.vmem [shape: f32[2,32], index: 0, kind: input, shape index: {}]
  %s1 = inlined_call_operand.vmem [shape: f32[32,16], index: 1, kind: input, shape index: {}]
  %s2 = inlined_call_operand.hbm [shape: f32[2,16], index: 2, kind: output, shape index: {}]
  %s3 = sld [smem:[#allocation0]]
  $region26: #{_lambda_.53} parent=0
    _
  %s5 = ssub.s32 1, %s3
  %s6 = scalar_select 0, %s5, %s3
  $region1: #{_lambda_.53} parent=0
    #allocation3 [shape = 'u8[1024]{0}', space=vmem, size = 0x400, scoped, tag = 'output window, operand 0, single buffered']
    #allocation4 [shape = 's32[1]{0}', space=sflag, size = 0x4, scoped, tag = 'scoped memory for _lambda_.53']
    %7 = vsyncpa [#allocation4], 0
    // Predicated region
    $region2: #{_lambda_.53} parent=1 // pred_check
      _
    $region3: #{_lambda_.53} parent=1 // pred_check_branch
      %9 = sbr.rel (0) target = $region5
    $region4: #{_lambda_.53} parent=1 // pred_region
      _
    $region5: #{_lambda_.53} parent=1 // pred_fallthru
      _
    // Predicated region
    $region6: #{_lambda_.53} parent=1 // pred_check
      _
    $region7: #{_lambda_.53} parent=1 // pred_check_branch
      %11 = sbr.rel (0) target = $region9
    $region8: #{_lambda_.53} parent=1 // pred_region
      _
    $region9: #{_lambda_.53} parent=1 // pred_fallthru
      _
    %p12 = scmp.eq.s32.totalorder 0, 0
    // Predicated region
    $region10: #{_lambda_.53} parent=1 // pred_check
      %p13 = pneg %p12
    $region11: #{_lambda_.53} parent=1 // pred_check_branch
      %15 = sbr.rel (%p13) target = $region13
    $region12: #{_lambda_.53} parent=1 // pred_region
      %vm16 = vcmask 123904
      %17 = vst.msk [vmem:[#allocation2] sm:$0x3] %vm16, 0.0
    $region13: #{_lambda_.53} parent=1 // pred_fallthru
      _
    %v18 = vld [vmem:[#allocation2] sm:$0x3]
    %v19 = vld [vmem:[%s0] sm:$0x3]
    %v20 = vld [vmem:[%s1] sm:$0xff]
    %v21 = vld [vmem:[%s1 + $0x8] sm:$0xff]
    %v22 = vld [vmem:[%s1 + $0x10] sm:$0xff]
    %v23 = vld [vmem:[%s1 + $0x18] sm:$0xff]
    %vm24 = vcmask 261120
    %v26 = vsel %vm24, %v19, 0
    %28 = vmatprep.subr.mxu0 0.0
    %29 = vmatpush1.msra.mxu0 0.0
    %30 = vmatprep.subr.mxu0 0.0
    %31 = vmatpush1.msra.mxu0 0.0
    %32 = vmatprep.subr.mxu0 0.0
    %33 = vmatpush1.msra.mxu0 0.0
    %34 = vmatprep.subr.mxu0 0.0
    %35 = vmatpush1.msra.mxu0 0.0
    %36 = vmatprep.subr.mxu0 0.0
    %37 = vmatpush1.msra.mxu0 0.0
    %38 = vmatprep.subr.mxu0 0.0
    %39 = vmatpush1.msra.mxu0 0.0
    %40 = vmatprep.subr.mxu0 0.0
    %41 = vmatpush1.msra.mxu0 0.0
    %42 = vmatprep.subr.mxu0 0.0
    %43 = vmatpush1.msra.mxu0 0.0
    %44 = vmatprep.subr.mxu0 0.0
    %45 = vmatpush1.msra.mxu0 0.0
    %46 = vmatprep.subr.mxu0 0.0
    %47 = vmatpush1.msra.mxu0 0.0
    %48 = vmatprep.subr.mxu0 0.0
    %49 = vmatpush1.msra.mxu0 0.0
    %50 = vmatprep.subr.mxu0 0.0
    %51 = vmatpush1.msra.mxu0 0.0
    %52 = vmatprep.subr.mxu0 0.0
    %53 = vmatpush1.msra.mxu0 %v23
    %54 = vmatprep.subr.mxu0 0.0
    %55 = vmatpush1.msra.mxu0 %v22
    %56 = vmatprep.subr.mxu0 0.0
    %57 = vmatpush1.msra.mxu0 %v21
    %58 = vmatprep.subr.mxu0 0.0
    %59 = vmatpush1.msra.mxu0 %v20
    %60 = vmatprep.subr.mxu0 0.0
    %61 = vmatpush2.msra.mxu0 0.0
    %62 = vmatprep.subr.mxu0 0.0
    %63 = vmatpush2.msra.mxu0 0.0
    %64 = vmatprep.subr.mxu0 0.0
    %65 = vmatpush2.msra.mxu0 0.0
    %66 = vmatprep.subr.mxu0 0.0
    %67 = vmatpush2.msra.mxu0 0.0
    %68 = vmatprep.subr.mxu0 0.0
    %69 = vmatpush2.msra.mxu0 0.0
    %70 = vmatprep.subr.mxu0 0.0
    %71 = vmatpush2.msra.mxu0 0.0
    %72 = vmatprep.subr.mxu0 0.0
    %73 = vmatpush2.msra.mxu0 0.0
    %74 = vmatprep.subr.mxu0 0.0
    %75 = vmatpush2.msra.mxu0 0.0
    %76 = vmatprep.subr.mxu0 0.0
    %77 = vmatpush2.msra.mxu0 0.0
    %78 = vmatprep.subr.mxu0 0.0
    %79 = vmatpush2.msra.mxu0 0.0
    %80 = vmatprep.subr.mxu0 0.0
    %81 = vmatpush2.msra.mxu0 0.0
    %82 = vmatprep.subr.mxu0 0.0
    %83 = vmatpush2.msra.mxu0 0.0
    %84 = vmatprep.subr.mxu0 0.0
    %85 = vmatpush2.msra.mxu0 0.0
    %86 = vmatprep.subr.mxu0 0.0
    %87 = vmatpush2.msra.mxu0 0.0
    %88 = vmatprep.subr.mxu0 0.0
    %89 = vmatpush2.msra.mxu0 0.0
    %90 = vmatprep.subr.mxu0 0.0
    %91 = vmatpush2.msra.mxu0 0.0
    %92 = vmatprep.mubr.f32.mxu0 0.0
    %93 = vmatmul.mubr.f32.gmra.mxu0 %v26
    %v94 = vpop.f32.mrf.mxu0
    %v95 = vadd.f32 0.0, %v94
    %v96 = vpop.f32.mrf.mxu0
    %97 = vdwg.mxu0
    %v98 = vadd.f32 %v18, %v95
    %vm99 = vcmask 123904
    %100 = vst.msk [vmem:[#allocation2] sm:$0x3] %vm99, %v98
    // Predicated region
    $region14: #{_lambda_.53} parent=1 // pred_check
      %p101 = pneg %p12
    $region15: #{_lambda_.53} parent=1 // pred_check_branch
      %103 = sbr.rel (%p101) target = $region17
    $region16: #{_lambda_.53} parent=1 // pred_region
      %v104 = vld [vmem:[#allocation2] sm:$0x3]
      %105 = vst.msk [vmem:[#allocation3] sm:$0x3] %vm99, %v104
    $region17: #{_lambda_.53} parent=1 // pred_fallthru
      _
    // Predicated region
    $region18: #{_lambda_.53} parent=1 // pred_check
      _
    $region19: #{_lambda_.53} parent=1 // pred_check_branch
      %107 = sbr.rel (0) target = $region21
    $region20: #{_lambda_.53} parent=1 // pred_region
      %s109 = ssub.s32 32, 32
      %110 = vsyncadd [#allocation4], %s109
      %s112 = sshll.u32 [#allocation3], 4
      %s113 = int_to_ptr.vmem [resolvable:$true] %s112
      %115 = dma.vmem_to_hbm [thread:$0]  %s113, 32, %s2, [#allocation4]
    $region21: #{_lambda_.53} parent=1 // pred_fallthru
      _
    // Predicated region
    $region22: #{_lambda_.53} parent=1 // pred_check
      _
    $region23: #{_lambda_.53} parent=1 // pred_check_branch
      %117 = sbr.rel (0) target = $region25
    $region24: #{_lambda_.53} parent=1 // pred_region
      %118 = dma.done [#allocation4], 32
    $region25: #{_lambda_.53} parent=1 // pred_fallthru
      _
    %119 = vsyncpa [#allocation4], 1

</llo_original>
